<compile_context>
chip_gen: v5e
topology: v5e:2x2
jax: 0.10.0
libtpu: 0.0.40
codegen_flags: <defaults>
</compile_context>

<pallas_src>
import functools

import jax
import jax.numpy as jnp
from jax.experimental import pallas as pl
from jax.experimental.pallas import tpu as pltpu


def _round_up(x, m):
    return ((x + m - 1) // m) * m


def _pad_to(arr, shape):
    pads = [(0, t - s) for s, t in zip(arr.shape, shape)]
    if all(p == (0, 0) for p in pads):
        return arr
    return jnp.pad(arr, pads)


def _vmem_caps():
    """(vmem_limit_bytes, tile_budget_bytes) sized per generation.

    v5e/v6e: 128 MiB physical -> limit ~100 MiB.  v7x: 64 MiB -> limit ~48 MiB.
    Falls back to the v7x-safe numbers if the query is unavailable.
    """
    try:
        cap = int(pltpu.get_tpu_info().vmem_capacity_bytes)
    except Exception:
        cap = 64 * 1024 * 1024
    limit = min(cap - 16 * 1024 * 1024, 100 * 1024 * 1024)
    limit = max(limit, 32 * 1024 * 1024)
    budget = (limit * 3) // 4          # headroom for pipeline internals / spills
    return limit, budget


def _choose_tiles(n, hp, budget):
    """Pick the largest (tm, tk) that divide n, fit the VMEM budget, and keep
    n//tm >= 2 when possible so the parallel row axis shards across v7x's 2 TCs."""
    tm_cands = [t for t in (1024, 512, 256, 128) if n % t == 0]
    tk_cands = [t for t in (2048, 1024, 512, 256, 128) if n % t == 0]

    def usage(tm, tk):
        return (3 * tm * tk * 2        # A tiles, bf16, up to 3 buffers
                + 2 * tk * hp * 2      # XWn tiles, bf16, double-buffered
                + 2 * tm * hp * 2      # XSelf, bf16
                + 2 * tm * hp * 4)     # f32 output (accumulated in place)

    for tm in tm_cands:
        if n // tm < 2 and tm != tm_cands[-1]:
            continue                   # keep >= 2 row tiles for megacore sharding
        for tk in tk_cands:
            if usage(tm, tk) <= budget:
                return tm, tk
    return tm_cands[-1], tk_cands[-1]


# ---------------------------------------------------------------------------
# Pass 1: fused per-node linear transforms
#   y = X @ [W_neigh | W_self] + [0 | b]  -> store XWn (with degree lane) and XSelf
# ---------------------------------------------------------------------------
def _transform_kernel(x_ref, w_ref, b_ref, xwn_ref, xself_ref, *, hp, deg_col):
    y = jnp.dot(x_ref[...], w_ref[...], preferred_element_type=jnp.float32)
    y = y + b_ref[...]
    xwn = y[:, :hp]
    # Degree-on-MXU trick: exact 1.0 in a padded lane so A @ XWn yields in-degree there.
    col = jax.lax.broadcasted_iota(jnp.int32, xwn.shape, 1)
    xwn = jnp.where(col == deg_col, 1.0, xwn)
    xwn_ref[...] = xwn.astype(xwn_ref.dtype)            # bf16 for the A matmul
    xself_ref[...] = y[:, hp:].astype(xself_ref.dtype)  # bf16, added once at finalize


# ---------------------------------------------------------------------------
# Pass 2: neighbor aggregation  out = deg_inv * (A @ XWn) + XSelf  (+ relu)
# grid = (N // TM, N // TK); k (neighbor) axis is the reduction (last, "arbitrary").
# Accumulates directly in the f32 output ref (block index constant across k).
# ---------------------------------------------------------------------------
def _aggregate_kernel(a_ref, xwn_ref, xself_ref, o_ref, *, apply_relu, deg_col):
    k = pl.program_id(1)

    @pl.when(k == 0)
    def _init():
        o_ref[...] = jnp.zeros_like(o_ref)

    o_ref[...] += jnp.dot(a_ref[...], xwn_ref[...],
                          preferred_element_type=jnp.float32)

    @pl.when(k == pl.num_programs(1) - 1)
    def _finalize():
        acc = o_ref[...]
        deg = acc[:, deg_col:deg_col + 1]                    # exact in-degree (0/1 sums)
        dinv = jnp.where(deg > 0.0, 1.0 / jnp.maximum(deg, 1.0), 0.0)
        out = acc * dinv + xself_ref[...].astype(jnp.float32)
        if apply_relu:
            out = jnp.maximum(out, 0.0)
        o_ref[...] = out


# ---------------------------------------------------------------------------
# One SAGEConv('mean') layer = transform pass + aggregate pass
# ---------------------------------------------------------------------------
def sage_layer(a_bf16, x, w_cat, b_cat, *, hp, deg_col, apply_relu, tm, tk, vmem_limit):
    n = a_bf16.shape[0]
    f = x.shape[1]
    assert n % tm == 0 and n % tk == 0

    # ---- pass 1: [XWn | XSelf] = X @ [Wn | Ws] + [0 | b] --------------------
    xwn, xself = pl.pallas_call(
        functools.partial(_transform_kernel, hp=hp, deg_col=deg_col),
        out_shape=(jax.ShapeDtypeStruct((n, hp), jnp.bfloat16),
                   jax.ShapeDtypeStruct((n, hp), jnp.bfloat16)),
        grid=(n // tm,),
        in_specs=[pl.BlockSpec((tm, f), lambda i: (i, 0)),
                  pl.BlockSpec((f, 2 * hp), lambda i: (0, 0)),   # weights resident
                  pl.BlockSpec((1, 2 * hp), lambda i: (0, 0))],
        out_specs=(pl.BlockSpec((tm, hp), lambda i: (i, 0)),
                   pl.BlockSpec((tm, hp), lambda i: (i, 0))),
        compiler_params=pltpu.CompilerParams(
            dimension_semantics=("parallel",),
            vmem_limit_bytes=vmem_limit),
    )(x, w_cat, b_cat)

    # ---- pass 2: tiled A @ XWn accumulated into o_ref, fused mean/self/relu --
    kk = n // tk
    if kk >= 3:
        # deeper buffering on the exposed A stream (HBM-bound pass)
        a_spec = pl.BlockSpec((tm, tk), lambda i, k: (i, k),
                              pipeline_mode=pl.Buffered(3))
    else:
        a_spec = pl.BlockSpec((tm, tk), lambda i, k: (i, k))

    cost = pl.CostEstimate(
        flops=2 * n * n * hp,
        transcendentals=0,
        bytes_accessed=n * n * 2 + (n // tm) * n * hp * 2 + n * hp * (2 + 4),
    )
    out = pl.pallas_call(
        functools.partial(_aggregate_kernel, apply_relu=apply_relu, deg_col=deg_col),
        out_shape=jax.ShapeDtypeStruct((n, hp), jnp.float32),
        grid=(n // tm, n // tk),
        in_specs=[a_spec,                                        # A tile (streamed)
                  pl.BlockSpec((tk, hp), lambda i, k: (k, 0)),   # XWn neighbor rows
                  pl.BlockSpec((tm, hp), lambda i, k: (i, 0))],  # XSelf (constant in k)
        out_specs=pl.BlockSpec((tm, hp), lambda i, k: (i, 0)),
        compiler_params=pltpu.CompilerParams(
            dimension_semantics=("parallel", "arbitrary"),
            vmem_limit_bytes=vmem_limit),
        cost_estimate=cost,
    )(a_bf16, xwn, xself)
    return out


# ---------------------------------------------------------------------------
# Full 2-layer GraphSAGE forward
# ---------------------------------------------------------------------------
def graphsage_forward(a, x, params):
    """h = relu(SAGEConv1(g, x)); h = SAGEConv2(g, h)"""
    h_feats = params["w_self1"].shape[1]
    in_feats = params["w_self1"].shape[0]
    # lane-dense hidden dim with at least one spare lane reserved for the degree column
    hp = _round_up(h_feats + 1, 128)
    deg_col = h_feats

    n = a.shape[0]
    n_pad = _round_up(n, 128)

    vmem_limit, budget = _vmem_caps()
    tm, tk = _choose_tiles(n_pad, hp, budget)

    a_p, x_p = a, x
    if n_pad != n:
        a_p = jnp.pad(a, ((0, n_pad - n), (0, n_pad - n)))
        x_p = jnp.pad(x, ((0, n_pad - n), (0, 0)))
    # adjacency is 0/1 -> bf16 is lossless; halves DMA bytes, doubles MXU rate.
    a_bf16 = a_p.astype(jnp.bfloat16)

    def cat_wb(wn, ws, b, in_dim):
        wn = _pad_to(wn, (in_dim, hp))
        ws = _pad_to(ws, (in_dim, hp))
        b = _pad_to(b, (1, hp))
        w_cat = jnp.concatenate([wn, ws], axis=1)                  # (in, 2*hp)
        b_cat = jnp.concatenate([jnp.zeros_like(b), b], axis=1)    # (1, 2*hp)
        return w_cat, b_cat

    w1, b1 = cat_wb(params["w_neigh1"], params["w_self1"], params["b1"], in_feats)
    w2, b2 = cat_wb(params["w_neigh2"], params["w_self2"], params["b2"], hp)

    h = sage_layer(a_bf16, x_p, w1, b1, hp=hp, deg_col=deg_col, apply_relu=True,
                   tm=tm, tk=tk, vmem_limit=vmem_limit)
    h = sage_layer(a_bf16, h, w2, b2, hp=hp, deg_col=deg_col, apply_relu=False,
                   tm=tm, tk=tk, vmem_limit=vmem_limit)
    return h[:n, :h_feats]


def graphsage_reference(a, x, params):
    """Pure-JAX f32 reference matching DGL SAGEConv('mean') semantics."""
    def conv(x, ws, wn, b):
        deg = jnp.sum(a, axis=1, keepdims=True)
        mean = (a @ x) / jnp.maximum(deg, 1.0)
        mean = jnp.where(deg > 0, mean, 0.0)
        return x @ ws + mean @ wn + b
    h = jax.nn.relu(conv(x, params["w_self1"], params["w_neigh1"], params["b1"]))
    return conv(h, params["w_self2"], params["w_neigh2"], params["b2"])


def init_params(key, in_feats, h_feats):
    """Deterministic synthetic parameter init (Linear weights stored as (in, out))."""
    ks = jax.random.split(key, 4)
    s1 = 1.0 / jnp.sqrt(in_feats)
    s2 = 1.0 / jnp.sqrt(h_feats)
    return {
        "w_self1":  s1 * jax.random.normal(ks[0], (in_feats, h_feats), jnp.float32),
        "w_neigh1": s1 * jax.random.normal(ks[1], (in_feats, h_feats), jnp.float32),
        "b1":       jnp.zeros((1, h_feats), jnp.float32),
        "w_self2":  s2 * jax.random.normal(ks[2], (h_feats, h_feats), jnp.float32),
        "w_neigh2": s2 * jax.random.normal(ks[3], (h_feats, h_feats), jnp.float32),
        "b2":       jnp.zeros((1, h_feats), jnp.float32),
    }


if __name__ == "__main__":
    # small deterministic problem, sized so the (row, neighbor) tiling is exercised:
    # 256 nodes -> at least 2 row tiles (v7x megacore path) with 0/1 adjacency tiles.
    N, IN_FEATS, H_FEATS = 256, 8, 32
    key = jax.random.PRNGKey(0)
    k_graph, k_feat, k_param = jax.random.split(key, 3)

    # random sparse-ish directed graph as dense adjacency (no self loops)
    adj = (jax.random.uniform(k_graph, (N, N)) < 0.05).astype(jnp.float32)
    adj = adj * (1.0 - jnp.eye(N, dtype=jnp.float32))

    x = jax.random.normal(k_feat, (N, IN_FEATS), jnp.float32)
    params = init_params(k_param, IN_FEATS, H_FEATS)

    out = jax.jit(graphsage_forward)(adj, x, params)
    jax.block_until_ready(out)
    assert out.shape == (N, H_FEATS)
    assert bool(jnp.all(jnp.isfinite(out)))

    # loose tolerance: XWn/XSelf are bf16 and aggregate-after-linear reorders FP sums.
    ref = graphsage_reference(adj, x, params)
    max_err = float(jnp.max(jnp.abs(out - ref)))
    assert max_err < 1e-1, f"max abs error vs f32 reference too large: {max_err}"

    print("KERNEL_OK")
</pallas_src>

<mosaic_0001>
module attributes {stable_mosaic.version = 11 : i64} {
  func.func @_aggregate_kernel(%arg0: i32, %arg1: i32, %arg2: memref<128x256xbf16, #tpu.memory_space<vmem>>, %arg3: memref<256x128xbf16, #tpu.memory_space<vmem>>, %arg4: memref<128x128xbf16, #tpu.memory_space<vmem>>, %arg5: memref<128x128xf32, #tpu.memory_space<vmem>>) attributes {dimension_semantics = [#tpu.dimension_semantics<parallel>, #tpu.dimension_semantics<arbitrary>], iteration_bounds = array<i64: 2, 1>, scalar_prefetch = 0 : i64, scratch_operands = 0 : i64, tpu.core_type = #tpu.core_type<tc>, window_params = [{transform_indices = @transform_0, window_bounds = array<i64: 128, 256>}, {transform_indices = @transform_1, window_bounds = array<i64: 256, 128>}, {transform_indices = @transform_2, window_bounds = array<i64: 128, 128>}, {transform_indices = @transform_3, window_bounds = array<i64: 128, 128>}]} {
    %c0_i32 = arith.constant 0 : i32
    %0 = arith.cmpi eq, %arg1, %c0_i32 : i32
    %1 = arith.extui %0 : i1 to i32
    %c0_i32_0 = arith.constant 0 : i32
    %2 = arith.cmpi ne, %1, %c0_i32_0 : i32
    scf.if %2 {
      %cst_10 = arith.constant 0.000000e+00 : f32
      %12 = vector.broadcast %cst_10 : f32 to vector<128x128xf32>
      %c0_11 = arith.constant 0 : index
      %c0_12 = arith.constant 0 : index
      %13 = vector.load %arg5[%c0_11, %c0_12] : memref<128x128xf32, #tpu.memory_space<vmem>>, vector<128x128xf32>
      tpu.vector_store %arg5[%c0_11, %c0_12], %12 {strides = array<i32>} : memref<128x128xf32, #tpu.memory_space<vmem>>, vector<128x128xf32>,
    } else {
    }
    %c0 = arith.constant 0 : index
    %c0_1 = arith.constant 0 : index
    %3 = vector.load %arg5[%c0, %c0_1] : memref<128x128xf32, #tpu.memory_space<vmem>>, vector<128x128xf32>
    %c0_2 = arith.constant 0 : index
    %c0_3 = arith.constant 0 : index
    %4 = vector.load %arg2[%c0_2, %c0_3] : memref<128x256xbf16, #tpu.memory_space<vmem>>, vector<128x256xbf16>
    %c0_4 = arith.constant 0 : index
    %c0_5 = arith.constant 0 : index
    %5 = vector.load %arg3[%c0_4, %c0_5] : memref<256x128xbf16, #tpu.memory_space<vmem>>, vector<256x128xbf16>
    %cst = arith.constant dense<0.000000e+00> : vector<128x128xf32>
    %6 = tpu.matmul %4, %5, %cst {dimension_numbers = #tpu.dot_dimension_numbers<[1], [0], [0], [1], [0, 0, 1, 1], [], []>} : vector<128x256xbf16>, vector<256x128xbf16>, vector<128x128xf32> -> vector<128x128xf32>
    %7 = arith.addf %3, %6 : vector<128x128xf32>
    %c0_6 = arith.constant 0 : index
    %c0_7 = arith.constant 0 : index
    %8 = vector.load %arg5[%c0_6, %c0_7] : memref<128x128xf32, #tpu.memory_space<vmem>>, vector<128x128xf32>
    tpu.vector_store %arg5[%c0_6, %c0_7], %7 {strides = array<i32>} : memref<128x128xf32, #tpu.memory_space<vmem>>, vector<128x128xf32>,
    %c0_i32_8 = arith.constant 0 : i32
    %9 = arith.cmpi eq, %arg1, %c0_i32_8 : i32
    %10 = arith.extui %9 : i1 to i32
    %c0_i32_9 = arith.constant 0 : i32
    %11 = arith.cmpi ne, %10, %c0_i32_9 : i32
    scf.if %11 {
      %c0_10 = arith.constant 0 : index
      %c0_11 = arith.constant 0 : index
      %12 = vector.load %arg5[%c0_10, %c0_11] : memref<128x128xf32, #tpu.memory_space<vmem>>, vector<128x128xf32>
      %13 = vector.extract_strided_slice %12 {offsets = [0, 32], sizes = [128, 1], strides = [1, 1]} : vector<128x128xf32> to vector<128x1xf32>
      %cst_12 = arith.constant 0.000000e+00 : f32
      %14 = vector.broadcast %cst_12 : f32 to vector<128x1xf32>
      %15 = arith.cmpf ogt, %13, %14 : vector<128x1xf32>
      %cst_13 = arith.constant 1.000000e+00 : f32
      %16 = vector.broadcast %cst_13 : f32 to vector<128x1xf32>
      %17 = arith.maximumf %13, %16 : vector<128x1xf32>
      %cst_14 = arith.constant 1.000000e+00 : f32
      %18 = vector.broadcast %cst_14 : f32 to vector<128x1xf32>
      %19 = arith.divf %18, %17 : vector<128x1xf32>
      %cst_15 = arith.constant 0.000000e+00 : f32
      %20 = vector.broadcast %cst_15 : f32 to vector<128x1xf32>
      %21 = arith.select %15, %19, %20 : vector<128x1xi1>, vector<128x1xf32>
      %22 = vector.broadcast %21 : vector<128x1xf32> to vector<128x128xf32>
      %23 = arith.mulf %12, %22 : vector<128x128xf32>
      %c0_16 = arith.constant 0 : index
      %c0_17 = arith.constant 0 : index
      %24 = vector.load %arg4[%c0_16, %c0_17] : memref<128x128xbf16, #tpu.memory_space<vmem>>, vector<128x128xbf16>
      %25 = arith.extf %24 : vector<128x128xbf16> to vector<128x128xf32>
      %26 = arith.addf %23, %25 : vector<128x128xf32>
      %cst_18 = arith.constant 0.000000e+00 : f32
      %27 = vector.broadcast %cst_18 : f32 to vector<128x128xf32>
      %28 = arith.maximumf %26, %27 : vector<128x128xf32>
      %c0_19 = arith.constant 0 : index
      %c0_20 = arith.constant 0 : index
      %29 = vector.load %arg5[%c0_19, %c0_20] : memref<128x128xf32, #tpu.memory_space<vmem>>, vector<128x128xf32>
      tpu.vector_store %arg5[%c0_19, %c0_20], %28 {strides = array<i32>} : memref<128x128xf32, #tpu.memory_space<vmem>>, vector<128x128xf32>,
    } else {
    }
    return
  }
  func.func @transform_0(%arg0: i32, %arg1: i32) -> (i32, i32) {
    %c0_i32 = arith.constant 0 : i32
    return %arg0, %arg1 : i32, i32
  }
  func.func @transform_1(%arg0: i32, %arg1: i32) -> (i32, i32) {
    %c0_i32 = arith.constant 0 : i32
    %c0_i32_0 = arith.constant 0 : i32
    return %arg1, %c0_i32 : i32, i32
  }
  func.func @transform_2(%arg0: i32, %arg1: i32) -> (i32, i32) {
    %c0_i32 = arith.constant 0 : i32
    %c0_i32_0 = arith.constant 0 : i32
    return %arg0, %c0_i32 : i32, i32
  }
  func.func @transform_3(%arg0: i32, %arg1: i32) -> (i32, i32) {
    %c0_i32 = arith.constant 0 : i32
    %c0_i32_0 = arith.constant 0 : i32
    return %arg0, %c0_i32 : i32, i32
  }
}

module attributes {stable_mosaic.version = 11 : i64} {
  func.func @_transform_kernel(%arg0: i32, %arg1: memref<128x8xf32, #tpu.memory_space<vmem>>, %arg2: memref<8x256xf32, #tpu.memory_space<vmem>>, %arg3: memref<1x256xf32, #tpu.memory_space<vmem>>, %arg4: memref<128x128xbf16, #tpu.memory_space<vmem>>, %arg5: memref<128x128xbf16, #tpu.memory_space<vmem>>) attributes {dimension_semantics = [#tpu.dimension_semantics<parallel>], iteration_bounds = array<i64: 2>, scalar_prefetch = 0 : i64, scratch_operands = 0 : i64, tpu.core_type = #tpu.core_type<tc>, window_params = [{transform_indices = @transform_0, window_bounds = array<i64: 128, 8>}, {pipeline_mode = #tpu.pipeline_mode<synchronous>, transform_indices = @transform_1, window_bounds = array<i64: 8, 256>}, {pipeline_mode = #tpu.pipeline_mode<synchronous>, transform_indices = @transform_2, window_bounds = array<i64: 1, 256>}, {transform_indices = @transform_3, window_bounds = array<i64: 128, 128>}, {transform_indices = @transform_4, window_bounds = array<i64: 128, 128>}]} {
    %c0 = arith.constant 0 : index
    %c0_0 = arith.constant 0 : index
    %0 = vector.load %arg1[%c0, %c0_0] : memref<128x8xf32, #tpu.memory_space<vmem>>, vector<128x8xf32>
    %c0_1 = arith.constant 0 : index
    %c0_2 = arith.constant 0 : index
    %1 = vector.load %arg2[%c0_1, %c0_2] : memref<8x256xf32, #tpu.memory_space<vmem>>, vector<8x256xf32>
    %cst = arith.constant dense<0.000000e+00> : vector<128x256xf32>
    %2 = tpu.matmul %0, %1, %cst {dimension_numbers = #tpu.dot_dimension_numbers<[1], [0], [0], [1], [0, 0, 1, 1], [], []>} : vector<128x8xf32>, vector<8x256xf32>, vector<128x256xf32> -> vector<128x256xf32>
    %c0_3 = arith.constant 0 : index
    %c0_4 = arith.constant 0 : index
    %3 = vector.load %arg3[%c0_3, %c0_4] : memref<1x256xf32, #tpu.memory_space<vmem>>, vector<1x256xf32>
    %4 = vector.broadcast %3 : vector<1x256xf32> to vector<128x256xf32>
    %5 = arith.addf %2, %4 : vector<128x256xf32>
    %6 = vector.extract_strided_slice %5 {offsets = [0, 0], sizes = [128, 128], strides = [1, 1]} : vector<128x256xf32> to vector<128x128xf32>
    %7 = tpu.iota {dimensions = array<i32: 1>} : vector<128x128xi32>
    %c32_i32 = arith.constant 32 : i32
    %8 = vector.broadcast %c32_i32 : i32 to vector<128x128xi32>
    %9 = arith.cmpi eq, %7, %8 : vector<128x128xi32>
    %cst_5 = arith.constant 1.000000e+00 : f32
    %10 = vector.broadcast %cst_5 : f32 to vector<128x128xf32>
    %11 = arith.select %9, %10, %6 : vector<128x128xi1>, vector<128x128xf32>
    %12 = arith.truncf %11 : vector<128x128xf32> to vector<128x128xbf16>
    %c0_6 = arith.constant 0 : index
    %c0_7 = arith.constant 0 : index
    %13 = vector.load %arg4[%c0_6, %c0_7] : memref<128x128xbf16, #tpu.memory_space<vmem>>, vector<128x128xbf16>
    tpu.vector_store %arg4[%c0_6, %c0_7], %12 {strides = array<i32>} : memref<128x128xbf16, #tpu.memory_space<vmem>>, vector<128x128xbf16>,
    %14 = vector.extract_strided_slice %5 {offsets = [0, 128], sizes = [128, 128], strides = [1, 1]} : vector<128x256xf32> to vector<128x128xf32>
    %15 = arith.truncf %14 : vector<128x128xf32> to vector<128x128xbf16>
    %c0_8 = arith.constant 0 : index
    %c0_9 = arith.constant 0 : index
    %16 = vector.load %arg5[%c0_8, %c0_9] : memref<128x128xbf16, #tpu.memory_space<vmem>>, vector<128x128xbf16>
    tpu.vector_store %arg5[%c0_8, %c0_9], %15 {strides = array<i32>} : memref<128x128xbf16, #tpu.memory_space<vmem>>, vector<128x128xbf16>,
    return
  }
  func.func @transform_0(%arg0: i32) -> (i32, i32) {
    %c0_i32 = arith.constant 0 : i32
    %c0_i32_0 = arith.constant 0 : i32
    return %arg0, %c0_i32 : i32, i32
  }
  func.func @transform_1(%arg0: i32) -> (i32, i32) {
    %c0_i32 = arith.constant 0 : i32
    %c0_i32_0 = arith.constant 0 : i32
    %c0_i32_1 = arith.constant 0 : i32
    return %c0_i32, %c0_i32_0 : i32, i32
  }
  func.func @transform_2(%arg0: i32) -> (i32, i32) {
    %c0_i32 = arith.constant 0 : i32
    %c0_i32_0 = arith.constant 0 : i32
    %c0_i32_1 = arith.constant 0 : i32
    return %c0_i32, %c0_i32_0 : i32, i32
  }
  func.func @transform_3(%arg0: i32) -> (i32, i32) {
    %c0_i32 = arith.constant 0 : i32
    %c0_i32_0 = arith.constant 0 : i32
    return %arg0, %c0_i32 : i32, i32
  }
  func.func @transform_4(%arg0: i32) -> (i32, i32) {
    %c0_i32 = arith.constant 0 : i32
    %c0_i32_0 = arith.constant 0 : i32
    return %arg0, %c0_i32 : i32, i32
  }
}

module attributes {stable_mosaic.version = 11 : i64} {
  func.func @_aggregate_kernel(%arg0: i32, %arg1: i32, %arg2: memref<128x256xbf16, #tpu.memory_space<vmem>>, %arg3: memref<256x128xbf16, #tpu.memory_space<vmem>>, %arg4: memref<128x128xbf16, #tpu.memory_space<vmem>>, %arg5: memref<128x128xf32, #tpu.memory_space<vmem>>) attributes {dimension_semantics = [#tpu.dimension_semantics<parallel>, #tpu.dimension_semantics<arbitrary>], iteration_bounds = array<i64: 2, 1>, scalar_prefetch = 0 : i64, scratch_operands = 0 : i64, tpu.core_type = #tpu.core_type<tc>, window_params = [{transform_indices = @transform_0, window_bounds = array<i64: 128, 256>}, {transform_indices = @transform_1, window_bounds = array<i64: 256, 128>}, {transform_indices = @transform_2, window_bounds = array<i64: 128, 128>}, {transform_indices = @transform_3, window_bounds = array<i64: 128, 128>}]} {
    %c0_i32 = arith.constant 0 : i32
    %0 = arith.cmpi eq, %arg1, %c0_i32 : i32
    %1 = arith.extui %0 : i1 to i32
    %c0_i32_0 = arith.constant 0 : i32
    %2 = arith.cmpi ne, %1, %c0_i32_0 : i32
    scf.if %2 {
      %cst_10 = arith.constant 0.000000e+00 : f32
      %12 = vector.broadcast %cst_10 : f32 to vector<128x128xf32>
      %c0_11 = arith.constant 0 : index
      %c0_12 = arith.constant 0 : index
      %13 = vector.load %arg5[%c0_11, %c0_12] : memref<128x128xf32, #tpu.memory_space<vmem>>, vector<128x128xf32>
      tpu.vector_store %arg5[%c0_11, %c0_12], %12 {strides = array<i32>} : memref<128x128xf32, #tpu.memory_space<vmem>>, vector<128x128xf32>,
    } else {
    }
    %c0 = arith.constant 0 : index
    %c0_1 = arith.constant 0 : index
    %3 = vector.load %arg5[%c0, %c0_1] : memref<128x128xf32, #tpu.memory_space<vmem>>, vector<128x128xf32>
    %c0_2 = arith.constant 0 : index
    %c0_3 = arith.constant 0 : index
    %4 = vector.load %arg2[%c0_2, %c0_3] : memref<128x256xbf16, #tpu.memory_space<vmem>>, vector<128x256xbf16>
    %c0_4 = arith.constant 0 : index
    %c0_5 = arith.constant 0 : index
    %5 = vector.load %arg3[%c0_4, %c0_5] : memref<256x128xbf16, #tpu.memory_space<vmem>>, vector<256x128xbf16>
    %cst = arith.constant dense<0.000000e+00> : vector<128x128xf32>
    %6 = tpu.matmul %4, %5, %cst {dimension_numbers = #tpu.dot_dimension_numbers<[1], [0], [0], [1], [0, 0, 1, 1], [], []>} : vector<128x256xbf16>, vector<256x128xbf16>, vector<128x128xf32> -> vector<128x128xf32>
    %7 = arith.addf %3, %6 : vector<128x128xf32>
    %c0_6 = arith.constant 0 : index
    %c0_7 = arith.constant 0 : index
    %8 = vector.load %arg5[%c0_6, %c0_7] : memref<128x128xf32, #tpu.memory_space<vmem>>, vector<128x128xf32>
    tpu.vector_store %arg5[%c0_6, %c0_7], %7 {strides = array<i32>} : memref<128x128xf32, #tpu.memory_space<vmem>>, vector<128x128xf32>,
    %c0_i32_8 = arith.constant 0 : i32
    %9 = arith.cmpi eq, %arg1, %c0_i32_8 : i32
    %10 = arith.extui %9 : i1 to i32
    %c0_i32_9 = arith.constant 0 : i32
    %11 = arith.cmpi ne, %10, %c0_i32_9 : i32
    scf.if %11 {
      %c0_10 = arith.constant 0 : index
      %c0_11 = arith.constant 0 : index
      %12 = vector.load %arg5[%c0_10, %c0_11] : memref<128x128xf32, #tpu.memory_space<vmem>>, vector<128x128xf32>
      %13 = vector.extract_strided_slice %12 {offsets = [0, 32], sizes = [128, 1], strides = [1, 1]} : vector<128x128xf32> to vector<128x1xf32>
      %cst_12 = arith.constant 0.000000e+00 : f32
      %14 = vector.broadcast %cst_12 : f32 to vector<128x1xf32>
      %15 = arith.cmpf ogt, %13, %14 : vector<128x1xf32>
      %cst_13 = arith.constant 1.000000e+00 : f32
      %16 = vector.broadcast %cst_13 : f32 to vector<128x1xf32>
      %17 = arith.maximumf %13, %16 : vector<128x1xf32>
      %cst_14 = arith.constant 1.000000e+00 : f32
      %18 = vector.broadcast %cst_14 : f32 to vector<128x1xf32>
      %19 = arith.divf %18, %17 : vector<128x1xf32>
      %cst_15 = arith.constant 0.000000e+00 : f32
      %20 = vector.broadcast %cst_15 : f32 to vector<128x1xf32>
      %21 = arith.select %15, %19, %20 : vector<128x1xi1>, vector<128x1xf32>
      %22 = vector.broadcast %21 : vector<128x1xf32> to vector<128x128xf32>
      %23 = arith.mulf %12, %22 : vector<128x128xf32>
      %c0_16 = arith.constant 0 : index
      %c0_17 = arith.constant 0 : index
      %24 = vector.load %arg4[%c0_16, %c0_17] : memref<128x128xbf16, #tpu.memory_space<vmem>>, vector<128x128xbf16>
      %25 = arith.extf %24 : vector<128x128xbf16> to vector<128x128xf32>
      %26 = arith.addf %23, %25 : vector<128x128xf32>
      %c0_18 = arith.constant 0 : index
      %c0_19 = arith.constant 0 : index
      %27 = vector.load %arg5[%c0_18, %c0_19] : memref<128x128xf32, #tpu.memory_space<vmem>>, vector<128x128xf32>
      tpu.vector_store %arg5[%c0_18, %c0_19], %26 {strides = array<i32>} : memref<128x128xf32, #tpu.memory_space<vmem>>, vector<128x128xf32>,
    } else {
    }
    return
  }
  func.func @transform_0(%arg0: i32, %arg1: i32) -> (i32, i32) {
    %c0_i32 = arith.constant 0 : i32
    return %arg0, %arg1 : i32, i32
  }
  func.func @transform_1(%arg0: i32, %arg1: i32) -> (i32, i32) {
    %c0_i32 = arith.constant 0 : i32
    %c0_i32_0 = arith.constant 0 : i32
    return %arg1, %c0_i32 : i32, i32
  }
  func.func @transform_2(%arg0: i32, %arg1: i32) -> (i32, i32) {
    %c0_i32 = arith.constant 0 : i32
    %c0_i32_0 = arith.constant 0 : i32
    return %arg0, %c0_i32 : i32, i32
  }
  func.func @transform_3(%arg0: i32, %arg1: i32) -> (i32, i32) {
    %c0_i32 = arith.constant 0 : i32
    %c0_i32_0 = arith.constant 0 : i32
    return %arg0, %c0_i32 : i32, i32
  }
}

module attributes {stable_mosaic.version = 11 : i64} {
  func.func @_transform_kernel(%arg0: i32, %arg1: memref<128x128xf32, #tpu.memory_space<vmem>>, %arg2: memref<128x256xf32, #tpu.memory_space<vmem>>, %arg3: memref<1x256xf32, #tpu.memory_space<vmem>>, %arg4: memref<128x128xbf16, #tpu.memory_space<vmem>>, %arg5: memref<128x128xbf16, #tpu.memory_space<vmem>>) attributes {dimension_semantics = [#tpu.dimension_semantics<parallel>], iteration_bounds = array<i64: 2>, scalar_prefetch = 0 : i64, scratch_operands = 0 : i64, tpu.core_type = #tpu.core_type<tc>, window_params = [{transform_indices = @transform_0, window_bounds = array<i64: 128, 128>}, {pipeline_mode = #tpu.pipeline_mode<synchronous>, transform_indices = @transform_1, window_bounds = array<i64: 128, 256>}, {pipeline_mode = #tpu.pipeline_mode<synchronous>, transform_indices = @transform_2, window_bounds = array<i64: 1, 256>}, {transform_indices = @transform_3, window_bounds = array<i64: 128, 128>}, {transform_indices = @transform_4, window_bounds = array<i64: 128, 128>}]} {
    %c0 = arith.constant 0 : index
    %c0_0 = arith.constant 0 : index
    %0 = vector.load %arg1[%c0, %c0_0] : memref<128x128xf32, #tpu.memory_space<vmem>>, vector<128x128xf32>
    %c0_1 = arith.constant 0 : index
    %c0_2 = arith.constant 0 : index
    %1 = vector.load %arg2[%c0_1, %c0_2] : memref<128x256xf32, #tpu.memory_space<vmem>>, vector<128x256xf32>
    %cst = arith.constant dense<0.000000e+00> : vector<128x256xf32>
    %2 = tpu.matmul %0, %1, %cst {dimension_numbers = #tpu.dot_dimension_numbers<[1], [0], [0], [1], [0, 0, 1, 1], [], []>} : vector<128x128xf32>, vector<128x256xf32>, vector<128x256xf32> -> vector<128x256xf32>
    %c0_3 = arith.constant 0 : index
    %c0_4 = arith.constant 0 : index
    %3 = vector.load %arg3[%c0_3, %c0_4] : memref<1x256xf32, #tpu.memory_space<vmem>>, vector<1x256xf32>
    %4 = vector.broadcast %3 : vector<1x256xf32> to vector<128x256xf32>
    %5 = arith.addf %2, %4 : vector<128x256xf32>
    %6 = vector.extract_strided_slice %5 {offsets = [0, 0], sizes = [128, 128], strides = [1, 1]} : vector<128x256xf32> to vector<128x128xf32>
    %7 = tpu.iota {dimensions = array<i32: 1>} : vector<128x128xi32>
    %c32_i32 = arith.constant 32 : i32
    %8 = vector.broadcast %c32_i32 : i32 to vector<128x128xi32>
    %9 = arith.cmpi eq, %7, %8 : vector<128x128xi32>
    %cst_5 = arith.constant 1.000000e+00 : f32
    %10 = vector.broadcast %cst_5 : f32 to vector<128x128xf32>
    %11 = arith.select %9, %10, %6 : vector<128x128xi1>, vector<128x128xf32>
    %12 = arith.truncf %11 : vector<128x128xf32> to vector<128x128xbf16>
    %c0_6 = arith.constant 0 : index
    %c0_7 = arith.constant 0 : index
    %13 = vector.load %arg4[%c0_6, %c0_7] : memref<128x128xbf16, #tpu.memory_space<vmem>>, vector<128x128xbf16>
    tpu.vector_store %arg4[%c0_6, %c0_7], %12 {strides = array<i32>} : memref<128x128xbf16, #tpu.memory_space<vmem>>, vector<128x128xbf16>,
    %14 = vector.extract_strided_slice %5 {offsets = [0, 128], sizes = [128, 128], strides = [1, 1]} : vector<128x256xf32> to vector<128x128xf32>
    %15 = arith.truncf %14 : vector<128x128xf32> to vector<128x128xbf16>
    %c0_8 = arith.constant 0 : index
    %c0_9 = arith.constant 0 : index
    %16 = vector.load %arg5[%c0_8, %c0_9] : memref<128x128xbf16, #tpu.memory_space<vmem>>, vector<128x128xbf16>
    tpu.vector_store %arg5[%c0_8, %c0_9], %15 {strides = array<i32>} : memref<128x128xbf16, #tpu.memory_space<vmem>>, vector<128x128xbf16>,
    return
  }
  func.func @transform_0(%arg0: i32) -> (i32, i32) {
    %c0_i32 = arith.constant 0 : i32
    %c0_i32_0 = arith.constant 0 : i32
    return %arg0, %c0_i32 : i32, i32
  }
  func.func @transform_1(%arg0: i32) -> (i32, i32) {
    %c0_i32 = arith.constant 0 : i32
    %c0_i32_0 = arith.constant 0 : i32
    %c0_i32_1 = arith.constant 0 : i32
    return %c0_i32, %c0_i32_0 : i32, i32
  }
  func.func @transform_2(%arg0: i32) -> (i32, i32) {
    %c0_i32 = arith.constant 0 : i32
    %c0_i32_0 = arith.constant 0 : i32
    %c0_i32_1 = arith.constant 0 : i32
    return %c0_i32, %c0_i32_0 : i32, i32
  }
  func.func @transform_3(%arg0: i32) -> (i32, i32) {
    %c0_i32 = arith.constant 0 : i32
    %c0_i32_0 = arith.constant 0 : i32
    return %arg0, %c0_i32 : i32, i32
  }
  func.func @transform_4(%arg0: i32) -> (i32, i32) {
    %c0_i32 = arith.constant 0 : i32
    %c0_i32_0 = arith.constant 0 : i32
    return %arg0, %c0_i32 : i32, i32
  }
}

</mosaic_0001>

<llo_original>
// kernel: graphsage_forward.4
$region0: #{graphsage_forward.4}
  #allocation0 [shape = 'u32[]', space=smem, size = 0x4, offset = 0x4, fixed_abs, tag = 'smem constant byte address 0x4 - core index']
  #allocation1 [shape = 'u32[72,128]{1,0:T(1,128)}', space=vmem, size = 0x9000, scoped, tag = 'internal scratch']
  %s0 = inlined_call_operand.vmem [shape: f32[256,8], index: 0, kind: input, shape index: {}]
  %s1 = inlined_call_operand.vmem [shape: f32[8,256], index: 1, kind: input, shape index: {}]
  %s2 = inlined_call_operand.vmem [shape: f32[1,256], index: 2, kind: input, shape index: {}]
  %s3 = inlined_call_operand.vmem [shape: bf16[256,128], index: 3, kind: output, shape index: {0}]
  %s4 = inlined_call_operand.vmem [shape: bf16[256,128], index: 4, kind: output, shape index: {1}]
  %5 = xla_tuple %s3, %s4
  %s6 = sld [smem:[#allocation0]]
  $region53: #{graphsage_forward.4} parent=0
    _
  %s8 = ssub.s32 1, %s6
  %s9 = scalar_select 0, %s8, %s6
  loop: start=0, step=1, limit=4
  $region2: #{graphsage_forward.4} parent=0 // loop_pre_header
    _
  $region3: #{graphsage_forward.4} parent=0 // loop_header
    %s11 = sphi 0, %s15
    %p12 = scmp.ge.s32.totalorder %s11, 4
    %s21 = sphi 0, %s23
    %s24 = sphi 0, %s21
    %s25 = sphi 0, %s24
    %s41 = sphi 0, %s25
    %s45 = sphi 0, %s45
    %s47 = sphi 0, %s45
    %s48 = sphi 0, %s47
    %s62 = sphi 0, %s48
    %s66 = sphi 0, %s66
    %s68 = sphi 0, %s66
    %s69 = sphi 0, %s68
    %s83 = sphi 0, %s69
    %s89 = sphi 0, %s91
    %s92 = sphi 0, %s89
    %s93 = sphi 0, %s92
    %s109 = sphi 0, %s93
    %s115 = sphi 0, %s117
    %s118 = sphi 0, %s115
    %s119 = sphi 0, %s118
    %s135 = sphi 0, %s119
  $region4: #{graphsage_forward.4} parent=0 // loop_header_branch
    %14 = sbr.rel (%p12) target = $region8
  $region5: #{graphsage_forward.4} parent=0 // loop_body
    %s16 = ssub.s32 %s11, 1
    %s17 = ssub.s32 %s11, 2
    %s18 = sadd.s32 %s11, 1
    %s19 = ssub.s32 %s11, %s18
    %p20 = scmp.eq.s32.totalorder %s19, 0
    %s22 = sadd.s32 %s21, 1
    %s23 = scalar_select %p20, %s21, %s22
    %p26 = pneg %p20
    %p27 = scmp.eq.s32.totalorder %s11, 1
    %p28 = por %p26, %p27
    %p29 = scmp.ne.s32.totalorder %s21, %s24
    %p30 = scmp.eq.s32.totalorder %s11, 0
    %p31 = por %p29, %p30
    %p32 = scmp.ne.s32.totalorder %s21, %s24
    %p33 = scmp.eq.s32.totalorder %s16, 1
    %p34 = por %p32, %p33
    %p35 = scmp.ne.s32.totalorder %s24, %s25
    %p36 = scmp.eq.s32.totalorder %s16, 0
    %p37 = por %p35, %p36
    %p38 = scmp.ne.s32.totalorder %s24, %s25
    %p39 = scmp.eq.s32.totalorder %s17, 1
    %p40 = por %p38, %p39
    %p42 = scmp.ne.s32.totalorder %s25, %s41
    %p43 = scmp.eq.s32.totalorder %s17, 0
    %p44 = por %p42, %p43
    %s46 = sadd.s32 %s45, 1
    %p49 = scmp.eq.s32.totalorder %s11, 1
    %p50 = scmp.ne.s32.totalorder %s45, %s47
    %p51 = scmp.eq.s32.totalorder %s11, 0
    %p52 = por %p50, %p51
    %p53 = scmp.ne.s32.totalorder %s45, %s47
    %p54 = scmp.eq.s32.totalorder %s16, 1
    %p55 = por %p53, %p54
    %p56 = scmp.ne.s32.totalorder %s47, %s48
    %p57 = scmp.eq.s32.totalorder %s16, 0
    %p58 = por %p56, %p57
    %p59 = scmp.ne.s32.totalorder %s47, %s48
    %p60 = scmp.eq.s32.totalorder %s17, 1
    %p61 = por %p59, %p60
    %p63 = scmp.ne.s32.totalorder %s48, %s62
    %p64 = scmp.eq.s32.totalorder %s17, 0
    %p65 = por %p63, %p64
    %s67 = sadd.s32 %s66, 1
    %p70 = scmp.eq.s32.totalorder %s11, 1
    %p71 = scmp.ne.s32.totalorder %s66, %s68
    %p72 = scmp.eq.s32.totalorder %s11, 0
    %p73 = por %p71, %p72
    %p74 = scmp.ne.s32.totalorder %s66, %s68
    %p75 = scmp.eq.s32.totalorder %s16, 1
    %p76 = por %p74, %p75
    %p77 = scmp.ne.s32.totalorder %s68, %s69
    %p78 = scmp.eq.s32.totalorder %s16, 0
    %p79 = por %p77, %p78
    %p80 = scmp.ne.s32.totalorder %s68, %s69
    %p81 = scmp.eq.s32.totalorder %s17, 1
    %p82 = por %p80, %p81
    %p84 = scmp.ne.s32.totalorder %s69, %s83
    %p85 = scmp.eq.s32.totalorder %s17, 0
    %p86 = por %p84, %p85
    %s87 = ssub.s32 %s11, %s18
    %p88 = scmp.eq.s32.totalorder %s87, 0
    %s90 = sadd.s32 %s89, 1
    %s91 = scalar_select %p88, %s89, %s90
    %p94 = pneg %p88
    %p95 = scmp.eq.s32.totalorder %s11, 1
    %p96 = por %p94, %p95
    %p97 = scmp.ne.s32.totalorder %s89, %s92
    %p98 = scmp.eq.s32.totalorder %s11, 0
    %p99 = por %p97, %p98
    %p100 = scmp.ne.s32.totalorder %s89, %s92
    %p101 = scmp.eq.s32.totalorder %s16, 1
    %p102 = por %p100, %p101
    %p103 = scmp.ne.s32.totalorder %s92, %s93
    %p104 = scmp.eq.s32.totalorder %s16, 0
    %p105 = por %p103, %p104
    %p106 = scmp.ne.s32.totalorder %s92, %s93
    %p107 = scmp.eq.s32.totalorder %s17, 1
    %p108 = por %p106, %p107
    %p110 = scmp.ne.s32.totalorder %s93, %s109
    %p111 = scmp.eq.s32.totalorder %s17, 0
    %p112 = por %p110, %p111
    %s113 = ssub.s32 %s11, %s18
    %p114 = scmp.eq.s32.totalorder %s113, 0
    %s116 = sadd.s32 %s115, 1
    %s117 = scalar_select %p114, %s115, %s116
    %p120 = pneg %p114
    %p121 = scmp.eq.s32.totalorder %s11, 1
    %p122 = por %p120, %p121
    %p123 = scmp.ne.s32.totalorder %s115, %s118
    %p124 = scmp.eq.s32.totalorder %s11, 0
    %p125 = por %p123, %p124
    %p126 = scmp.ne.s32.totalorder %s115, %s118
    %p127 = scmp.eq.s32.totalorder %s16, 1
    %p128 = por %p126, %p127
    %p129 = scmp.ne.s32.totalorder %s118, %s119
    %p130 = scmp.eq.s32.totalorder %s16, 0
    %p131 = por %p129, %p130
    %p132 = scmp.ne.s32.totalorder %s118, %s119
    %p133 = scmp.eq.s32.totalorder %s17, 1
    %p134 = por %p132, %p133
    %p136 = scmp.ne.s32.totalorder %s119, %s135
    %p137 = scmp.eq.s32.totalorder %s17, 0
    %p138 = por %p136, %p137
    %p139 = scmp.le.s32.totalorder 1, %s11
    %p140 = scmp.lt.s32.totalorder %s11, 3
    %p141 = pnand %p139, %p140
    %p142 = pneg %p141
    // Predicated region
    $region9: #{graphsage_forward.4} parent=5 // pred_check
      _
    $region10: #{graphsage_forward.4} parent=5 // pred_check_branch
      %144 = sbr.rel (%p141) target = $region12
    $region11: #{graphsage_forward.4} parent=5 // pred_region
      %s145 = ssub.s32 %s11, 1
      // Predicated region
      $region13: #{graphsage_forward.4} parent=11 // pred_check
        %p146 = pneg %p58
      $region14: #{graphsage_forward.4} parent=11 // pred_check_branch
        %148 = sbr.rel (%p146) target = $region16
      $region15: #{graphsage_forward.4} parent=11 // pred_region
        _
      $region16: #{graphsage_forward.4} parent=11 // pred_fallthru
        _
      // Predicated region
      $region17: #{graphsage_forward.4} parent=11 // pred_check
        %p149 = pneg %p79
      $region18: #{graphsage_forward.4} parent=11 // pred_check_branch
        %151 = sbr.rel (%p149) target = $region20
      $region19: #{graphsage_forward.4} parent=11 // pred_region
        _
      $region20: #{graphsage_forward.4} parent=11 // pred_fallthru
        _
    $region12: #{graphsage_forward.4} parent=5 // pred_fallthru
      _
    %p152 = scmp.lt.s32.totalorder %s11, 2
    // Predicated region
    $region21: #{graphsage_forward.4} parent=5 // pred_check
      %p153 = pneg %p152
    $region22: #{graphsage_forward.4} parent=5 // pred_check_branch
      %155 = sbr.rel (%p153) target = $region24
    $region23: #{graphsage_forward.4} parent=5 // pred_region
      // Predicated region
      $region25: #{graphsage_forward.4} parent=23 // pred_check
        %p156 = pneg %p31
      $region26: #{graphsage_forward.4} parent=23 // pred_check_branch
        %158 = sbr.rel (%p156) target = $region28
      $region27: #{graphsage_forward.4} parent=23 // pred_region
        %s159 = smul.u32 16, %s11
        %p160 = scmp.lt.s32.totalorder %s159, 31
        %s161 = scalar_select %p160, %s159, 31
        %s162 = smul.addr %s161, 8
        %s163 = scalar_lea.vmem %s0, %s162
        %s164 = smul.u32 16, %s11
      $region28: #{graphsage_forward.4} parent=23 // pred_fallthru
        _
    $region24: #{graphsage_forward.4} parent=5 // pred_fallthru
      _
    %p165 = scmp.le.s32.totalorder 1, %s11
    %p166 = scmp.lt.s32.totalorder %s11, 3
    %p167 = pnand %p165, %p166
    %p168 = pneg %p167
    // Predicated region
    $region29: #{graphsage_forward.4} parent=5 // pred_check
      _
    $region30: #{graphsage_forward.4} parent=5 // pred_check_branch
      %170 = sbr.rel (%p167) target = $region32
    $region31: #{graphsage_forward.4} parent=5 // pred_region
      %s171 = ssub.s32 %s11, 1
      %s172 = smul.u32 16, %s16
      %p173 = scmp.lt.s32.totalorder %s172, 31
      %s174 = scalar_select %p173, %s172, 31
      %s175 = smul.addr %s174, 8
      %s176 = scalar_lea.vmem %s0, %s175
      %p177 = pneg %p37
      %p178 = pneg %p34
      %p179 = pneg %p58
      %p180 = pneg %p55
      %p181 = pneg %p79
      %p182 = pneg %p76
      %p183 = pneg %p105
      %p184 = pneg %p102
      %s185 = smul.u32 16, %s16
      %p186 = scmp.lt.s32.totalorder %s185, 31
      %s187 = scalar_select %p186, %s185, 31
      %s188 = smul.addr %s187, 4
      %s189 = scalar_lea.vmem %s3, %s188
      %p190 = pneg %p131
      %p191 = pneg %p128
      %s192 = smul.u32 16, %s16
      %p193 = scmp.lt.s32.totalorder %s192, 31
      %s194 = scalar_select %p193, %s192, 31
      %s195 = smul.addr %s194, 4
      %s196 = scalar_lea.vmem %s4, %s195
      %s197 = smul.u32 16, %s16
      %p198 = scmp.lt.s32.totalorder %s197, 31
      %s199 = scalar_select %p198, %s197, 31
      %s200 = smul.addr %s199, 8
      %s201 = scalar_lea.vmem %s0, %s200
      %s202 = smul.u32 16, %s16
      %s203 = smul.u32 16, %s16
      %p204 = scmp.lt.s32.totalorder %s203, 31
      %s205 = scalar_select %p204, %s203, 31
      %s206 = smul.addr %s205, 4
      %s207 = scalar_lea.vmem %s3, %s206
      %s208 = smul.u32 16, %s16
      %s209 = smul.u32 16, %s16
      %p210 = scmp.lt.s32.totalorder %s209, 31
      %s211 = scalar_select %p210, %s209, 31
      %s212 = smul.addr %s211, 4
      %s213 = scalar_lea.vmem %s4, %s212
      %s214 = smul.u32 16, %s16
      %v215 = vld [vmem:[%s201] sm:$0xff]
      %v216 = vld [vmem:[%s201 + $0x8] sm:$0xff]
      %v217 = vld [vmem:[%s201 + $0x10] sm:$0xff]
      %v218 = vld [vmem:[%s201 + $0x18] sm:$0xff]
      %v219 = vld [vmem:[%s201 + $0x20] sm:$0xff]
      %v220 = vld [vmem:[%s201 + $0x28] sm:$0xff]
      %v221 = vld [vmem:[%s201 + $0x30] sm:$0xff]
      %v222 = vld [vmem:[%s201 + $0x38] sm:$0xff]
      %v223 = vld [vmem:[%s201 + $0x40] sm:$0xff]
      %v224 = vld [vmem:[%s201 + $0x48] sm:$0xff]
      %v225 = vld [vmem:[%s201 + $0x50] sm:$0xff]
      %v226 = vld [vmem:[%s201 + $0x58] sm:$0xff]
      %v227 = vld [vmem:[%s201 + $0x60] sm:$0xff]
      %v228 = vld [vmem:[%s201 + $0x68] sm:$0xff]
      %v229 = vld [vmem:[%s201 + $0x70] sm:$0xff]
      %v230 = vld [vmem:[%s201 + $0x78] sm:$0xff]
      %v231 = vld [vmem:[%s1] sm:$0xff]
      %v232 = vld [vmem:[%s1 + $0x8] sm:$0xff]
      %v233 = vld [vmem:[%s2] sm:$0x3]
      %v235 = vperm.slane %v233, 0
      %v236 = vperm.slane %v233, 1
      %vm239 = vcmask 64512
      %v241 = vsel %vm239, %v215, 0
      %v244 = vsel %vm239, %v216, 0
      %v247 = vsel %vm239, %v217, 0
      %v250 = vsel %vm239, %v218, 0
      %v253 = vsel %vm239, %v219, 0
      %v256 = vsel %vm239, %v220, 0
      %v259 = vsel %vm239, %v221, 0
      %v262 = vsel %vm239, %v222, 0
      %v265 = vsel %vm239, %v223, 0
      %v268 = vsel %vm239, %v224, 0
      %v271 = vsel %vm239, %v225, 0
      %v274 = vsel %vm239, %v226, 0
      %v277 = vsel %vm239, %v227, 0
      %v280 = vsel %vm239, %v228, 0
      %v283 = vsel %vm239, %v229, 0
      %v286 = vsel %vm239, %v230, 0
      %288 = vmatpush.msra.mxu0 0.0
      %289 = vmatpush.msra.mxu0 0.0
      %290 = vmatpush.msra.mxu0 0.0
      %291 = vmatpush.msra.mxu0 0.0
      %292 = vmatpush.msra.mxu0 0.0
      %293 = vmatpush.msra.mxu0 0.0
      %294 = vmatpush.msra.mxu0 0.0
      %295 = vmatpush.msra.mxu0 0.0
      %296 = vmatpush.msra.mxu0 0.0
      %297 = vmatpush.msra.mxu0 0.0
      %298 = vmatpush.msra.mxu0 0.0
      %299 = vmatpush.msra.mxu0 0.0
      %300 = vmatpush.msra.mxu0 0.0
      %301 = vmatpush.msra.mxu0 0.0
      %302 = vmatpush.msra.mxu0 0.0
      %303 = vmatpush.msra.mxu0 %v231
      %304 = vmatmul.f32.gmra.mxu0 %v241
      %v305 = vpop.f32.mrf.mxu0
      %v306 = vadd.f32 %v235, %v305
      %307 = vmatmul.f32.gmra.mxu0 %v244
      %v308 = vpop.f32.mrf.mxu0
      %v309 = vadd.f32 %v235, %v308
      %310 = vmatmul.f32.gmra.mxu0 %v247
      %v311 = vpop.f32.mrf.mxu0
      %v312 = vadd.f32 %v235, %v311
      %313 = vmatmul.f32.gmra.mxu0 %v250
      %v314 = vpop.f32.mrf.mxu0
      %v315 = vadd.f32 %v235, %v314
      %316 = vmatmul.f32.gmra.mxu0 %v253
      %v317 = vpop.f32.mrf.mxu0
      %v318 = vadd.f32 %v235, %v317
      %319 = vmatmul.f32.gmra.mxu0 %v256
      %v320 = vpop.f32.mrf.mxu0
      %v321 = vadd.f32 %v235, %v320
      %322 = vmatmul.f32.gmra.mxu0 %v259
      %v323 = vpop.f32.mrf.mxu0
      %v324 = vadd.f32 %v235, %v323
      %325 = vmatmul.f32.gmra.mxu0 %v262
      %v326 = vpop.f32.mrf.mxu0
      %v327 = vadd.f32 %v235, %v326
      %328 = vmatmul.f32.gmra.mxu0 %v265
      %v329 = vpop.f32.mrf.mxu0
      %v330 = vadd.f32 %v235, %v329
      %331 = vmatmul.f32.gmra.mxu0 %v268
      %v332 = vpop.f32.mrf.mxu0
      %v333 = vadd.f32 %v235, %v332
      %334 = vmatmul.f32.gmra.mxu0 %v271
      %v335 = vpop.f32.mrf.mxu0
      %v336 = vadd.f32 %v235, %v335
      %337 = vmatmul.f32.gmra.mxu0 %v274
      %v338 = vpop.f32.mrf.mxu0
      %v339 = vadd.f32 %v235, %v338
      %340 = vmatmul.f32.gmra.mxu0 %v277
      %v341 = vpop.f32.mrf.mxu0
      %v342 = vadd.f32 %v235, %v341
      %343 = vmatmul.f32.gmra.mxu0 %v280
      %v344 = vpop.f32.mrf.mxu0
      %v345 = vadd.f32 %v235, %v344
      %346 = vmatmul.f32.gmra.mxu0 %v283
      %v347 = vpop.f32.mrf.mxu0
      %v348 = vadd.f32 %v235, %v347
      %349 = vmatmul.f32.gmra.mxu0 %v286
      %v350 = vpop.f32.mrf.mxu0
      %v351 = vadd.f32 %v235, %v350
      %352 = vdwg.mxu0
      %353 = vmatpush.msra.mxu0 0.0
      %354 = vmatpush.msra.mxu0 0.0
      %355 = vmatpush.msra.mxu0 0.0
      %356 = vmatpush.msra.mxu0 0.0
      %357 = vmatpush.msra.mxu0 0.0
      %358 = vmatpush.msra.mxu0 0.0
      %359 = vmatpush.msra.mxu0 0.0
      %360 = vmatpush.msra.mxu0 0.0
      %361 = vmatpush.msra.mxu0 0.0
      %362 = vmatpush.msra.mxu0 0.0
      %363 = vmatpush.msra.mxu0 0.0
      %364 = vmatpush.msra.mxu0 0.0
      %365 = vmatpush.msra.mxu0 0.0
      %366 = vmatpush.msra.mxu0 0.0
      %367 = vmatpush.msra.mxu0 0.0
      %368 = vmatpush.msra.mxu0 %v232
      %369 = vmatmul.f32.gmra.mxu0 %v241
      %v370 = vpop.f32.mrf.mxu0
      %v371 = vadd.f32 %v236, %v370
      %372 = vmatmul.f32.gmra.mxu0 %v244
      %v373 = vpop.f32.mrf.mxu0
      %v374 = vadd.f32 %v236, %v373
      %375 = vmatmul.f32.gmra.mxu0 %v247
      %v376 = vpop.f32.mrf.mxu0
      %v377 = vadd.f32 %v236, %v376
      %378 = vmatmul.f32.gmra.mxu0 %v250
      %v379 = vpop.f32.mrf.mxu0
      %v380 = vadd.f32 %v236, %v379
      %381 = vmatmul.f32.gmra.mxu0 %v253
      %v382 = vpop.f32.mrf.mxu0
      %v383 = vadd.f32 %v236, %v382
      %384 = vmatmul.f32.gmra.mxu0 %v256
      %v385 = vpop.f32.mrf.mxu0
      %v386 = vadd.f32 %v236, %v385
      %387 = vmatmul.f32.gmra.mxu0 %v259
      %v388 = vpop.f32.mrf.mxu0
      %v389 = vadd.f32 %v236, %v388
      %390 = vmatmul.f32.gmra.mxu0 %v262
      %v391 = vpop.f32.mrf.mxu0
      %v392 = vadd.f32 %v236, %v391
      %393 = vmatmul.f32.gmra.mxu0 %v265
      %v394 = vpop.f32.mrf.mxu0
      %v395 = vadd.f32 %v236, %v394
      %396 = vmatmul.f32.gmra.mxu0 %v268
      %v397 = vpop.f32.mrf.mxu0
      %v398 = vadd.f32 %v236, %v397
      %399 = vmatmul.f32.gmra.mxu0 %v271
      %v400 = vpop.f32.mrf.mxu0
      %v401 = vadd.f32 %v236, %v400
      %402 = vmatmul.f32.gmra.mxu0 %v274
      %v403 = vpop.f32.mrf.mxu0
      %v404 = vadd.f32 %v236, %v403
      %405 = vmatmul.f32.gmra.mxu0 %v277
      %v406 = vpop.f32.mrf.mxu0
      %v407 = vadd.f32 %v236, %v406
      %408 = vmatmul.f32.gmra.mxu0 %v280
      %v409 = vpop.f32.mrf.mxu0
      %v410 = vadd.f32 %v236, %v409
      %411 = vmatmul.f32.gmra.mxu0 %v283
      %v412 = vpop.f32.mrf.mxu0
      %v413 = vadd.f32 %v236, %v412
      %414 = vmatmul.f32.gmra.mxu0 %v286
      %v415 = vpop.f32.mrf.mxu0
      %v416 = vadd.f32 %v236, %v415
      %417 = vdwg.mxu0
      %v418 = vlaneseq
      %v419 = vand.u32 %v418, 127
      %vm420 = vcmp.eq.s32.totalorder %v419, 32
      %v421 = vsel %vm420, 1.0, %v306
      %v422 = vsel %vm420, 1.0, %v309
      %v423 = vsel %vm420, 1.0, %v312
      %v424 = vsel %vm420, 1.0, %v315
      %v425 = vsel %vm420, 1.0, %v318
      %v426 = vsel %vm420, 1.0, %v321
      %v427 = vsel %vm420, 1.0, %v324
      %v428 = vsel %vm420, 1.0, %v327
      %v429 = vsel %vm420, 1.0, %v330
      %v430 = vsel %vm420, 1.0, %v333
      %v431 = vsel %vm420, 1.0, %v336
      %v432 = vsel %vm420, 1.0, %v339
      %v433 = vsel %vm420, 1.0, %v342
      %v434 = vsel %vm420, 1.0, %v345
      %v435 = vsel %vm420, 1.0, %v348
      %v436 = vsel %vm420, 1.0, %v351
      %v437 = vpack.c.bf16 %v421, %v421
      %v438 = vpack.c.bf16 %v422, %v422
      %v439 = vpack.c.bf16 %v423, %v423
      %v440 = vpack.c.bf16 %v424, %v424
      %v441 = vpack.c.bf16 %v425, %v425
      %v442 = vpack.c.bf16 %v426, %v426
      %v443 = vpack.c.bf16 %v427, %v427
      %v444 = vpack.c.bf16 %v428, %v428
      %v445 = vpack.c.bf16 %v429, %v429
      %v446 = vpack.c.bf16 %v430, %v430
      %v447 = vpack.c.bf16 %v431, %v431
      %v448 = vpack.c.bf16 %v432, %v432
      %v449 = vpack.c.bf16 %v433, %v433
      %v450 = vpack.c.bf16 %v434, %v434
      %v451 = vpack.c.bf16 %v435, %v435
      %v452 = vpack.c.bf16 %v436, %v436
      %453 = vst [vmem:[%s207] sm:$0xf] %v437
      %454 = vst [vmem:[%s207 + $0x4] sm:$0xf] %v438
      %455 = vst [vmem:[%s207 + $0x8] sm:$0xf] %v439
      %456 = vst [vmem:[%s207 + $0xc] sm:$0xf] %v440
      %457 = vst [vmem:[%s207 + $0x10] sm:$0xf] %v441
      %458 = vst [vmem:[%s207 + $0x14] sm:$0xf] %v442
      %459 = vst [vmem:[%s207 + $0x18] sm:$0xf] %v443
      %460 = vst [vmem:[%s207 + $0x1c] sm:$0xf] %v444
      %461 = vst [vmem:[%s207 + $0x20] sm:$0xf] %v445
      %462 = vst [vmem:[%s207 + $0x24] sm:$0xf] %v446
      %463 = vst [vmem:[%s207 + $0x28] sm:$0xf] %v447
      %464 = vst [vmem:[%s207 + $0x2c] sm:$0xf] %v448
      %465 = vst [vmem:[%s207 + $0x30] sm:$0xf] %v449
      %466 = vst [vmem:[%s207 + $0x34] sm:$0xf] %v450
      %467 = vst [vmem:[%s207 + $0x38] sm:$0xf] %v451
      %468 = vst [vmem:[%s207 + $0x3c] sm:$0xf] %v452
      %v469 = vpack.c.bf16 %v371, %v371
      %v470 = vpack.c.bf16 %v374, %v374
      %v471 = vpack.c.bf16 %v377, %v377
      %v472 = vpack.c.bf16 %v380, %v380
      %v473 = vpack.c.bf16 %v383, %v383
      %v474 = vpack.c.bf16 %v386, %v386
      %v475 = vpack.c.bf16 %v389, %v389
      %v476 = vpack.c.bf16 %v392, %v392
      %v477 = vpack.c.bf16 %v395, %v395
      %v478 = vpack.c.bf16 %v398, %v398
      %v479 = vpack.c.bf16 %v401, %v401
      %v480 = vpack.c.bf16 %v404, %v404
      %v481 = vpack.c.bf16 %v407, %v407
      %v482 = vpack.c.bf16 %v410, %v410
      %v483 = vpack.c.bf16 %v413, %v413
      %v484 = vpack.c.bf16 %v416, %v416
      %485 = vst [vmem:[%s213] sm:$0xf] %v469
      %486 = vst [vmem:[%s213 + $0x4] sm:$0xf] %v470
      %487 = vst [vmem:[%s213 + $0x8] sm:$0xf] %v471
      %488 = vst [vmem:[%s213 + $0xc] sm:$0xf] %v472
      %489 = vst [vmem:[%s213 + $0x10] sm:$0xf] %v473
      %490 = vst [vmem:[%s213 + $0x14] sm:$0xf] %v474
      %491 = vst [vmem:[%s213 + $0x18] sm:$0xf] %v475
      %492 = vst [vmem:[%s213 + $0x1c] sm:$0xf] %v476
      %493 = vst [vmem:[%s213 + $0x20] sm:$0xf] %v477
      %494 = vst [vmem:[%s213 + $0x24] sm:$0xf] %v478
      %495 = vst [vmem:[%s213 + $0x28] sm:$0xf] %v479
      %496 = vst [vmem:[%s213 + $0x2c] sm:$0xf] %v480
      %497 = vst [vmem:[%s213 + $0x30] sm:$0xf] %v481
      %498 = vst [vmem:[%s213 + $0x34] sm:$0xf] %v482
      %499 = vst [vmem:[%s213 + $0x38] sm:$0xf] %v483
      %500 = vst [vmem:[%s213 + $0x3c] sm:$0xf] %v484
      %s501 = smul.u32 16, %s16
      %p502 = scmp.lt.s32.totalorder %s501, 31
      %s503 = scalar_select %p502, %s501, 31
      %s504 = smul.addr %s503, 4
      %s505 = scalar_lea.vmem %s3, %s504
      %s506 = smul.u32 16, %s16
      %p507 = scmp.lt.s32.totalorder %s506, 31
      %s508 = scalar_select %p507, %s506, 31
      %s509 = smul.addr %s508, 4
      %s510 = scalar_lea.vmem %s4, %s509
      // Predicated region
      $region33: #{graphsage_forward.4} parent=31 // pred_check
        %p511 = pneg %p102
      $region34: #{graphsage_forward.4} parent=31 // pred_check_branch
        %513 = sbr.rel (%p511) target = $region36
      $region35: #{graphsage_forward.4} parent=31 // pred_region
        %s514 = smul.u32 16, %s16
      $region36: #{graphsage_forward.4} parent=31 // pred_fallthru
        _
      // Predicated region
      $region37: #{graphsage_forward.4} parent=31 // pred_check
        %p515 = pneg %p128
      $region38: #{graphsage_forward.4} parent=31 // pred_check_branch
        %517 = sbr.rel (%p515) target = $region40
      $region39: #{graphsage_forward.4} parent=31 // pred_region
        %s518 = smul.u32 16, %s16
      $region40: #{graphsage_forward.4} parent=31 // pred_fallthru
        _
    $region32: #{graphsage_forward.4} parent=5 // pred_fallthru
      _
    %p519 = scmp.le.s32.totalorder 2, %s11
    // Predicated region
    $region41: #{graphsage_forward.4} parent=5 // pred_check
      %p520 = pneg %p519
    $region42: #{graphsage_forward.4} parent=5 // pred_check_branch
      %522 = sbr.rel (%p520) target = $region44
    $region43: #{graphsage_forward.4} parent=5 // pred_region
      %s523 = ssub.s32 %s11, 2
      // Predicated region
      $region45: #{graphsage_forward.4} parent=43 // pred_check
        %p524 = pneg %p108
      $region46: #{graphsage_forward.4} parent=43 // pred_check_branch
        %526 = sbr.rel (%p524) target = $region48
      $region47: #{graphsage_forward.4} parent=43 // pred_region
        %s527 = smul.u32 16, %s17
        %p528 = scmp.lt.s32.totalorder %s527, 31
        %s529 = scalar_select %p528, %s527, 31
        %s530 = smul.addr %s529, 4
        %s531 = scalar_lea.vmem %s3, %s530
      $region48: #{graphsage_forward.4} parent=43 // pred_fallthru
        _
      // Predicated region
      $region49: #{graphsage_forward.4} parent=43 // pred_check
        %p532 = pneg %p134
      $region50: #{graphsage_forward.4} parent=43 // pred_check_branch
        %534 = sbr.rel (%p532) target = $region52
      $region51: #{graphsage_forward.4} parent=43 // pred_region
        %s535 = smul.u32 16, %s17
        %p536 = scmp.lt.s32.totalorder %s535, 31
        %s537 = scalar_select %p536, %s535, 31
        %s538 = smul.addr %s537, 4
        %s539 = scalar_lea.vmem %s4, %s538
      $region52: #{graphsage_forward.4} parent=43 // pred_fallthru
        _
    $region44: #{graphsage_forward.4} parent=5 // pred_fallthru
      _
  $region6: #{graphsage_forward.4} parent=0 // loop_footer
    %s15 = sadd.s32 1, %s11
  $region7: #{graphsage_forward.4} parent=0 // loop_footer_branch
    %10 = sbr.rel target = $region3
  $region8: #{graphsage_forward.4} parent=0 // loop_exit
    _

// kernel: graphsage_forward.6
$region0: #{graphsage_forward.6}
  #allocation0 [shape = 'u32[]', space=smem, size = 0x4, offset = 0x4, fixed_abs, tag = 'smem constant byte address 0x4 - core index']
  #allocation1 [shape = 'u32[72,128]{1,0:T(1,128)}', space=vmem, size = 0x9000, scoped, tag = 'internal scratch']
  %s0 = inlined_call_operand.vmem [shape: f32[256,128], index: 0, kind: input, shape index: {}]
  %s1 = inlined_call_operand.vmem [shape: f32[128,256], index: 1, kind: input, shape index: {}]
  %s2 = inlined_call_operand.vmem [shape: f32[1,256], index: 2, kind: input, shape index: {}]
  %s3 = inlined_call_operand.vmem [shape: bf16[256,128], index: 3, kind: output, shape index: {0}]
  %s4 = inlined_call_operand.vmem [shape: bf16[256,128], index: 4, kind: output, shape index: {1}]
  %5 = xla_tuple %s3, %s4
  %s6 = sld [smem:[#allocation0]]
  $region53: #{graphsage_forward.6} parent=0
    _
  %s8 = ssub.s32 1, %s6
  %s9 = scalar_select 0, %s8, %s6
  loop: start=0, step=1, limit=4
  $region2: #{graphsage_forward.6} parent=0 // loop_pre_header
    _
  $region3: #{graphsage_forward.6} parent=0 // loop_header
    %s11 = sphi 0, %s15
    %p12 = scmp.ge.s32.totalorder %s11, 4
    %s21 = sphi 0, %s23
    %s24 = sphi 0, %s21
    %s25 = sphi 0, %s24
    %s41 = sphi 0, %s25
    %s45 = sphi 0, %s45
    %s47 = sphi 0, %s45
    %s48 = sphi 0, %s47
    %s62 = sphi 0, %s48
    %s66 = sphi 0, %s66
    %s68 = sphi 0, %s66
    %s69 = sphi 0, %s68
    %s83 = sphi 0, %s69
    %s89 = sphi 0, %s91
    %s92 = sphi 0, %s89
    %s93 = sphi 0, %s92
    %s109 = sphi 0, %s93
    %s115 = sphi 0, %s117
    %s118 = sphi 0, %s115
    %s119 = sphi 0, %s118
    %s135 = sphi 0, %s119
  $region4: #{graphsage_forward.6} parent=0 // loop_header_branch
    %14 = sbr.rel (%p12) target = $region8
  $region5: #{graphsage_forward.6} parent=0 // loop_body
    %s16 = ssub.s32 %s11, 1
    %s17 = ssub.s32 %s11, 2
    %s18 = sadd.s32 %s11, 1
    %s19 = ssub.s32 %s11, %s18
    %p20 = scmp.eq.s32.totalorder %s19, 0
    %s22 = sadd.s32 %s21, 1
    %s23 = scalar_select %p20, %s21, %s22
    %p26 = pneg %p20
    %p27 = scmp.eq.s32.totalorder %s11, 1
    %p28 = por %p26, %p27
    %p29 = scmp.ne.s32.totalorder %s21, %s24
    %p30 = scmp.eq.s32.totalorder %s11, 0
    %p31 = por %p29, %p30
    %p32 = scmp.ne.s32.totalorder %s21, %s24
    %p33 = scmp.eq.s32.totalorder %s16, 1
    %p34 = por %p32, %p33
    %p35 = scmp.ne.s32.totalorder %s24, %s25
    %p36 = scmp.eq.s32.totalorder %s16, 0
    %p37 = por %p35, %p36
    %p38 = scmp.ne.s32.totalorder %s24, %s25
    %p39 = scmp.eq.s32.totalorder %s17, 1
    %p40 = por %p38, %p39
    %p42 = scmp.ne.s32.totalorder %s25, %s41
    %p43 = scmp.eq.s32.totalorder %s17, 0
    %p44 = por %p42, %p43
    %s46 = sadd.s32 %s45, 1
    %p49 = scmp.eq.s32.totalorder %s11, 1
    %p50 = scmp.ne.s32.totalorder %s45, %s47
    %p51 = scmp.eq.s32.totalorder %s11, 0
    %p52 = por %p50, %p51
    %p53 = scmp.ne.s32.totalorder %s45, %s47
    %p54 = scmp.eq.s32.totalorder %s16, 1
    %p55 = por %p53, %p54
    %p56 = scmp.ne.s32.totalorder %s47, %s48
    %p57 = scmp.eq.s32.totalorder %s16, 0
    %p58 = por %p56, %p57
    %p59 = scmp.ne.s32.totalorder %s47, %s48
    %p60 = scmp.eq.s32.totalorder %s17, 1
    %p61 = por %p59, %p60
    %p63 = scmp.ne.s32.totalorder %s48, %s62
    %p64 = scmp.eq.s32.totalorder %s17, 0
    %p65 = por %p63, %p64
    %s67 = sadd.s32 %s66, 1
    %p70 = scmp.eq.s32.totalorder %s11, 1
    %p71 = scmp.ne.s32.totalorder %s66, %s68
    %p72 = scmp.eq.s32.totalorder %s11, 0
    %p73 = por %p71, %p72
    %p74 = scmp.ne.s32.totalorder %s66, %s68
    %p75 = scmp.eq.s32.totalorder %s16, 1
    %p76 = por %p74, %p75
    %p77 = scmp.ne.s32.totalorder %s68, %s69
    %p78 = scmp.eq.s32.totalorder %s16, 0
    %p79 = por %p77, %p78
    %p80 = scmp.ne.s32.totalorder %s68, %s69
    %p81 = scmp.eq.s32.totalorder %s17, 1
    %p82 = por %p80, %p81
    %p84 = scmp.ne.s32.totalorder %s69, %s83
    %p85 = scmp.eq.s32.totalorder %s17, 0
    %p86 = por %p84, %p85
    %s87 = ssub.s32 %s11, %s18
    %p88 = scmp.eq.s32.totalorder %s87, 0
    %s90 = sadd.s32 %s89, 1
    %s91 = scalar_select %p88, %s89, %s90
    %p94 = pneg %p88
    %p95 = scmp.eq.s32.totalorder %s11, 1
    %p96 = por %p94, %p95
    %p97 = scmp.ne.s32.totalorder %s89, %s92
    %p98 = scmp.eq.s32.totalorder %s11, 0
    %p99 = por %p97, %p98
    %p100 = scmp.ne.s32.totalorder %s89, %s92
    %p101 = scmp.eq.s32.totalorder %s16, 1
    %p102 = por %p100, %p101
    %p103 = scmp.ne.s32.totalorder %s92, %s93
    %p104 = scmp.eq.s32.totalorder %s16, 0
    %p105 = por %p103, %p104
    %p106 = scmp.ne.s32.totalorder %s92, %s93
    %p107 = scmp.eq.s32.totalorder %s17, 1
    %p108 = por %p106, %p107
    %p110 = scmp.ne.s32.totalorder %s93, %s109
    %p111 = scmp.eq.s32.totalorder %s17, 0
    %p112 = por %p110, %p111
    %s113 = ssub.s32 %s11, %s18
    %p114 = scmp.eq.s32.totalorder %s113, 0
    %s116 = sadd.s32 %s115, 1
    %s117 = scalar_select %p114, %s115, %s116
    %p120 = pneg %p114
    %p121 = scmp.eq.s32.totalorder %s11, 1
    %p122 = por %p120, %p121
    %p123 = scmp.ne.s32.totalorder %s115, %s118
    %p124 = scmp.eq.s32.totalorder %s11, 0
    %p125 = por %p123, %p124
    %p126 = scmp.ne.s32.totalorder %s115, %s118
    %p127 = scmp.eq.s32.totalorder %s16, 1
    %p128 = por %p126, %p127
    %p129 = scmp.ne.s32.totalorder %s118, %s119
    %p130 = scmp.eq.s32.totalorder %s16, 0
    %p131 = por %p129, %p130
    %p132 = scmp.ne.s32.totalorder %s118, %s119
    %p133 = scmp.eq.s32.totalorder %s17, 1
    %p134 = por %p132, %p133
    %p136 = scmp.ne.s32.totalorder %s119, %s135
    %p137 = scmp.eq.s32.totalorder %s17, 0
    %p138 = por %p136, %p137
    %p139 = scmp.le.s32.totalorder 1, %s11
    %p140 = scmp.lt.s32.totalorder %s11, 3
    %p141 = pnand %p139, %p140
    %p142 = pneg %p141
    // Predicated region
    $region9: #{graphsage_forward.6} parent=5 // pred_check
      _
    $region10: #{graphsage_forward.6} parent=5 // pred_check_branch
      %144 = sbr.rel (%p141) target = $region12
    $region11: #{graphsage_forward.6} parent=5 // pred_region
      %s145 = ssub.s32 %s11, 1
      // Predicated region
      $region13: #{graphsage_forward.6} parent=11 // pred_check
        %p146 = pneg %p58
      $region14: #{graphsage_forward.6} parent=11 // pred_check_branch
        %148 = sbr.rel (%p146) target = $region16
      $region15: #{graphsage_forward.6} parent=11 // pred_region
        _
      $region16: #{graphsage_forward.6} parent=11 // pred_fallthru
        _
      // Predicated region
      $region17: #{graphsage_forward.6} parent=11 // pred_check
        %p149 = pneg %p79
      $region18: #{graphsage_forward.6} parent=11 // pred_check_branch
        %151 = sbr.rel (%p149) target = $region20
      $region19: #{graphsage_forward.6} parent=11 // pred_region
        _
      $region20: #{graphsage_forward.6} parent=11 // pred_fallthru
        _
    $region12: #{graphsage_forward.6} parent=5 // pred_fallthru
      _
    %p152 = scmp.lt.s32.totalorder %s11, 2
    // Predicated region
    $region21: #{graphsage_forward.6} parent=5 // pred_check
      %p153 = pneg %p152
    $region22: #{graphsage_forward.6} parent=5 // pred_check_branch
      %155 = sbr.rel (%p153) target = $region24
    $region23: #{graphsage_forward.6} parent=5 // pred_region
      // Predicated region
      $region25: #{graphsage_forward.6} parent=23 // pred_check
        %p156 = pneg %p31
      $region26: #{graphsage_forward.6} parent=23 // pred_check_branch
        %158 = sbr.rel (%p156) target = $region28
      $region27: #{graphsage_forward.6} parent=23 // pred_region
        %s159 = smul.u32 16, %s11
        %p160 = scmp.lt.s32.totalorder %s159, 31
        %s161 = scalar_select %p160, %s159, 31
        %s162 = smul.addr %s161, 8
        %s163 = scalar_lea.vmem %s0, %s162
        %s164 = smul.u32 16, %s11
      $region28: #{graphsage_forward.6} parent=23 // pred_fallthru
        _
    $region24: #{graphsage_forward.6} parent=5 // pred_fallthru
      _
    %p165 = scmp.le.s32.totalorder 1, %s11
    %p166 = scmp.lt.s32.totalorder %s11, 3
    %p167 = pnand %p165, %p166
    %p168 = pneg %p167
    // Predicated region
    $region29: #{graphsage_forward.6} parent=5 // pred_check
      _
    $region30: #{graphsage_forward.6} parent=5 // pred_check_branch
      %170 = sbr.rel (%p167) target = $region32
    $region31: #{graphsage_forward.6} parent=5 // pred_region
      %s171 = ssub.s32 %s11, 1
      %s172 = smul.u32 16, %s16
      %p173 = scmp.lt.s32.totalorder %s172, 31
      %s174 = scalar_select %p173, %s172, 31
      %s175 = smul.addr %s174, 8
      %s176 = scalar_lea.vmem %s0, %s175
      %p177 = pneg %p37
      %p178 = pneg %p34
      %p179 = pneg %p58
      %p180 = pneg %p55
      %p181 = pneg %p79
      %p182 = pneg %p76
      %p183 = pneg %p105
      %p184 = pneg %p102
      %s185 = smul.u32 16, %s16
      %p186 = scmp.lt.s32.totalorder %s185, 31
      %s187 = scalar_select %p186, %s185, 31
      %s188 = smul.addr %s187, 4
      %s189 = scalar_lea.vmem %s3, %s188
      %p190 = pneg %p131
      %p191 = pneg %p128
      %s192 = smul.u32 16, %s16
      %p193 = scmp.lt.s32.totalorder %s192, 31
      %s194 = scalar_select %p193, %s192, 31
      %s195 = smul.addr %s194, 4
      %s196 = scalar_lea.vmem %s4, %s195
      %s197 = smul.u32 16, %s16
      %p198 = scmp.lt.s32.totalorder %s197, 31
      %s199 = scalar_select %p198, %s197, 31
      %s200 = smul.addr %s199, 8
      %s201 = scalar_lea.vmem %s0, %s200
      %s202 = smul.u32 16, %s16
      %s203 = smul.u32 16, %s16
      %p204 = scmp.lt.s32.totalorder %s203, 31
      %s205 = scalar_select %p204, %s203, 31
      %s206 = smul.addr %s205, 4
      %s207 = scalar_lea.vmem %s3, %s206
      %s208 = smul.u32 16, %s16
      %s209 = smul.u32 16, %s16
      %p210 = scmp.lt.s32.totalorder %s209, 31
      %s211 = scalar_select %p210, %s209, 31
      %s212 = smul.addr %s211, 4
      %s213 = scalar_lea.vmem %s4, %s212
      %s214 = smul.u32 16, %s16
      %v215 = vld [vmem:[%s201] sm:$0xff]
      %v216 = vld [vmem:[%s201 + $0x8] sm:$0xff]
      %v217 = vld [vmem:[%s201 + $0x10] sm:$0xff]
      %v218 = vld [vmem:[%s201 + $0x18] sm:$0xff]
      %v219 = vld [vmem:[%s201 + $0x20] sm:$0xff]
      %v220 = vld [vmem:[%s201 + $0x28] sm:$0xff]
      %v221 = vld [vmem:[%s201 + $0x30] sm:$0xff]
      %v222 = vld [vmem:[%s201 + $0x38] sm:$0xff]
      %v223 = vld [vmem:[%s201 + $0x40] sm:$0xff]
      %v224 = vld [vmem:[%s201 + $0x48] sm:$0xff]
      %v225 = vld [vmem:[%s201 + $0x50] sm:$0xff]
      %v226 = vld [vmem:[%s201 + $0x58] sm:$0xff]
      %v227 = vld [vmem:[%s201 + $0x60] sm:$0xff]
      %v228 = vld [vmem:[%s201 + $0x68] sm:$0xff]
      %v229 = vld [vmem:[%s201 + $0x70] sm:$0xff]
      %v230 = vld [vmem:[%s201 + $0x78] sm:$0xff]
      %v231 = vld [vmem:[%s1] sm:$0xff]
      %v232 = vld [vmem:[%s1 + $0x8] sm:$0xff]
      %v233 = vld [vmem:[%s1 + $0x10] sm:$0xff]
      %v234 = vld [vmem:[%s1 + $0x18] sm:$0xff]
      %v235 = vld [vmem:[%s1 + $0x20] sm:$0xff]
      %v236 = vld [vmem:[%s1 + $0x28] sm:$0xff]
      %v237 = vld [vmem:[%s1 + $0x30] sm:$0xff]
      %v238 = vld [vmem:[%s1 + $0x38] sm:$0xff]
      %v239 = vld [vmem:[%s1 + $0x40] sm:$0xff]
      %v240 = vld [vmem:[%s1 + $0x48] sm:$0xff]
      %v241 = vld [vmem:[%s1 + $0x50] sm:$0xff]
      %v242 = vld [vmem:[%s1 + $0x58] sm:$0xff]
      %v243 = vld [vmem:[%s1 + $0x60] sm:$0xff]
      %v244 = vld [vmem:[%s1 + $0x68] sm:$0xff]
      %v245 = vld [vmem:[%s1 + $0x70] sm:$0xff]
      %v246 = vld [vmem:[%s1 + $0x78] sm:$0xff]
      %v247 = vld [vmem:[%s1 + $0x80] sm:$0xff]
      %v248 = vld [vmem:[%s1 + $0x88] sm:$0xff]
      %v249 = vld [vmem:[%s1 + $0x90] sm:$0xff]
      %v250 = vld [vmem:[%s1 + $0x98] sm:$0xff]
      %v251 = vld [vmem:[%s1 + $0xa0] sm:$0xff]
      %v252 = vld [vmem:[%s1 + $0xa8] sm:$0xff]
      %v253 = vld [vmem:[%s1 + $0xb0] sm:$0xff]
      %v254 = vld [vmem:[%s1 + $0xb8] sm:$0xff]
      %v255 = vld [vmem:[%s1 + $0xc0] sm:$0xff]
      %v256 = vld [vmem:[%s1 + $0xc8] sm:$0xff]
      %v257 = vld [vmem:[%s1 + $0xd0] sm:$0xff]
      %v258 = vld [vmem:[%s1 + $0xd8] sm:$0xff]
      %v259 = vld [vmem:[%s1 + $0xe0] sm:$0xff]
      %v260 = vld [vmem:[%s1 + $0xe8] sm:$0xff]
      %v261 = vld [vmem:[%s1 + $0xf0] sm:$0xff]
      %v262 = vld [vmem:[%s1 + $0xf8] sm:$0xff]
      %v263 = vld [vmem:[%s2] sm:$0x3]
      %v265 = vperm.slane %v263, 0
      %v266 = vperm.slane %v263, 1
      %269 = vmatpush.msra.mxu0 %v261
      %270 = vmatpush.msra.mxu0 %v259
      %271 = vmatpush.msra.mxu0 %v257
      %272 = vmatpush.msra.mxu0 %v255
      %273 = vmatpush.msra.mxu0 %v253
      %274 = vmatpush.msra.mxu0 %v251
      %275 = vmatpush.msra.mxu0 %v249
      %276 = vmatpush.msra.mxu0 %v247
      %277 = vmatpush.msra.mxu0 %v245
      %278 = vmatpush.msra.mxu0 %v243
      %279 = vmatpush.msra.mxu0 %v241
      %280 = vmatpush.msra.mxu0 %v239
      %281 = vmatpush.msra.mxu0 %v237
      %282 = vmatpush.msra.mxu0 %v235
      %283 = vmatpush.msra.mxu0 %v233
      %284 = vmatpush.msra.mxu0 %v231
      %285 = vmatmul.f32.gmra.mxu0 %v215
      %v286 = vpop.f32.mrf.mxu0
      %v287 = vadd.f32 %v265, %v286
      %288 = vmatmul.f32.gmra.mxu0 %v216
      %v289 = vpop.f32.mrf.mxu0
      %v290 = vadd.f32 %v265, %v289
      %291 = vmatmul.f32.gmra.mxu0 %v217
      %v292 = vpop.f32.mrf.mxu0
      %v293 = vadd.f32 %v265, %v292
      %294 = vmatmul.f32.gmra.mxu0 %v218
      %v295 = vpop.f32.mrf.mxu0
      %v296 = vadd.f32 %v265, %v295
      %297 = vmatmul.f32.gmra.mxu0 %v219
      %v298 = vpop.f32.mrf.mxu0
      %v299 = vadd.f32 %v265, %v298
      %300 = vmatmul.f32.gmra.mxu0 %v220
      %v301 = vpop.f32.mrf.mxu0
      %v302 = vadd.f32 %v265, %v301
      %303 = vmatmul.f32.gmra.mxu0 %v221
      %v304 = vpop.f32.mrf.mxu0
      %v305 = vadd.f32 %v265, %v304
      %306 = vmatmul.f32.gmra.mxu0 %v222
      %v307 = vpop.f32.mrf.mxu0
      %v308 = vadd.f32 %v265, %v307
      %309 = vmatmul.f32.gmra.mxu0 %v223
      %v310 = vpop.f32.mrf.mxu0
      %v311 = vadd.f32 %v265, %v310
      %312 = vmatmul.f32.gmra.mxu0 %v224
      %v313 = vpop.f32.mrf.mxu0
      %v314 = vadd.f32 %v265, %v313
      %315 = vmatmul.f32.gmra.mxu0 %v225
      %v316 = vpop.f32.mrf.mxu0
      %v317 = vadd.f32 %v265, %v316
      %318 = vmatmul.f32.gmra.mxu0 %v226
      %v319 = vpop.f32.mrf.mxu0
      %v320 = vadd.f32 %v265, %v319
      %321 = vmatmul.f32.gmra.mxu0 %v227
      %v322 = vpop.f32.mrf.mxu0
      %v323 = vadd.f32 %v265, %v322
      %324 = vmatmul.f32.gmra.mxu0 %v228
      %v325 = vpop.f32.mrf.mxu0
      %v326 = vadd.f32 %v265, %v325
      %327 = vmatmul.f32.gmra.mxu0 %v229
      %v328 = vpop.f32.mrf.mxu0
      %v329 = vadd.f32 %v265, %v328
      %330 = vmatmul.f32.gmra.mxu0 %v230
      %v331 = vpop.f32.mrf.mxu0
      %v332 = vadd.f32 %v265, %v331
      %333 = vdwg.mxu0
      %334 = vmatpush.msra.mxu0 %v262
      %335 = vmatpush.msra.mxu0 %v260
      %336 = vmatpush.msra.mxu0 %v258
      %337 = vmatpush.msra.mxu0 %v256
      %338 = vmatpush.msra.mxu0 %v254
      %339 = vmatpush.msra.mxu0 %v252
      %340 = vmatpush.msra.mxu0 %v250
      %341 = vmatpush.msra.mxu0 %v248
      %342 = vmatpush.msra.mxu0 %v246
      %343 = vmatpush.msra.mxu0 %v244
      %344 = vmatpush.msra.mxu0 %v242
      %345 = vmatpush.msra.mxu0 %v240
      %346 = vmatpush.msra.mxu0 %v238
      %347 = vmatpush.msra.mxu0 %v236
      %348 = vmatpush.msra.mxu0 %v234
      %349 = vmatpush.msra.mxu0 %v232
      %350 = vmatmul.f32.gmra.mxu0 %v215
      %v351 = vpop.f32.mrf.mxu0
      %v352 = vadd.f32 %v266, %v351
      %353 = vmatmul.f32.gmra.mxu0 %v216
      %v354 = vpop.f32.mrf.mxu0
      %v355 = vadd.f32 %v266, %v354
      %356 = vmatmul.f32.gmra.mxu0 %v217
      %v357 = vpop.f32.mrf.mxu0
      %v358 = vadd.f32 %v266, %v357
      %359 = vmatmul.f32.gmra.mxu0 %v218
      %v360 = vpop.f32.mrf.mxu0
      %v361 = vadd.f32 %v266, %v360
      %362 = vmatmul.f32.gmra.mxu0 %v219
      %v363 = vpop.f32.mrf.mxu0
      %v364 = vadd.f32 %v266, %v363
      %365 = vmatmul.f32.gmra.mxu0 %v220
      %v366 = vpop.f32.mrf.mxu0
      %v367 = vadd.f32 %v266, %v366
      %368 = vmatmul.f32.gmra.mxu0 %v221
      %v369 = vpop.f32.mrf.mxu0
      %v370 = vadd.f32 %v266, %v369
      %371 = vmatmul.f32.gmra.mxu0 %v222
      %v372 = vpop.f32.mrf.mxu0
      %v373 = vadd.f32 %v266, %v372
      %374 = vmatmul.f32.gmra.mxu0 %v223
      %v375 = vpop.f32.mrf.mxu0
      %v376 = vadd.f32 %v266, %v375
      %377 = vmatmul.f32.gmra.mxu0 %v224
      %v378 = vpop.f32.mrf.mxu0
      %v379 = vadd.f32 %v266, %v378
      %380 = vmatmul.f32.gmra.mxu0 %v225
      %v381 = vpop.f32.mrf.mxu0
      %v382 = vadd.f32 %v266, %v381
      %383 = vmatmul.f32.gmra.mxu0 %v226
      %v384 = vpop.f32.mrf.mxu0
      %v385 = vadd.f32 %v266, %v384
      %386 = vmatmul.f32.gmra.mxu0 %v227
      %v387 = vpop.f32.mrf.mxu0
      %v388 = vadd.f32 %v266, %v387
      %389 = vmatmul.f32.gmra.mxu0 %v228
      %v390 = vpop.f32.mrf.mxu0
      %v391 = vadd.f32 %v266, %v390
      %392 = vmatmul.f32.gmra.mxu0 %v229
      %v393 = vpop.f32.mrf.mxu0
      %v394 = vadd.f32 %v266, %v393
      %395 = vmatmul.f32.gmra.mxu0 %v230
      %v396 = vpop.f32.mrf.mxu0
      %v397 = vadd.f32 %v266, %v396
      %398 = vdwg.mxu0
      %v399 = vlaneseq
      %v400 = vand.u32 %v399, 127
      %vm401 = vcmp.eq.s32.totalorder %v400, 32
      %v402 = vsel %vm401, 1.0, %v287
      %v403 = vsel %vm401, 1.0, %v290
      %v404 = vsel %vm401, 1.0, %v293
      %v405 = vsel %vm401, 1.0, %v296
      %v406 = vsel %vm401, 1.0, %v299
      %v407 = vsel %vm401, 1.0, %v302
      %v408 = vsel %vm401, 1.0, %v305
      %v409 = vsel %vm401, 1.0, %v308
      %v410 = vsel %vm401, 1.0, %v311
      %v411 = vsel %vm401, 1.0, %v314
      %v412 = vsel %vm401, 1.0, %v317
      %v413 = vsel %vm401, 1.0, %v320
      %v414 = vsel %vm401, 1.0, %v323
      %v415 = vsel %vm401, 1.0, %v326
      %v416 = vsel %vm401, 1.0, %v329
      %v417 = vsel %vm401, 1.0, %v332
      %v418 = vpack.c.bf16 %v402, %v402
      %v419 = vpack.c.bf16 %v403, %v403
      %v420 = vpack.c.bf16 %v404, %v404
      %v421 = vpack.c.bf16 %v405, %v405
      %v422 = vpack.c.bf16 %v406, %v406
      %v423 = vpack.c.bf16 %v407, %v407
      %v424 = vpack.c.bf16 %v408, %v408
      %v425 = vpack.c.bf16 %v409, %v409
      %v426 = vpack.c.bf16 %v410, %v410
      %v427 = vpack.c.bf16 %v411, %v411
      %v428 = vpack.c.bf16 %v412, %v412
      %v429 = vpack.c.bf16 %v413, %v413
      %v430 = vpack.c.bf16 %v414, %v414
      %v431 = vpack.c.bf16 %v415, %v415
      %v432 = vpack.c.bf16 %v416, %v416
      %v433 = vpack.c.bf16 %v417, %v417
      %434 = vst [vmem:[%s207] sm:$0xf] %v418
      %435 = vst [vmem:[%s207 + $0x4] sm:$0xf] %v419
      %436 = vst [vmem:[%s207 + $0x8] sm:$0xf] %v420
      %437 = vst [vmem:[%s207 + $0xc] sm:$0xf] %v421
      %438 = vst [vmem:[%s207 + $0x10] sm:$0xf] %v422
      %439 = vst [vmem:[%s207 + $0x14] sm:$0xf] %v423
      %440 = vst [vmem:[%s207 + $0x18] sm:$0xf] %v424
      %441 = vst [vmem:[%s207 + $0x1c] sm:$0xf] %v425
      %442 = vst [vmem:[%s207 + $0x20] sm:$0xf] %v426
      %443 = vst [vmem:[%s207 + $0x24] sm:$0xf] %v427
      %444 = vst [vmem:[%s207 + $0x28] sm:$0xf] %v428
      %445 = vst [vmem:[%s207 + $0x2c] sm:$0xf] %v429
      %446 = vst [vmem:[%s207 + $0x30] sm:$0xf] %v430
      %447 = vst [vmem:[%s207 + $0x34] sm:$0xf] %v431
      %448 = vst [vmem:[%s207 + $0x38] sm:$0xf] %v432
      %449 = vst [vmem:[%s207 + $0x3c] sm:$0xf] %v433
      %v450 = vpack.c.bf16 %v352, %v352
      %v451 = vpack.c.bf16 %v355, %v355
      %v452 = vpack.c.bf16 %v358, %v358
      %v453 = vpack.c.bf16 %v361, %v361
      %v454 = vpack.c.bf16 %v364, %v364
      %v455 = vpack.c.bf16 %v367, %v367
      %v456 = vpack.c.bf16 %v370, %v370
      %v457 = vpack.c.bf16 %v373, %v373
      %v458 = vpack.c.bf16 %v376, %v376
      %v459 = vpack.c.bf16 %v379, %v379
      %v460 = vpack.c.bf16 %v382, %v382
      %v461 = vpack.c.bf16 %v385, %v385
      %v462 = vpack.c.bf16 %v388, %v388
      %v463 = vpack.c.bf16 %v391, %v391
      %v464 = vpack.c.bf16 %v394, %v394
      %v465 = vpack.c.bf16 %v397, %v397
      %466 = vst [vmem:[%s213] sm:$0xf] %v450
      %467 = vst [vmem:[%s213 + $0x4] sm:$0xf] %v451
      %468 = vst [vmem:[%s213 + $0x8] sm:$0xf] %v452
      %469 = vst [vmem:[%s213 + $0xc] sm:$0xf] %v453
      %470 = vst [vmem:[%s213 + $0x10] sm:$0xf] %v454
      %471 = vst [vmem:[%s213 + $0x14] sm:$0xf] %v455
      %472 = vst [vmem:[%s213 + $0x18] sm:$0xf] %v456
      %473 = vst [vmem:[%s213 + $0x1c] sm:$0xf] %v457
      %474 = vst [vmem:[%s213 + $0x20] sm:$0xf] %v458
      %475 = vst [vmem:[%s213 + $0x24] sm:$0xf] %v459
      %476 = vst [vmem:[%s213 + $0x28] sm:$0xf] %v460
      %477 = vst [vmem:[%s213 + $0x2c] sm:$0xf] %v461
      %478 = vst [vmem:[%s213 + $0x30] sm:$0xf] %v462
      %479 = vst [vmem:[%s213 + $0x34] sm:$0xf] %v463
      %480 = vst [vmem:[%s213 + $0x38] sm:$0xf] %v464
      %481 = vst [vmem:[%s213 + $0x3c] sm:$0xf] %v465
      %s482 = smul.u32 16, %s16
      %p483 = scmp.lt.s32.totalorder %s482, 31
      %s484 = scalar_select %p483, %s482, 31
      %s485 = smul.addr %s484, 4
      %s486 = scalar_lea.vmem %s3, %s485
      %s487 = smul.u32 16, %s16
      %p488 = scmp.lt.s32.totalorder %s487, 31
      %s489 = scalar_select %p488, %s487, 31
      %s490 = smul.addr %s489, 4
      %s491 = scalar_lea.vmem %s4, %s490
      // Predicated region
      $region33: #{graphsage_forward.6} parent=31 // pred_check
        %p492 = pneg %p102
      $region34: #{graphsage_forward.6} parent=31 // pred_check_branch
        %494 = sbr.rel (%p492) target = $region36
      $region35: #{graphsage_forward.6} parent=31 // pred_region
        %s495 = smul.u32 16, %s16
      $region36: #{graphsage_forward.6} parent=31 // pred_fallthru
        _
      // Predicated region
      $region37: #{graphsage_forward.6} parent=31 // pred_check
        %p496 = pneg %p128
      $region38: #{graphsage_forward.6} parent=31 // pred_check_branch
        %498 = sbr.rel (%p496) target = $region40
      $region39: #{graphsage_forward.6} parent=31 // pred_region
        %s499 = smul.u32 16, %s16
      $region40: #{graphsage_forward.6} parent=31 // pred_fallthru
        _
    $region32: #{graphsage_forward.6} parent=5 // pred_fallthru
      _
    %p500 = scmp.le.s32.totalorder 2, %s11
    // Predicated region
    $region41: #{graphsage_forward.6} parent=5 // pred_check
      %p501 = pneg %p500
    $region42: #{graphsage_forward.6} parent=5 // pred_check_branch
      %503 = sbr.rel (%p501) target = $region44
    $region43: #{graphsage_forward.6} parent=5 // pred_region
      %s504 = ssub.s32 %s11, 2
      // Predicated region
      $region45: #{graphsage_forward.6} parent=43 // pred_check
        %p505 = pneg %p108
      $region46: #{graphsage_forward.6} parent=43 // pred_check_branch
        %507 = sbr.rel (%p505) target = $region48
      $region47: #{graphsage_forward.6} parent=43 // pred_region
        %s508 = smul.u32 16, %s17
        %p509 = scmp.lt.s32.totalorder %s508, 31
        %s510 = scalar_select %p509, %s508, 31
        %s511 = smul.addr %s510, 4
        %s512 = scalar_lea.vmem %s3, %s511
      $region48: #{graphsage_forward.6} parent=43 // pred_fallthru
        _
      // Predicated region
      $region49: #{graphsage_forward.6} parent=43 // pred_check
        %p513 = pneg %p134
      $region50: #{graphsage_forward.6} parent=43 // pred_check_branch
        %515 = sbr.rel (%p513) target = $region52
      $region51: #{graphsage_forward.6} parent=43 // pred_region
        %s516 = smul.u32 16, %s17
        %p517 = scmp.lt.s32.totalorder %s516, 31
        %s518 = scalar_select %p517, %s516, 31
        %s519 = smul.addr %s518, 4
        %s520 = scalar_lea.vmem %s4, %s519
      $region52: #{graphsage_forward.6} parent=43 // pred_fallthru
        _
    $region44: #{graphsage_forward.6} parent=5 // pred_fallthru
      _
  $region6: #{graphsage_forward.6} parent=0 // loop_footer
    %s15 = sadd.s32 1, %s11
  $region7: #{graphsage_forward.6} parent=0 // loop_footer_branch
    %10 = sbr.rel target = $region3
  $region8: #{graphsage_forward.6} parent=0 // loop_exit
    _

// kernel: graphsage_forward.5
$region0: #{graphsage_forward.5}
  #allocation0 [shape = 'u32[]', space=smem, size = 0x4, offset = 0x4, fixed_abs, tag = 'smem constant byte address 0x4 - core index']
  #allocation1 [shape = 'u32[72,128]{1,0:T(1,128)}', space=vmem, size = 0x9000, scoped, tag = 'internal scratch']
  %s0 = inlined_call_operand.vmem [shape: bf16[256,256], index: 0, kind: input, shape index: {}]
  %s1 = inlined_call_operand.vmem [shape: bf16[256,128], index: 1, kind: input, shape index: {}]
  %s2 = inlined_call_operand.vmem [shape: bf16[256,128], index: 2, kind: input, shape index: {}]
  %s3 = inlined_call_operand.vmem [shape: f32[256,128], index: 3, kind: output, shape index: {}]
  %s4 = sld [smem:[#allocation0]]
  $region53: #{graphsage_forward.5} parent=0
    _
  %s6 = ssub.s32 1, %s4
  %s7 = scalar_select 0, %s6, %s4
  loop: start=0, step=1, limit=4
  $region2: #{graphsage_forward.5} parent=0 // loop_pre_header
    _
  $region3: #{graphsage_forward.5} parent=0 // loop_header
    %s9 = sphi 0, %s13
    %p10 = scmp.ge.s32.totalorder %s9, 4
    %s16 = sphi 0, %s28
    %s17 = sphi 0, %s24
    %s18 = sphi 0, %s16
    %s19 = sphi 0, %s17
    %s20 = sphi 0, %s18
    %s21 = sphi 0, %s19
    %s33 = sphi 0, %s35
    %s36 = sphi 0, %s33
    %s37 = sphi 0, %s36
    %s53 = sphi 0, %s37
    %s59 = sphi 0, %s61
    %s62 = sphi 0, %s59
    %s63 = sphi 0, %s62
    %s79 = sphi 0, %s63
    %s85 = sphi 0, %s87
    %s88 = sphi 0, %s85
    %s89 = sphi 0, %s88
    %s105 = sphi 0, %s89
    %s111 = sphi 0, %s113
    %s114 = sphi 0, %s111
    %s115 = sphi 0, %s114
    %s131 = sphi 0, %s115
  $region4: #{graphsage_forward.5} parent=0 // loop_header_branch
    %12 = sbr.rel (%p10) target = $region8
  $region5: #{graphsage_forward.5} parent=0 // loop_body
    %s14 = ssub.s32 %s9, 1
    %s15 = ssub.s32 %s9, 2
    %s22 = sadd.s32 1, %s17
    %p23 = scmp.ge.s32.totalorder %s22, 1
    %s24 = scalar_select %p23, 0, %s22
    %s25 = sadd.s32 1, %s16
    %s26 = scalar_select %p23, %s25, %s16
    %p27 = scmp.ge.s32.totalorder %s26, 2
    %s28 = scalar_select %p27, 0, %s26
    %s29 = ssub.s32 %s16, %s28
    %s30 = ssub.s32 %s17, %s24
    %s31 = sor.u32 %s29, %s30
    %p32 = scmp.eq.s32.totalorder %s31, 0
    %s34 = sadd.s32 %s33, 1
    %s35 = scalar_select %p32, %s33, %s34
    %p38 = pneg %p32
    %p39 = scmp.eq.s32.totalorder %s9, 1
    %p40 = por %p38, %p39
    %p41 = scmp.ne.s32.totalorder %s33, %s36
    %p42 = scmp.eq.s32.totalorder %s9, 0
    %p43 = por %p41, %p42
    %p44 = scmp.ne.s32.totalorder %s33, %s36
    %p45 = scmp.eq.s32.totalorder %s14, 1
    %p46 = por %p44, %p45
    %p47 = scmp.ne.s32.totalorder %s36, %s37
    %p48 = scmp.eq.s32.totalorder %s14, 0
    %p49 = por %p47, %p48
    %p50 = scmp.ne.s32.totalorder %s36, %s37
    %p51 = scmp.eq.s32.totalorder %s15, 1
    %p52 = por %p50, %p51
    %p54 = scmp.ne.s32.totalorder %s37, %s53
    %p55 = scmp.eq.s32.totalorder %s15, 0
    %p56 = por %p54, %p55
    %s57 = ssub.s32 %s17, %s24
    %p58 = scmp.eq.s32.totalorder %s57, 0
    %s60 = sadd.s32 %s59, 1
    %s61 = scalar_select %p58, %s59, %s60
    %p64 = pneg %p58
    %p65 = scmp.eq.s32.totalorder %s9, 1
    %p66 = por %p64, %p65
    %p67 = scmp.ne.s32.totalorder %s59, %s62
    %p68 = scmp.eq.s32.totalorder %s9, 0
    %p69 = por %p67, %p68
    %p70 = scmp.ne.s32.totalorder %s59, %s62
    %p71 = scmp.eq.s32.totalorder %s14, 1
    %p72 = por %p70, %p71
    %p73 = scmp.ne.s32.totalorder %s62, %s63
    %p74 = scmp.eq.s32.totalorder %s14, 0
    %p75 = por %p73, %p74
    %p76 = scmp.ne.s32.totalorder %s62, %s63
    %p77 = scmp.eq.s32.totalorder %s15, 1
    %p78 = por %p76, %p77
    %p80 = scmp.ne.s32.totalorder %s63, %s79
    %p81 = scmp.eq.s32.totalorder %s15, 0
    %p82 = por %p80, %p81
    %s83 = ssub.s32 %s16, %s28
    %p84 = scmp.eq.s32.totalorder %s83, 0
    %s86 = sadd.s32 %s85, 1
    %s87 = scalar_select %p84, %s85, %s86
    %p90 = pneg %p84
    %p91 = scmp.eq.s32.totalorder %s9, 1
    %p92 = por %p90, %p91
    %p93 = scmp.ne.s32.totalorder %s85, %s88
    %p94 = scmp.eq.s32.totalorder %s9, 0
    %p95 = por %p93, %p94
    %p96 = scmp.ne.s32.totalorder %s85, %s88
    %p97 = scmp.eq.s32.totalorder %s14, 1
    %p98 = por %p96, %p97
    %p99 = scmp.ne.s32.totalorder %s88, %s89
    %p100 = scmp.eq.s32.totalorder %s14, 0
    %p101 = por %p99, %p100
    %p102 = scmp.ne.s32.totalorder %s88, %s89
    %p103 = scmp.eq.s32.totalorder %s15, 1
    %p104 = por %p102, %p103
    %p106 = scmp.ne.s32.totalorder %s89, %s105
    %p107 = scmp.eq.s32.totalorder %s15, 0
    %p108 = por %p106, %p107
    %s109 = ssub.s32 %s16, %s28
    %p110 = scmp.eq.s32.totalorder %s109, 0
    %s112 = sadd.s32 %s111, 1
    %s113 = scalar_select %p110, %s111, %s112
    %p116 = pneg %p110
    %p117 = scmp.eq.s32.totalorder %s9, 1
    %p118 = por %p116, %p117
    %p119 = scmp.ne.s32.totalorder %s111, %s114
    %p120 = scmp.eq.s32.totalorder %s9, 0
    %p121 = por %p119, %p120
    %p122 = scmp.ne.s32.totalorder %s111, %s114
    %p123 = scmp.eq.s32.totalorder %s14, 1
    %p124 = por %p122, %p123
    %p125 = scmp.ne.s32.totalorder %s114, %s115
    %p126 = scmp.eq.s32.totalorder %s14, 0
    %p127 = por %p125, %p126
    %p128 = scmp.ne.s32.totalorder %s114, %s115
    %p129 = scmp.eq.s32.totalorder %s15, 1
    %p130 = por %p128, %p129
    %p132 = scmp.ne.s32.totalorder %s115, %s131
    %p133 = scmp.eq.s32.totalorder %s15, 0
    %p134 = por %p132, %p133
    %p135 = scmp.le.s32.totalorder 1, %s9
    %p136 = scmp.lt.s32.totalorder %s9, 3
    %p137 = pnand %p135, %p136
    %p138 = pneg %p137
    // Predicated region
    $region9: #{graphsage_forward.5} parent=5 // pred_check
      _
    $region10: #{graphsage_forward.5} parent=5 // pred_check_branch
      %140 = sbr.rel (%p137) target = $region12
    $region11: #{graphsage_forward.5} parent=5 // pred_region
      %s141 = ssub.s32 %s9, 1
      // Predicated region
      $region13: #{graphsage_forward.5} parent=11 // pred_check
        %p142 = pneg %p75
      $region14: #{graphsage_forward.5} parent=11 // pred_check_branch
        %144 = sbr.rel (%p142) target = $region16
      $region15: #{graphsage_forward.5} parent=11 // pred_region
        %s145 = smul.u32 32, %s19
        %p146 = scmp.lt.s32.totalorder %s145, 31
        %s147 = scalar_select %p146, %s145, 31
        %s148 = smul.addr %s147, 4
        %s149 = scalar_lea.vmem %s1, %s148
        %s150 = smul.u32 32, %s19
      $region16: #{graphsage_forward.5} parent=11 // pred_fallthru
        _
    $region12: #{graphsage_forward.5} parent=5 // pred_fallthru
      _
    %p151 = scmp.lt.s32.totalorder %s9, 2
    // Predicated region
    $region17: #{graphsage_forward.5} parent=5 // pred_check
      %p152 = pneg %p151
    $region18: #{graphsage_forward.5} parent=5 // pred_check_branch
      %154 = sbr.rel (%p152) target = $region20
    $region19: #{graphsage_forward.5} parent=5 // pred_region
      // Predicated region
      $region21: #{graphsage_forward.5} parent=19 // pred_check
        %p155 = pneg %p43
      $region22: #{graphsage_forward.5} parent=19 // pred_check_branch
        %157 = sbr.rel (%p155) target = $region24
      $region23: #{graphsage_forward.5} parent=19 // pred_region
        %s158 = smul.u32 16, %s16
        %s159 = smul.u32 2, %s17
        %p160 = scmp.lt.s32.totalorder %s158, 31
        %s161 = scalar_select %p160, %s158, 31
        %p162 = scmp.lt.s32.totalorder %s159, 1
        %s163 = scalar_select %p162, %s159, 1
        %s164 = smul.addr %s161, 2
        %s165 = sadd.s32 %s163, %s164
        %s166 = smul.addr %s165, 4
        %s167 = scalar_lea.vmem %s0, %s166
        %s168 = smul.u32 16, %s16
        %s169 = smul.u32 2, %s17
      $region24: #{graphsage_forward.5} parent=19 // pred_fallthru
        _
      // Predicated region
      $region25: #{graphsage_forward.5} parent=19 // pred_check
        %p170 = pneg %p95
      $region26: #{graphsage_forward.5} parent=19 // pred_check_branch
        %172 = sbr.rel (%p170) target = $region28
      $region27: #{graphsage_forward.5} parent=19 // pred_region
        %s173 = smul.u32 16, %s16
        %p174 = scmp.lt.s32.totalorder %s173, 31
        %s175 = scalar_select %p174, %s173, 31
        %s176 = smul.addr %s175, 4
        %s177 = scalar_lea.vmem %s2, %s176
        %s178 = smul.u32 16, %s16
      $region28: #{graphsage_forward.5} parent=19 // pred_fallthru
        _
    $region20: #{graphsage_forward.5} parent=5 // pred_fallthru
      _
    %p179 = scmp.le.s32.totalorder 1, %s9
    %p180 = scmp.lt.s32.totalorder %s9, 3
    %p181 = pnand %p179, %p180
    %p182 = pneg %p181
    // Predicated region
    $region29: #{graphsage_forward.5} parent=5 // pred_check
      _
    $region30: #{graphsage_forward.5} parent=5 // pred_check_branch
      %184 = sbr.rel (%p181) target = $region32
    $region31: #{graphsage_forward.5} parent=5 // pred_region
      %s185 = ssub.s32 %s9, 1
      %s186 = smul.u32 16, %s18
      %s187 = smul.u32 2, %s19
      %p188 = scmp.lt.s32.totalorder %s186, 31
      %s189 = scalar_select %p188, %s186, 31
      %p190 = scmp.lt.s32.totalorder %s187, 1
      %s191 = scalar_select %p190, %s187, 1
      %s192 = smul.addr %s189, 2
      %s193 = sadd.s32 %s191, %s192
      %s194 = smul.addr %s193, 4
      %s195 = scalar_lea.vmem %s0, %s194
      %p196 = pneg %p49
      %p197 = pneg %p46
      %s198 = smul.u32 32, %s19
      %p199 = scmp.lt.s32.totalorder %s198, 31
      %s200 = scalar_select %p199, %s198, 31
      %s201 = smul.addr %s200, 4
      %s202 = scalar_lea.vmem %s1, %s201
      %p203 = pneg %p75
      %p204 = pneg %p72
      %s205 = smul.u32 16, %s18
      %p206 = scmp.lt.s32.totalorder %s205, 31
      %s207 = scalar_select %p206, %s205, 31
      %s208 = smul.addr %s207, 4
      %s209 = scalar_lea.vmem %s2, %s208
      %p210 = pneg %p101
      %p211 = pneg %p98
      %p212 = pneg %p127
      %p213 = pneg %p124
      %s214 = smul.u32 16, %s18
      %p215 = scmp.lt.s32.totalorder %s214, 31
      %s216 = scalar_select %p215, %s214, 31
      %s217 = smul.addr %s216, 8
      %s218 = scalar_lea.vmem %s3, %s217
      %s219 = smul.u32 16, %s18
      %s220 = smul.u32 2, %s19
      %p221 = scmp.lt.s32.totalorder %s219, 31
      %s222 = scalar_select %p221, %s219, 31
      %p223 = scmp.lt.s32.totalorder %s220, 1
      %s224 = scalar_select %p223, %s220, 1
      %s225 = smul.addr %s222, 2
      %s226 = sadd.s32 %s224, %s225
      %s227 = smul.addr %s226, 4
      %s228 = scalar_lea.vmem %s0, %s227
      %s229 = smul.u32 16, %s18
      %s230 = smul.u32 2, %s19
      %s231 = smul.u32 32, %s19
      %p232 = scmp.lt.s32.totalorder %s231, 31
      %s233 = scalar_select %p232, %s231, 31
      %s234 = smul.addr %s233, 4
      %s235 = scalar_lea.vmem %s1, %s234
      %s236 = smul.u32 32, %s19
      %s237 = smul.u32 16, %s18
      %p238 = scmp.lt.s32.totalorder %s237, 31
      %s239 = scalar_select %p238, %s237, 31
      %s240 = smul.addr %s239, 4
      %s241 = scalar_lea.vmem %s2, %s240
      %s242 = smul.u32 16, %s18
      %s243 = smul.u32 16, %s18
      %p244 = scmp.lt.s32.totalorder %s243, 31
      %s245 = scalar_select %p244, %s243, 31
      %s246 = smul.addr %s245, 8
      %s247 = scalar_lea.vmem %s3, %s246
      %s248 = smul.u32 16, %s18
      %p249 = scmp.eq.s32.totalorder %s19, 0
      // Predicated region
      $region33: #{graphsage_forward.5} parent=31 // pred_check
        %p250 = pneg %p249
      $region34: #{graphsage_forward.5} parent=31 // pred_check_branch
        %252 = sbr.rel (%p250) target = $region36
      $region35: #{graphsage_forward.5} parent=31 // pred_region
        %253 = vst [vmem:[%s247] sm:$0xff] 0.0
        %254 = vst [vmem:[%s247 + $0x8] sm:$0xff] 0.0
        %255 = vst [vmem:[%s247 + $0x10] sm:$0xff] 0.0
        %256 = vst [vmem:[%s247 + $0x18] sm:$0xff] 0.0
        %257 = vst [vmem:[%s247 + $0x20] sm:$0xff] 0.0
        %258 = vst [vmem:[%s247 + $0x28] sm:$0xff] 0.0
        %259 = vst [vmem:[%s247 + $0x30] sm:$0xff] 0.0
        %260 = vst [vmem:[%s247 + $0x38] sm:$0xff] 0.0
        %261 = vst [vmem:[%s247 + $0x40] sm:$0xff] 0.0
        %262 = vst [vmem:[%s247 + $0x48] sm:$0xff] 0.0
        %263 = vst [vmem:[%s247 + $0x50] sm:$0xff] 0.0
        %264 = vst [vmem:[%s247 + $0x58] sm:$0xff] 0.0
        %265 = vst [vmem:[%s247 + $0x60] sm:$0xff] 0.0
        %266 = vst [vmem:[%s247 + $0x68] sm:$0xff] 0.0
        %267 = vst [vmem:[%s247 + $0x70] sm:$0xff] 0.0
        %268 = vst [vmem:[%s247 + $0x78] sm:$0xff] 0.0
      $region36: #{graphsage_forward.5} parent=31 // pred_fallthru
        _
      %v269 = vld [vmem:[%s247] sm:$0xff]
      %v270 = vld [vmem:[%s247 + $0x8] sm:$0xff]
      %v271 = vld [vmem:[%s247 + $0x10] sm:$0xff]
      %v272 = vld [vmem:[%s247 + $0x18] sm:$0xff]
      %v273 = vld [vmem:[%s247 + $0x20] sm:$0xff]
      %v274 = vld [vmem:[%s247 + $0x28] sm:$0xff]
      %v275 = vld [vmem:[%s247 + $0x30] sm:$0xff]
      %v276 = vld [vmem:[%s247 + $0x38] sm:$0xff]
      %v277 = vld [vmem:[%s247 + $0x40] sm:$0xff]
      %v278 = vld [vmem:[%s247 + $0x48] sm:$0xff]
      %v279 = vld [vmem:[%s247 + $0x50] sm:$0xff]
      %v280 = vld [vmem:[%s247 + $0x58] sm:$0xff]
      %v281 = vld [vmem:[%s247 + $0x60] sm:$0xff]
      %v282 = vld [vmem:[%s247 + $0x68] sm:$0xff]
      %v283 = vld [vmem:[%s247 + $0x70] sm:$0xff]
      %v284 = vld [vmem:[%s247 + $0x78] sm:$0xff]
      %v285 = vld [vmem:[%s228] sm:$0xff]
      %v286 = vld [vmem:[%s228 + $0x8] sm:$0xff]
      %v287 = vld [vmem:[%s228 + $0x10] sm:$0xff]
      %v288 = vld [vmem:[%s228 + $0x18] sm:$0xff]
      %v289 = vld [vmem:[%s228 + $0x20] sm:$0xff]
      %v290 = vld [vmem:[%s228 + $0x28] sm:$0xff]
      %v291 = vld [vmem:[%s228 + $0x30] sm:$0xff]
      %v292 = vld [vmem:[%s228 + $0x38] sm:$0xff]
      %v293 = vld [vmem:[%s228 + $0x40] sm:$0xff]
      %v294 = vld [vmem:[%s228 + $0x48] sm:$0xff]
      %v295 = vld [vmem:[%s228 + $0x50] sm:$0xff]
      %v296 = vld [vmem:[%s228 + $0x58] sm:$0xff]
      %v297 = vld [vmem:[%s228 + $0x60] sm:$0xff]
      %v298 = vld [vmem:[%s228 + $0x68] sm:$0xff]
      %v299 = vld [vmem:[%s228 + $0x70] sm:$0xff]
      %v300 = vld [vmem:[%s228 + $0x78] sm:$0xff]
      %v301 = vld [vmem:[%s235] sm:$0xf]
      %v302 = vld [vmem:[%s235 + $0x4] sm:$0xf]
      %v303 = vld [vmem:[%s235 + $0x8] sm:$0xf]
      %v304 = vld [vmem:[%s235 + $0xc] sm:$0xf]
      %v305 = vld [vmem:[%s235 + $0x10] sm:$0xf]
      %v306 = vld [vmem:[%s235 + $0x14] sm:$0xf]
      %v307 = vld [vmem:[%s235 + $0x18] sm:$0xf]
      %v308 = vld [vmem:[%s235 + $0x1c] sm:$0xf]
      %v309 = vld [vmem:[%s235 + $0x20] sm:$0xf]
      %v310 = vld [vmem:[%s235 + $0x24] sm:$0xf]
      %v311 = vld [vmem:[%s235 + $0x28] sm:$0xf]
      %v312 = vld [vmem:[%s235 + $0x2c] sm:$0xf]
      %v313 = vld [vmem:[%s235 + $0x30] sm:$0xf]
      %v314 = vld [vmem:[%s235 + $0x34] sm:$0xf]
      %v315 = vld [vmem:[%s235 + $0x38] sm:$0xf]
      %v316 = vld [vmem:[%s235 + $0x3c] sm:$0xf]
      %v317 = vld [vmem:[%s235 + $0x40] sm:$0xf]
      %v318 = vld [vmem:[%s235 + $0x44] sm:$0xf]
      %v319 = vld [vmem:[%s235 + $0x48] sm:$0xf]
      %v320 = vld [vmem:[%s235 + $0x4c] sm:$0xf]
      %v321 = vld [vmem:[%s235 + $0x50] sm:$0xf]
      %v322 = vld [vmem:[%s235 + $0x54] sm:$0xf]
      %v323 = vld [vmem:[%s235 + $0x58] sm:$0xf]
      %v324 = vld [vmem:[%s235 + $0x5c] sm:$0xf]
      %v325 = vld [vmem:[%s235 + $0x60] sm:$0xf]
      %v326 = vld [vmem:[%s235 + $0x64] sm:$0xf]
      %v327 = vld [vmem:[%s235 + $0x68] sm:$0xf]
      %v328 = vld [vmem:[%s235 + $0x6c] sm:$0xf]
      %v329 = vld [vmem:[%s235 + $0x70] sm:$0xf]
      %v330 = vld [vmem:[%s235 + $0x74] sm:$0xf]
      %v331 = vld [vmem:[%s235 + $0x78] sm:$0xf]
      %v332 = vld [vmem:[%s235 + $0x7c] sm:$0xf]
      %v349 = vunpack.c.l.b16 %v285
      %v350 = vunpack.c.h.b16 %v285
      %v351 = vunpack.c.l.b16 %v286
      %v352 = vunpack.c.h.b16 %v286
      %v353 = vunpack.c.l.b16 %v287
      %v354 = vunpack.c.h.b16 %v287
      %v355 = vunpack.c.l.b16 %v288
      %v356 = vunpack.c.h.b16 %v288
      %v357 = vunpack.c.l.b16 %v289
      %v358 = vunpack.c.h.b16 %v289
      %v359 = vunpack.c.l.b16 %v290
      %v360 = vunpack.c.h.b16 %v290
      %v361 = vunpack.c.l.b16 %v291
      %v362 = vunpack.c.h.b16 %v291
      %v363 = vunpack.c.l.b16 %v292
      %v364 = vunpack.c.h.b16 %v292
      %v365 = vunpack.c.l.b16 %v293
      %v366 = vunpack.c.h.b16 %v293
      %v367 = vunpack.c.l.b16 %v294
      %v368 = vunpack.c.h.b16 %v294
      %v369 = vunpack.c.l.b16 %v295
      %v370 = vunpack.c.h.b16 %v295
      %v371 = vunpack.c.l.b16 %v296
      %v372 = vunpack.c.h.b16 %v296
      %v373 = vunpack.c.l.b16 %v297
      %v374 = vunpack.c.h.b16 %v297
      %v375 = vunpack.c.l.b16 %v298
      %v376 = vunpack.c.h.b16 %v298
      %v377 = vunpack.c.l.b16 %v299
      %v378 = vunpack.c.h.b16 %v299
      %v379 = vunpack.c.l.b16 %v300
      %v380 = vunpack.c.h.b16 %v300
      %v381 = vpack.c.b16 %v351, %v349
      %v382 = vpack.c.b16 %v352, %v350
      %v383 = vpack.c.b16 %v355, %v353
      %v384 = vpack.c.b16 %v356, %v354
      %v385 = vpack.c.b16 %v359, %v357
      %v386 = vpack.c.b16 %v360, %v358
      %v387 = vpack.c.b16 %v363, %v361
      %v388 = vpack.c.b16 %v364, %v362
      %v389 = vpack.c.b16 %v367, %v365
      %v390 = vpack.c.b16 %v368, %v366
      %v391 = vpack.c.b16 %v371, %v369
      %v392 = vpack.c.b16 %v372, %v370
      %v393 = vpack.c.b16 %v375, %v373
      %v394 = vpack.c.b16 %v376, %v374
      %v395 = vpack.c.b16 %v379, %v377
      %v396 = vpack.c.b16 %v380, %v378
      %v445 = vunpack.c.l.b16 %v301
      %v446 = vunpack.c.l.b16 %v302
      %v447 = vunpack.c.l.b16 %v303
      %v448 = vunpack.c.l.b16 %v304
      %v449 = vunpack.c.l.b16 %v305
      %v450 = vunpack.c.l.b16 %v306
      %v451 = vunpack.c.l.b16 %v307
      %v452 = vunpack.c.l.b16 %v308
      %v453 = vunpack.c.l.b16 %v309
      %v454 = vunpack.c.l.b16 %v310
      %v455 = vunpack.c.l.b16 %v311
      %v456 = vunpack.c.l.b16 %v312
      %v457 = vunpack.c.l.b16 %v313
      %v458 = vunpack.c.l.b16 %v314
      %v459 = vunpack.c.l.b16 %v315
      %v460 = vunpack.c.l.b16 %v316
      %v461 = vunpack.c.l.b16 %v317
      %v462 = vunpack.c.l.b16 %v318
      %v463 = vunpack.c.l.b16 %v319
      %v464 = vunpack.c.l.b16 %v320
      %v465 = vunpack.c.l.b16 %v321
      %v466 = vunpack.c.l.b16 %v322
      %v467 = vunpack.c.l.b16 %v323
      %v468 = vunpack.c.l.b16 %v324
      %v469 = vunpack.c.l.b16 %v325
      %v470 = vunpack.c.l.b16 %v326
      %v471 = vunpack.c.l.b16 %v327
      %v472 = vunpack.c.l.b16 %v328
      %v473 = vunpack.c.l.b16 %v329
      %v474 = vunpack.c.l.b16 %v330
      %v475 = vunpack.c.l.b16 %v331
      %v476 = vunpack.c.l.b16 %v332
      %v477 = vpack.c.b16 %v446, %v445
      %v478 = vpack.c.b16 %v448, %v447
      %v479 = vpack.c.b16 %v450, %v449
      %v480 = vpack.c.b16 %v452, %v451
      %v481 = vpack.c.b16 %v454, %v453
      %v482 = vpack.c.b16 %v456, %v455
      %v483 = vpack.c.b16 %v458, %v457
      %v484 = vpack.c.b16 %v460, %v459
      %v485 = vpack.c.b16 %v462, %v461
      %v486 = vpack.c.b16 %v464, %v463
      %v487 = vpack.c.b16 %v466, %v465
      %v488 = vpack.c.b16 %v468, %v467
      %v489 = vpack.c.b16 %v470, %v469
      %v490 = vpack.c.b16 %v472, %v471
      %v491 = vpack.c.b16 %v474, %v473
      %v492 = vpack.c.b16 %v476, %v475
      %509 = vmatpush.bf16.msra.mxu0 %v484
      %510 = vmatpush.bf16.msra.mxu0 %v483
      %511 = vmatpush.bf16.msra.mxu0 %v482
      %512 = vmatpush.bf16.msra.mxu0 %v481
      %513 = vmatpush.bf16.msra.mxu0 %v480
      %514 = vmatpush.bf16.msra.mxu0 %v479
      %515 = vmatpush.bf16.msra.mxu0 %v478
      %516 = vmatpush.bf16.msra.mxu0 %v477
      %517 = vmatmul.bf16.gmra.mxu0 %v381
      %v518 = vpop.f32.mrf.mxu0
      %v519 = vadd.f32 0.0, %v518
      %v520 = vpop.f32.mrf.mxu0
      %v521 = vadd.f32 0.0, %v520
      %522 = vmatmul.bf16.gmra.mxu0 %v383
      %v523 = vpop.f32.mrf.mxu0
      %v524 = vadd.f32 0.0, %v523
      %v525 = vpop.f32.mrf.mxu0
      %v526 = vadd.f32 0.0, %v525
      %527 = vmatmul.bf16.gmra.mxu0 %v385
      %v528 = vpop.f32.mrf.mxu0
      %v529 = vadd.f32 0.0, %v528
      %v530 = vpop.f32.mrf.mxu0
      %v531 = vadd.f32 0.0, %v530
      %532 = vmatmul.bf16.gmra.mxu0 %v387
      %v533 = vpop.f32.mrf.mxu0
      %v534 = vadd.f32 0.0, %v533
      %v535 = vpop.f32.mrf.mxu0
      %v536 = vadd.f32 0.0, %v535
      %537 = vmatmul.bf16.gmra.mxu0 %v389
      %v538 = vpop.f32.mrf.mxu0
      %v539 = vadd.f32 0.0, %v538
      %v540 = vpop.f32.mrf.mxu0
      %v541 = vadd.f32 0.0, %v540
      %542 = vmatmul.bf16.gmra.mxu0 %v391
      %v543 = vpop.f32.mrf.mxu0
      %v544 = vadd.f32 0.0, %v543
      %v545 = vpop.f32.mrf.mxu0
      %v546 = vadd.f32 0.0, %v545
      %547 = vmatmul.bf16.gmra.mxu0 %v393
      %v548 = vpop.f32.mrf.mxu0
      %v549 = vadd.f32 0.0, %v548
      %v550 = vpop.f32.mrf.mxu0
      %v551 = vadd.f32 0.0, %v550
      %552 = vmatmul.bf16.gmra.mxu0 %v395
      %v553 = vpop.f32.mrf.mxu0
      %v554 = vadd.f32 0.0, %v553
      %v555 = vpop.f32.mrf.mxu0
      %v556 = vadd.f32 0.0, %v555
      %557 = vdwg.mxu0
      %558 = vmatpush.bf16.msra.mxu0 %v492
      %559 = vmatpush.bf16.msra.mxu0 %v491
      %560 = vmatpush.bf16.msra.mxu0 %v490
      %561 = vmatpush.bf16.msra.mxu0 %v489
      %562 = vmatpush.bf16.msra.mxu0 %v488
      %563 = vmatpush.bf16.msra.mxu0 %v487
      %564 = vmatpush.bf16.msra.mxu0 %v486
      %565 = vmatpush.bf16.msra.mxu0 %v485
      %566 = vmatmul.bf16.gmra.mxu0 %v382
      %v567 = vpop.f32.mrf.mxu0
      %v568 = vadd.f32 %v519, %v567
      %v569 = vpop.f32.mrf.mxu0
      %v570 = vadd.f32 %v521, %v569
      %571 = vmatmul.bf16.gmra.mxu0 %v384
      %v572 = vpop.f32.mrf.mxu0
      %v573 = vadd.f32 %v524, %v572
      %v574 = vpop.f32.mrf.mxu0
      %v575 = vadd.f32 %v526, %v574
      %576 = vmatmul.bf16.gmra.mxu0 %v386
      %v577 = vpop.f32.mrf.mxu0
      %v578 = vadd.f32 %v529, %v577
      %v579 = vpop.f32.mrf.mxu0
      %v580 = vadd.f32 %v531, %v579
      %581 = vmatmul.bf16.gmra.mxu0 %v388
      %v582 = vpop.f32.mrf.mxu0
      %v583 = vadd.f32 %v534, %v582
      %v584 = vpop.f32.mrf.mxu0
      %v585 = vadd.f32 %v536, %v584
      %586 = vmatmul.bf16.gmra.mxu0 %v390
      %v587 = vpop.f32.mrf.mxu0
      %v588 = vadd.f32 %v539, %v587
      %v589 = vpop.f32.mrf.mxu0
      %v590 = vadd.f32 %v541, %v589
      %591 = vmatmul.bf16.gmra.mxu0 %v392
      %v592 = vpop.f32.mrf.mxu0
      %v593 = vadd.f32 %v544, %v592
      %v594 = vpop.f32.mrf.mxu0
      %v595 = vadd.f32 %v546, %v594
      %596 = vmatmul.bf16.gmra.mxu0 %v394
      %v597 = vpop.f32.mrf.mxu0
      %v598 = vadd.f32 %v549, %v597
      %v599 = vpop.f32.mrf.mxu0
      %v600 = vadd.f32 %v551, %v599
      %601 = vmatmul.bf16.gmra.mxu0 %v396
      %v602 = vpop.f32.mrf.mxu0
      %v603 = vadd.f32 %v554, %v602
      %v604 = vpop.f32.mrf.mxu0
      %v605 = vadd.f32 %v556, %v604
      %606 = vdwg.mxu0
      %v607 = vadd.f32 %v269, %v568
      %v608 = vadd.f32 %v270, %v570
      %v609 = vadd.f32 %v271, %v573
      %v610 = vadd.f32 %v272, %v575
      %v611 = vadd.f32 %v273, %v578
      %v612 = vadd.f32 %v274, %v580
      %v613 = vadd.f32 %v275, %v583
      %v614 = vadd.f32 %v276, %v585
      %v615 = vadd.f32 %v277, %v588
      %v616 = vadd.f32 %v278, %v590
      %v617 = vadd.f32 %v279, %v593
      %v618 = vadd.f32 %v280, %v595
      %v619 = vadd.f32 %v281, %v598
      %v620 = vadd.f32 %v282, %v600
      %v621 = vadd.f32 %v283, %v603
      %v622 = vadd.f32 %v284, %v605
      %623 = vst [vmem:[%s247] sm:$0xff] %v607
      %624 = vst [vmem:[%s247 + $0x8] sm:$0xff] %v608
      %625 = vst [vmem:[%s247 + $0x10] sm:$0xff] %v609
      %626 = vst [vmem:[%s247 + $0x18] sm:$0xff] %v610
      %627 = vst [vmem:[%s247 + $0x20] sm:$0xff] %v611
      %628 = vst [vmem:[%s247 + $0x28] sm:$0xff] %v612
      %629 = vst [vmem:[%s247 + $0x30] sm:$0xff] %v613
      %630 = vst [vmem:[%s247 + $0x38] sm:$0xff] %v614
      %631 = vst [vmem:[%s247 + $0x40] sm:$0xff] %v615
      %632 = vst [vmem:[%s247 + $0x48] sm:$0xff] %v616
      %633 = vst [vmem:[%s247 + $0x50] sm:$0xff] %v617
      %634 = vst [vmem:[%s247 + $0x58] sm:$0xff] %v618
      %635 = vst [vmem:[%s247 + $0x60] sm:$0xff] %v619
      %636 = vst [vmem:[%s247 + $0x68] sm:$0xff] %v620
      %637 = vst [vmem:[%s247 + $0x70] sm:$0xff] %v621
      %638 = vst [vmem:[%s247 + $0x78] sm:$0xff] %v622
      // Predicated region
      $region37: #{graphsage_forward.5} parent=31 // pred_check
        %p639 = pneg %p249
      $region38: #{graphsage_forward.5} parent=31 // pred_check_branch
        %641 = sbr.rel (%p639) target = $region40
      $region39: #{graphsage_forward.5} parent=31 // pred_region
        %v642 = vld [vmem:[%s247] sm:$0xff]
        %v643 = vld [vmem:[%s247 + $0x8] sm:$0xff]
        %v644 = vld [vmem:[%s247 + $0x10] sm:$0xff]
        %v645 = vld [vmem:[%s247 + $0x18] sm:$0xff]
        %v646 = vld [vmem:[%s247 + $0x20] sm:$0xff]
        %v647 = vld [vmem:[%s247 + $0x28] sm:$0xff]
        %v648 = vld [vmem:[%s247 + $0x30] sm:$0xff]
        %v649 = vld [vmem:[%s247 + $0x38] sm:$0xff]
        %v650 = vld [vmem:[%s247 + $0x40] sm:$0xff]
        %v651 = vld [vmem:[%s247 + $0x48] sm:$0xff]
        %v652 = vld [vmem:[%s247 + $0x50] sm:$0xff]
        %v653 = vld [vmem:[%s247 + $0x58] sm:$0xff]
        %v654 = vld [vmem:[%s247 + $0x60] sm:$0xff]
        %v655 = vld [vmem:[%s247 + $0x68] sm:$0xff]
        %v656 = vld [vmem:[%s247 + $0x70] sm:$0xff]
        %v657 = vld [vmem:[%s247 + $0x78] sm:$0xff]
        %vm658 = vcmp.gt.f32.partialorder %v642, 0.0
        %vm659 = vcmp.gt.f32.partialorder %v643, 0.0
        %vm660 = vcmp.gt.f32.partialorder %v644, 0.0
        %vm661 = vcmp.gt.f32.partialorder %v645, 0.0
        %vm662 = vcmp.gt.f32.partialorder %v646, 0.0
        %vm663 = vcmp.gt.f32.partialorder %v647, 0.0
        %vm664 = vcmp.gt.f32.partialorder %v648, 0.0
        %vm665 = vcmp.gt.f32.partialorder %v649, 0.0
        %vm666 = vcmp.gt.f32.partialorder %v650, 0.0
        %vm667 = vcmp.gt.f32.partialorder %v651, 0.0
        %vm668 = vcmp.gt.f32.partialorder %v652, 0.0
        %vm669 = vcmp.gt.f32.partialorder %v653, 0.0
        %vm670 = vcmp.gt.f32.partialorder %v654, 0.0
        %vm671 = vcmp.gt.f32.partialorder %v655, 0.0
        %vm672 = vcmp.gt.f32.partialorder %v656, 0.0
        %vm673 = vcmp.gt.f32.partialorder %v657, 0.0
        %v674 = vmax.f32 %v642, 1.0
        %v675 = vmax.f32 %v643, 1.0
        %v676 = vmax.f32 %v644, 1.0
        %v677 = vmax.f32 %v645, 1.0
        %v678 = vmax.f32 %v646, 1.0
        %v679 = vmax.f32 %v647, 1.0
        %v680 = vmax.f32 %v648, 1.0
        %v681 = vmax.f32 %v649, 1.0
        %v682 = vmax.f32 %v650, 1.0
        %v683 = vmax.f32 %v651, 1.0
        %v684 = vmax.f32 %v652, 1.0
        %v685 = vmax.f32 %v653, 1.0
        %v686 = vmax.f32 %v654, 1.0
        %v687 = vmax.f32 %v655, 1.0
        %v688 = vmax.f32 %v656, 1.0
        %v689 = vmax.f32 %v657, 1.0
        %v690 = vrcp.pop %v674
        %v691 = vmul.f32 %v674, %v690
        %v692 = vsub.f32 1.0, %v691
        %v693 = vmul.f32 %v690, %v692
        %v694 = vadd.f32 %v690, %v693
        %vm695 = vweird.f32 %v674
        %vm696 = vweird.f32 %v690
        %vm697 = vmor %vm695, %vm696
        %v698 = vsel %vm697, %v690, %v694
        %v699 = vand.u32 2147483647, %v674
        %vm700 = vcmp.eq.f32.partialorder %v699, 8.507059e+37
        %v701 = vand.u32 %v674, 2147483648
        %v702 = vor.u32 1.1754944e-38, %v701
        %v703 = vsel %vm700, %v702, %v698
        %v704 = vmul.f32 1.0, %v703
        %v705 = vrcp.pop %v675
        %v706 = vmul.f32 %v675, %v705
        %v707 = vsub.f32 1.0, %v706
        %v708 = vmul.f32 %v705, %v707
        %v709 = vadd.f32 %v705, %v708
        %vm710 = vweird.f32 %v675
        %vm711 = vweird.f32 %v705
        %vm712 = vmor %vm710, %vm711
        %v713 = vsel %vm712, %v705, %v709
        %v714 = vand.u32 2147483647, %v675
        %vm715 = vcmp.eq.f32.partialorder %v714, 8.507059e+37
        %v716 = vand.u32 %v675, 2147483648
        %v717 = vor.u32 1.1754944e-38, %v716
        %v718 = vsel %vm715, %v717, %v713
        %v719 = vmul.f32 1.0, %v718
        %v720 = vrcp.pop %v676
        %v721 = vmul.f32 %v676, %v720
        %v722 = vsub.f32 1.0, %v721
        %v723 = vmul.f32 %v720, %v722
        %v724 = vadd.f32 %v720, %v723
        %vm725 = vweird.f32 %v676
        %vm726 = vweird.f32 %v720
        %vm727 = vmor %vm725, %vm726
        %v728 = vsel %vm727, %v720, %v724
        %v729 = vand.u32 2147483647, %v676
        %vm730 = vcmp.eq.f32.partialorder %v729, 8.507059e+37
        %v731 = vand.u32 %v676, 2147483648
        %v732 = vor.u32 1.1754944e-38, %v731
        %v733 = vsel %vm730, %v732, %v728
        %v734 = vmul.f32 1.0, %v733
        %v735 = vrcp.pop %v677
        %v736 = vmul.f32 %v677, %v735
        %v737 = vsub.f32 1.0, %v736
        %v738 = vmul.f32 %v735, %v737
        %v739 = vadd.f32 %v735, %v738
        %vm740 = vweird.f32 %v677
        %vm741 = vweird.f32 %v735
        %vm742 = vmor %vm740, %vm741
        %v743 = vsel %vm742, %v735, %v739
        %v744 = vand.u32 2147483647, %v677
        %vm745 = vcmp.eq.f32.partialorder %v744, 8.507059e+37
        %v746 = vand.u32 %v677, 2147483648
        %v747 = vor.u32 1.1754944e-38, %v746
        %v748 = vsel %vm745, %v747, %v743
        %v749 = vmul.f32 1.0, %v748
        %v750 = vrcp.pop %v678
        %v751 = vmul.f32 %v678, %v750
        %v752 = vsub.f32 1.0, %v751
        %v753 = vmul.f32 %v750, %v752
        %v754 = vadd.f32 %v750, %v753
        %vm755 = vweird.f32 %v678
        %vm756 = vweird.f32 %v750
        %vm757 = vmor %vm755, %vm756
        %v758 = vsel %vm757, %v750, %v754
        %v759 = vand.u32 2147483647, %v678
        %vm760 = vcmp.eq.f32.partialorder %v759, 8.507059e+37
        %v761 = vand.u32 %v678, 2147483648
        %v762 = vor.u32 1.1754944e-38, %v761
        %v763 = vsel %vm760, %v762, %v758
        %v764 = vmul.f32 1.0, %v763
        %v765 = vrcp.pop %v679
        %v766 = vmul.f32 %v679, %v765
        %v767 = vsub.f32 1.0, %v766
        %v768 = vmul.f32 %v765, %v767
        %v769 = vadd.f32 %v765, %v768
        %vm770 = vweird.f32 %v679
        %vm771 = vweird.f32 %v765
        %vm772 = vmor %vm770, %vm771
        %v773 = vsel %vm772, %v765, %v769
        %v774 = vand.u32 2147483647, %v679
        %vm775 = vcmp.eq.f32.partialorder %v774, 8.507059e+37
        %v776 = vand.u32 %v679, 2147483648
        %v777 = vor.u32 1.1754944e-38, %v776
        %v778 = vsel %vm775, %v777, %v773
        %v779 = vmul.f32 1.0, %v778
        %v780 = vrcp.pop %v680
        %v781 = vmul.f32 %v680, %v780
        %v782 = vsub.f32 1.0, %v781
        %v783 = vmul.f32 %v780, %v782
        %v784 = vadd.f32 %v780, %v783
        %vm785 = vweird.f32 %v680
        %vm786 = vweird.f32 %v780
        %vm787 = vmor %vm785, %vm786
        %v788 = vsel %vm787, %v780, %v784
        %v789 = vand.u32 2147483647, %v680
        %vm790 = vcmp.eq.f32.partialorder %v789, 8.507059e+37
        %v791 = vand.u32 %v680, 2147483648
        %v792 = vor.u32 1.1754944e-38, %v791
        %v793 = vsel %vm790, %v792, %v788
        %v794 = vmul.f32 1.0, %v793
        %v795 = vrcp.pop %v681
        %v796 = vmul.f32 %v681, %v795
        %v797 = vsub.f32 1.0, %v796
        %v798 = vmul.f32 %v795, %v797
        %v799 = vadd.f32 %v795, %v798
        %vm800 = vweird.f32 %v681
        %vm801 = vweird.f32 %v795
        %vm802 = vmor %vm800, %vm801
        %v803 = vsel %vm802, %v795, %v799
        %v804 = vand.u32 2147483647, %v681
        %vm805 = vcmp.eq.f32.partialorder %v804, 8.507059e+37
        %v806 = vand.u32 %v681, 2147483648
        %v807 = vor.u32 1.1754944e-38, %v806
        %v808 = vsel %vm805, %v807, %v803
        %v809 = vmul.f32 1.0, %v808
        %v810 = vrcp.pop %v682
        %v811 = vmul.f32 %v682, %v810
        %v812 = vsub.f32 1.0, %v811
        %v813 = vmul.f32 %v810, %v812
        %v814 = vadd.f32 %v810, %v813
        %vm815 = vweird.f32 %v682
        %vm816 = vweird.f32 %v810
        %vm817 = vmor %vm815, %vm816
        %v818 = vsel %vm817, %v810, %v814
        %v819 = vand.u32 2147483647, %v682
        %vm820 = vcmp.eq.f32.partialorder %v819, 8.507059e+37
        %v821 = vand.u32 %v682, 2147483648
        %v822 = vor.u32 1.1754944e-38, %v821
        %v823 = vsel %vm820, %v822, %v818
        %v824 = vmul.f32 1.0, %v823
        %v825 = vrcp.pop %v683
        %v826 = vmul.f32 %v683, %v825
        %v827 = vsub.f32 1.0, %v826
        %v828 = vmul.f32 %v825, %v827
        %v829 = vadd.f32 %v825, %v828
        %vm830 = vweird.f32 %v683
        %vm831 = vweird.f32 %v825
        %vm832 = vmor %vm830, %vm831
        %v833 = vsel %vm832, %v825, %v829
        %v834 = vand.u32 2147483647, %v683
        %vm835 = vcmp.eq.f32.partialorder %v834, 8.507059e+37
        %v836 = vand.u32 %v683, 2147483648
        %v837 = vor.u32 1.1754944e-38, %v836
        %v838 = vsel %vm835, %v837, %v833
        %v839 = vmul.f32 1.0, %v838
        %v840 = vrcp.pop %v684
        %v841 = vmul.f32 %v684, %v840
        %v842 = vsub.f32 1.0, %v841
        %v843 = vmul.f32 %v840, %v842
        %v844 = vadd.f32 %v840, %v843
        %vm845 = vweird.f32 %v684
        %vm846 = vweird.f32 %v840
        %vm847 = vmor %vm845, %vm846
        %v848 = vsel %vm847, %v840, %v844
        %v849 = vand.u32 2147483647, %v684
        %vm850 = vcmp.eq.f32.partialorder %v849, 8.507059e+37
        %v851 = vand.u32 %v684, 2147483648
        %v852 = vor.u32 1.1754944e-38, %v851
        %v853 = vsel %vm850, %v852, %v848
        %v854 = vmul.f32 1.0, %v853
        %v855 = vrcp.pop %v685
        %v856 = vmul.f32 %v685, %v855
        %v857 = vsub.f32 1.0, %v856
        %v858 = vmul.f32 %v855, %v857
        %v859 = vadd.f32 %v855, %v858
        %vm860 = vweird.f32 %v685
        %vm861 = vweird.f32 %v855
        %vm862 = vmor %vm860, %vm861
        %v863 = vsel %vm862, %v855, %v859
        %v864 = vand.u32 2147483647, %v685
        %vm865 = vcmp.eq.f32.partialorder %v864, 8.507059e+37
        %v866 = vand.u32 %v685, 2147483648
        %v867 = vor.u32 1.1754944e-38, %v866
        %v868 = vsel %vm865, %v867, %v863
        %v869 = vmul.f32 1.0, %v868
        %v870 = vrcp.pop %v686
        %v871 = vmul.f32 %v686, %v870
        %v872 = vsub.f32 1.0, %v871
        %v873 = vmul.f32 %v870, %v872
        %v874 = vadd.f32 %v870, %v873
        %vm875 = vweird.f32 %v686
        %vm876 = vweird.f32 %v870
        %vm877 = vmor %vm875, %vm876
        %v878 = vsel %vm877, %v870, %v874
        %v879 = vand.u32 2147483647, %v686
        %vm880 = vcmp.eq.f32.partialorder %v879, 8.507059e+37
        %v881 = vand.u32 %v686, 2147483648
        %v882 = vor.u32 1.1754944e-38, %v881
        %v883 = vsel %vm880, %v882, %v878
        %v884 = vmul.f32 1.0, %v883
        %v885 = vrcp.pop %v687
        %v886 = vmul.f32 %v687, %v885
        %v887 = vsub.f32 1.0, %v886
        %v888 = vmul.f32 %v885, %v887
        %v889 = vadd.f32 %v885, %v888
        %vm890 = vweird.f32 %v687
        %vm891 = vweird.f32 %v885
        %vm892 = vmor %vm890, %vm891
        %v893 = vsel %vm892, %v885, %v889
        %v894 = vand.u32 2147483647, %v687
        %vm895 = vcmp.eq.f32.partialorder %v894, 8.507059e+37
        %v896 = vand.u32 %v687, 2147483648
        %v897 = vor.u32 1.1754944e-38, %v896
        %v898 = vsel %vm895, %v897, %v893
        %v899 = vmul.f32 1.0, %v898
        %v900 = vrcp.pop %v688
        %v901 = vmul.f32 %v688, %v900
        %v902 = vsub.f32 1.0, %v901
        %v903 = vmul.f32 %v900, %v902
        %v904 = vadd.f32 %v900, %v903
        %vm905 = vweird.f32 %v688
        %vm906 = vweird.f32 %v900
        %vm907 = vmor %vm905, %vm906
        %v908 = vsel %vm907, %v900, %v904
        %v909 = vand.u32 2147483647, %v688
        %vm910 = vcmp.eq.f32.partialorder %v909, 8.507059e+37
        %v911 = vand.u32 %v688, 2147483648
        %v912 = vor.u32 1.1754944e-38, %v911
        %v913 = vsel %vm910, %v912, %v908
        %v914 = vmul.f32 1.0, %v913
        %v915 = vrcp.pop %v689
        %v916 = vmul.f32 %v689, %v915
        %v917 = vsub.f32 1.0, %v916
        %v918 = vmul.f32 %v915, %v917
        %v919 = vadd.f32 %v915, %v918
        %vm920 = vweird.f32 %v689
        %vm921 = vweird.f32 %v915
        %vm922 = vmor %vm920, %vm921
        %v923 = vsel %vm922, %v915, %v919
        %v924 = vand.u32 2147483647, %v689
        %vm925 = vcmp.eq.f32.partialorder %v924, 8.507059e+37
        %v926 = vand.u32 %v689, 2147483648
        %v927 = vor.u32 1.1754944e-38, %v926
        %v928 = vsel %vm925, %v927, %v923
        %v929 = vmul.f32 1.0, %v928
        %v930 = vsel %vm658, %v704, 0.0
        %v931 = vsel %vm659, %v719, 0.0
        %v932 = vsel %vm660, %v734, 0.0
        %v933 = vsel %vm661, %v749, 0.0
        %v934 = vsel %vm662, %v764, 0.0
        %v935 = vsel %vm663, %v779, 0.0
        %v936 = vsel %vm664, %v794, 0.0
        %v937 = vsel %vm665, %v809, 0.0
        %v938 = vsel %vm666, %v824, 0.0
        %v939 = vsel %vm667, %v839, 0.0
        %v940 = vsel %vm668, %v854, 0.0
        %v941 = vsel %vm669, %v869, 0.0
        %v942 = vsel %vm670, %v884, 0.0
        %v943 = vsel %vm671, %v899, 0.0
        %v944 = vsel %vm672, %v914, 0.0
        %v945 = vsel %vm673, %v929, 0.0
        %947 = vset.pattern.permute.xlu0 32
        %948 = vperm.xlu0 %947, %v930
        %v949 = vpop.permute.xlu0 %948
        %952 = vset.pattern.permute.xlu0 32
        %953 = vperm.xlu0 %952, %v931
        %v954 = vpop.permute.xlu0 %953
        %957 = vset.pattern.permute.xlu0 32
        %958 = vperm.xlu0 %957, %v932
        %v959 = vpop.permute.xlu0 %958
        %962 = vset.pattern.permute.xlu0 32
        %963 = vperm.xlu0 %962, %v933
        %v964 = vpop.permute.xlu0 %963
        %967 = vset.pattern.permute.xlu0 32
        %968 = vperm.xlu0 %967, %v934
        %v969 = vpop.permute.xlu0 %968
        %972 = vset.pattern.permute.xlu0 32
        %973 = vperm.xlu0 %972, %v935
        %v974 = vpop.permute.xlu0 %973
        %977 = vset.pattern.permute.xlu0 32
        %978 = vperm.xlu0 %977, %v936
        %v979 = vpop.permute.xlu0 %978
        %982 = vset.pattern.permute.xlu0 32
        %983 = vperm.xlu0 %982, %v937
        %v984 = vpop.permute.xlu0 %983
        %987 = vset.pattern.permute.xlu0 32
        %988 = vperm.xlu0 %987, %v938
        %v989 = vpop.permute.xlu0 %988
        %992 = vset.pattern.permute.xlu0 32
        %993 = vperm.xlu0 %992, %v939
        %v994 = vpop.permute.xlu0 %993
        %997 = vset.pattern.permute.xlu0 32
        %998 = vperm.xlu0 %997, %v940
        %v999 = vpop.permute.xlu0 %998
        %1002 = vset.pattern.permute.xlu0 32
        %1003 = vperm.xlu0 %1002, %v941
        %v1004 = vpop.permute.xlu0 %1003
        %1007 = vset.pattern.permute.xlu0 32
        %1008 = vperm.xlu0 %1007, %v942
        %v1009 = vpop.permute.xlu0 %1008
        %1012 = vset.pattern.permute.xlu0 32
        %1013 = vperm.xlu0 %1012, %v943
        %v1014 = vpop.permute.xlu0 %1013
        %1017 = vset.pattern.permute.xlu0 32
        %1018 = vperm.xlu0 %1017, %v944
        %v1019 = vpop.permute.xlu0 %1018
        %1022 = vset.pattern.permute.xlu0 32
        %1023 = vperm.xlu0 %1022, %v945
        %v1024 = vpop.permute.xlu0 %1023
        %v1026 = vmul.f32 %v642, %v949
        %v1027 = vmul.f32 %v643, %v954
        %v1028 = vmul.f32 %v644, %v959
        %v1029 = vmul.f32 %v645, %v964
        %v1030 = vmul.f32 %v646, %v969
        %v1031 = vmul.f32 %v647, %v974
        %v1032 = vmul.f32 %v648, %v979
        %v1033 = vmul.f32 %v649, %v984
        %v1034 = vmul.f32 %v650, %v989
        %v1035 = vmul.f32 %v651, %v994
        %v1036 = vmul.f32 %v652, %v999
        %v1037 = vmul.f32 %v653, %v1004
        %v1038 = vmul.f32 %v654, %v1009
        %v1039 = vmul.f32 %v655, %v1014
        %v1040 = vmul.f32 %v656, %v1019
        %v1041 = vmul.f32 %v657, %v1024
        %v1042 = vld [vmem:[%s241] sm:$0xf]
        %v1043 = vld [vmem:[%s241 + $0x4] sm:$0xf]
        %v1044 = vld [vmem:[%s241 + $0x8] sm:$0xf]
        %v1045 = vld [vmem:[%s241 + $0xc] sm:$0xf]
        %v1046 = vld [vmem:[%s241 + $0x10] sm:$0xf]
        %v1047 = vld [vmem:[%s241 + $0x14] sm:$0xf]
        %v1048 = vld [vmem:[%s241 + $0x18] sm:$0xf]
        %v1049 = vld [vmem:[%s241 + $0x1c] sm:$0xf]
        %v1050 = vld [vmem:[%s241 + $0x20] sm:$0xf]
        %v1051 = vld [vmem:[%s241 + $0x24] sm:$0xf]
        %v1052 = vld [vmem:[%s241 + $0x28] sm:$0xf]
        %v1053 = vld [vmem:[%s241 + $0x2c] sm:$0xf]
        %v1054 = vld [vmem:[%s241 + $0x30] sm:$0xf]
        %v1055 = vld [vmem:[%s241 + $0x34] sm:$0xf]
        %v1056 = vld [vmem:[%s241 + $0x38] sm:$0xf]
        %v1057 = vld [vmem:[%s241 + $0x3c] sm:$0xf]
        %v1058 = vunpack.c.l.bf16 %v1042
        %v1059 = vunpack.c.l.bf16 %v1043
        %v1060 = vunpack.c.l.bf16 %v1044
        %v1061 = vunpack.c.l.bf16 %v1045
        %v1062 = vunpack.c.l.bf16 %v1046
        %v1063 = vunpack.c.l.bf16 %v1047
        %v1064 = vunpack.c.l.bf16 %v1048
        %v1065 = vunpack.c.l.bf16 %v1049
        %v1066 = vunpack.c.l.bf16 %v1050
        %v1067 = vunpack.c.l.bf16 %v1051
        %v1068 = vunpack.c.l.bf16 %v1052
        %v1069 = vunpack.c.l.bf16 %v1053
        %v1070 = vunpack.c.l.bf16 %v1054
        %v1071 = vunpack.c.l.bf16 %v1055
        %v1072 = vunpack.c.l.bf16 %v1056
        %v1073 = vunpack.c.l.bf16 %v1057
        %v1074 = vadd.f32 %v1026, %v1058
        %v1075 = vadd.f32 %v1027, %v1059
        %v1076 = vadd.f32 %v1028, %v1060
        %v1077 = vadd.f32 %v1029, %v1061
        %v1078 = vadd.f32 %v1030, %v1062
        %v1079 = vadd.f32 %v1031, %v1063
        %v1080 = vadd.f32 %v1032, %v1064
        %v1081 = vadd.f32 %v1033, %v1065
        %v1082 = vadd.f32 %v1034, %v1066
        %v1083 = vadd.f32 %v1035, %v1067
        %v1084 = vadd.f32 %v1036, %v1068
        %v1085 = vadd.f32 %v1037, %v1069
        %v1086 = vadd.f32 %v1038, %v1070
        %v1087 = vadd.f32 %v1039, %v1071
        %v1088 = vadd.f32 %v1040, %v1072
        %v1089 = vadd.f32 %v1041, %v1073
        %v1090 = vmax.f32 %v1074, 0.0
        %v1091 = vmax.f32 %v1075, 0.0
        %v1092 = vmax.f32 %v1076, 0.0
        %v1093 = vmax.f32 %v1077, 0.0
        %v1094 = vmax.f32 %v1078, 0.0
        %v1095 = vmax.f32 %v1079, 0.0
        %v1096 = vmax.f32 %v1080, 0.0
        %v1097 = vmax.f32 %v1081, 0.0
        %v1098 = vmax.f32 %v1082, 0.0
        %v1099 = vmax.f32 %v1083, 0.0
        %v1100 = vmax.f32 %v1084, 0.0
        %v1101 = vmax.f32 %v1085, 0.0
        %v1102 = vmax.f32 %v1086, 0.0
        %v1103 = vmax.f32 %v1087, 0.0
        %v1104 = vmax.f32 %v1088, 0.0
        %v1105 = vmax.f32 %v1089, 0.0
        %1106 = vst [vmem:[%s247] sm:$0xff] %v1090
        %1107 = vst [vmem:[%s247 + $0x8] sm:$0xff] %v1091
        %1108 = vst [vmem:[%s247 + $0x10] sm:$0xff] %v1092
        %1109 = vst [vmem:[%s247 + $0x18] sm:$0xff] %v1093
        %1110 = vst [vmem:[%s247 + $0x20] sm:$0xff] %v1094
        %1111 = vst [vmem:[%s247 + $0x28] sm:$0xff] %v1095
        %1112 = vst [vmem:[%s247 + $0x30] sm:$0xff] %v1096
        %1113 = vst [vmem:[%s247 + $0x38] sm:$0xff] %v1097
        %1114 = vst [vmem:[%s247 + $0x40] sm:$0xff] %v1098
        %1115 = vst [vmem:[%s247 + $0x48] sm:$0xff] %v1099
        %1116 = vst [vmem:[%s247 + $0x50] sm:$0xff] %v1100
        %1117 = vst [vmem:[%s247 + $0x58] sm:$0xff] %v1101
        %1118 = vst [vmem:[%s247 + $0x60] sm:$0xff] %v1102
        %1119 = vst [vmem:[%s247 + $0x68] sm:$0xff] %v1103
        %1120 = vst [vmem:[%s247 + $0x70] sm:$0xff] %v1104
        %1121 = vst [vmem:[%s247 + $0x78] sm:$0xff] %v1105
      $region40: #{graphsage_forward.5} parent=31 // pred_fallthru
        _
      %s1122 = smul.u32 16, %s18
      %p1123 = scmp.lt.s32.totalorder %s1122, 31
      %s1124 = scalar_select %p1123, %s1122, 31
      %s1125 = smul.addr %s1124, 8
      %s1126 = scalar_lea.vmem %s3, %s1125
      // Predicated region
      $region41: #{graphsage_forward.5} parent=31 // pred_check
        %p1127 = pneg %p124
      $region42: #{graphsage_forward.5} parent=31 // pred_check_branch
        %1129 = sbr.rel (%p1127) target = $region44
      $region43: #{graphsage_forward.5} parent=31 // pred_region
        %s1130 = smul.u32 16, %s18
      $region44: #{graphsage_forward.5} parent=31 // pred_fallthru
        _
    $region32: #{graphsage_forward.5} parent=5 // pred_fallthru
      _
    %p1131 = scmp.le.s32.totalorder 2, %s9
    // Predicated region
    $region45: #{graphsage_forward.5} parent=5 // pred_check
      %p1132 = pneg %p1131
    $region46: #{graphsage_forward.5} parent=5 // pred_check_branch
      %1134 = sbr.rel (%p1132) target = $region48
    $region47: #{graphsage_forward.5} parent=5 // pred_region
      %s1135 = ssub.s32 %s9, 2
      // Predicated region
      $region49: #{graphsage_forward.5} parent=47 // pred_check
        %p1136 = pneg %p130
      $region50: #{graphsage_forward.5} parent=47 // pred_check_branch
        %1138 = sbr.rel (%p1136) target = $region52
      $region51: #{graphsage_forward.5} parent=47 // pred_region
        %s1139 = smul.u32 16, %s20
        %p1140 = scmp.lt.s32.totalorder %s1139, 31
        %s1141 = scalar_select %p1140, %s1139, 31
        %s1142 = smul.addr %s1141, 8
        %s1143 = scalar_lea.vmem %s3, %s1142
      $region52: #{graphsage_forward.5} parent=47 // pred_fallthru
        _
    $region48: #{graphsage_forward.5} parent=5 // pred_fallthru
      _
  $region6: #{graphsage_forward.5} parent=0 // loop_footer
    %s13 = sadd.s32 1, %s9
  $region7: #{graphsage_forward.5} parent=0 // loop_footer_branch
    %8 = sbr.rel target = $region3
  $region8: #{graphsage_forward.5} parent=0 // loop_exit
    _

// kernel: graphsage_forward.7
$region0: #{graphsage_forward.7}
  #allocation0 [shape = 'u32[]', space=smem, size = 0x4, offset = 0x4, fixed_abs, tag = 'smem constant byte address 0x4 - core index']
  #allocation1 [shape = 'u32[72,128]{1,0:T(1,128)}', space=vmem, size = 0x9000, scoped, tag = 'internal scratch']
  %s0 = inlined_call_operand.vmem [shape: bf16[256,256], index: 0, kind: input, shape index: {}]
  %s1 = inlined_call_operand.vmem [shape: bf16[256,128], index: 1, kind: input, shape index: {}]
  %s2 = inlined_call_operand.vmem [shape: bf16[256,128], index: 2, kind: input, shape index: {}]
  %s3 = inlined_call_operand.vmem [shape: f32[256,128], index: 3, kind: output, shape index: {}]
  %s4 = sld [smem:[#allocation0]]
  $region53: #{graphsage_forward.7} parent=0
    _
  %s6 = ssub.s32 1, %s4
  %s7 = scalar_select 0, %s6, %s4
  loop: start=0, step=1, limit=4
  $region2: #{graphsage_forward.7} parent=0 // loop_pre_header
    _
  $region3: #{graphsage_forward.7} parent=0 // loop_header
    %s9 = sphi 0, %s13
    %p10 = scmp.ge.s32.totalorder %s9, 4
    %s16 = sphi 0, %s28
    %s17 = sphi 0, %s24
    %s18 = sphi 0, %s16
    %s19 = sphi 0, %s17
    %s20 = sphi 0, %s18
    %s21 = sphi 0, %s19
    %s33 = sphi 0, %s35
    %s36 = sphi 0, %s33
    %s37 = sphi 0, %s36
    %s53 = sphi 0, %s37
    %s59 = sphi 0, %s61
    %s62 = sphi 0, %s59
    %s63 = sphi 0, %s62
    %s79 = sphi 0, %s63
    %s85 = sphi 0, %s87
    %s88 = sphi 0, %s85
    %s89 = sphi 0, %s88
    %s105 = sphi 0, %s89
    %s111 = sphi 0, %s113
    %s114 = sphi 0, %s111
    %s115 = sphi 0, %s114
    %s131 = sphi 0, %s115
  $region4: #{graphsage_forward.7} parent=0 // loop_header_branch
    %12 = sbr.rel (%p10) target = $region8
  $region5: #{graphsage_forward.7} parent=0 // loop_body
    %s14 = ssub.s32 %s9, 1
    %s15 = ssub.s32 %s9, 2
    %s22 = sadd.s32 1, %s17
    %p23 = scmp.ge.s32.totalorder %s22, 1
    %s24 = scalar_select %p23, 0, %s22
    %s25 = sadd.s32 1, %s16
    %s26 = scalar_select %p23, %s25, %s16
    %p27 = scmp.ge.s32.totalorder %s26, 2
    %s28 = scalar_select %p27, 0, %s26
    %s29 = ssub.s32 %s16, %s28
    %s30 = ssub.s32 %s17, %s24
    %s31 = sor.u32 %s29, %s30
    %p32 = scmp.eq.s32.totalorder %s31, 0
    %s34 = sadd.s32 %s33, 1
    %s35 = scalar_select %p32, %s33, %s34
    %p38 = pneg %p32
    %p39 = scmp.eq.s32.totalorder %s9, 1
    %p40 = por %p38, %p39
    %p41 = scmp.ne.s32.totalorder %s33, %s36
    %p42 = scmp.eq.s32.totalorder %s9, 0
    %p43 = por %p41, %p42
    %p44 = scmp.ne.s32.totalorder %s33, %s36
    %p45 = scmp.eq.s32.totalorder %s14, 1
    %p46 = por %p44, %p45
    %p47 = scmp.ne.s32.totalorder %s36, %s37
    %p48 = scmp.eq.s32.totalorder %s14, 0
    %p49 = por %p47, %p48
    %p50 = scmp.ne.s32.totalorder %s36, %s37
    %p51 = scmp.eq.s32.totalorder %s15, 1
    %p52 = por %p50, %p51
    %p54 = scmp.ne.s32.totalorder %s37, %s53
    %p55 = scmp.eq.s32.totalorder %s15, 0
    %p56 = por %p54, %p55
    %s57 = ssub.s32 %s17, %s24
    %p58 = scmp.eq.s32.totalorder %s57, 0
    %s60 = sadd.s32 %s59, 1
    %s61 = scalar_select %p58, %s59, %s60
    %p64 = pneg %p58
    %p65 = scmp.eq.s32.totalorder %s9, 1
    %p66 = por %p64, %p65
    %p67 = scmp.ne.s32.totalorder %s59, %s62
    %p68 = scmp.eq.s32.totalorder %s9, 0
    %p69 = por %p67, %p68
    %p70 = scmp.ne.s32.totalorder %s59, %s62
    %p71 = scmp.eq.s32.totalorder %s14, 1
    %p72 = por %p70, %p71
    %p73 = scmp.ne.s32.totalorder %s62, %s63
    %p74 = scmp.eq.s32.totalorder %s14, 0
    %p75 = por %p73, %p74
    %p76 = scmp.ne.s32.totalorder %s62, %s63
    %p77 = scmp.eq.s32.totalorder %s15, 1
    %p78 = por %p76, %p77
    %p80 = scmp.ne.s32.totalorder %s63, %s79
    %p81 = scmp.eq.s32.totalorder %s15, 0
    %p82 = por %p80, %p81
    %s83 = ssub.s32 %s16, %s28
    %p84 = scmp.eq.s32.totalorder %s83, 0
    %s86 = sadd.s32 %s85, 1
    %s87 = scalar_select %p84, %s85, %s86
    %p90 = pneg %p84
    %p91 = scmp.eq.s32.totalorder %s9, 1
    %p92 = por %p90, %p91
    %p93 = scmp.ne.s32.totalorder %s85, %s88
    %p94 = scmp.eq.s32.totalorder %s9, 0
    %p95 = por %p93, %p94
    %p96 = scmp.ne.s32.totalorder %s85, %s88
    %p97 = scmp.eq.s32.totalorder %s14, 1
    %p98 = por %p96, %p97
    %p99 = scmp.ne.s32.totalorder %s88, %s89
    %p100 = scmp.eq.s32.totalorder %s14, 0
    %p101 = por %p99, %p100
    %p102 = scmp.ne.s32.totalorder %s88, %s89
    %p103 = scmp.eq.s32.totalorder %s15, 1
    %p104 = por %p102, %p103
    %p106 = scmp.ne.s32.totalorder %s89, %s105
    %p107 = scmp.eq.s32.totalorder %s15, 0
    %p108 = por %p106, %p107
    %s109 = ssub.s32 %s16, %s28
    %p110 = scmp.eq.s32.totalorder %s109, 0
    %s112 = sadd.s32 %s111, 1
    %s113 = scalar_select %p110, %s111, %s112
    %p116 = pneg %p110
    %p117 = scmp.eq.s32.totalorder %s9, 1
    %p118 = por %p116, %p117
    %p119 = scmp.ne.s32.totalorder %s111, %s114
    %p120 = scmp.eq.s32.totalorder %s9, 0
    %p121 = por %p119, %p120
    %p122 = scmp.ne.s32.totalorder %s111, %s114
    %p123 = scmp.eq.s32.totalorder %s14, 1
    %p124 = por %p122, %p123
    %p125 = scmp.ne.s32.totalorder %s114, %s115
    %p126 = scmp.eq.s32.totalorder %s14, 0
    %p127 = por %p125, %p126
    %p128 = scmp.ne.s32.totalorder %s114, %s115
    %p129 = scmp.eq.s32.totalorder %s15, 1
    %p130 = por %p128, %p129
    %p132 = scmp.ne.s32.totalorder %s115, %s131
    %p133 = scmp.eq.s32.totalorder %s15, 0
    %p134 = por %p132, %p133
    %p135 = scmp.le.s32.totalorder 1, %s9
    %p136 = scmp.lt.s32.totalorder %s9, 3
    %p137 = pnand %p135, %p136
    %p138 = pneg %p137
    // Predicated region
    $region9: #{graphsage_forward.7} parent=5 // pred_check
      _
    $region10: #{graphsage_forward.7} parent=5 // pred_check_branch
      %140 = sbr.rel (%p137) target = $region12
    $region11: #{graphsage_forward.7} parent=5 // pred_region
      %s141 = ssub.s32 %s9, 1
      // Predicated region
      $region13: #{graphsage_forward.7} parent=11 // pred_check
        %p142 = pneg %p75
      $region14: #{graphsage_forward.7} parent=11 // pred_check_branch
        %144 = sbr.rel (%p142) target = $region16
      $region15: #{graphsage_forward.7} parent=11 // pred_region
        %s145 = smul.u32 32, %s19
        %p146 = scmp.lt.s32.totalorder %s145, 31
        %s147 = scalar_select %p146, %s145, 31
        %s148 = smul.addr %s147, 4
        %s149 = scalar_lea.vmem %s1, %s148
        %s150 = smul.u32 32, %s19
      $region16: #{graphsage_forward.7} parent=11 // pred_fallthru
        _
    $region12: #{graphsage_forward.7} parent=5 // pred_fallthru
      _
    %p151 = scmp.lt.s32.totalorder %s9, 2
    // Predicated region
    $region17: #{graphsage_forward.7} parent=5 // pred_check
      %p152 = pneg %p151
    $region18: #{graphsage_forward.7} parent=5 // pred_check_branch
      %154 = sbr.rel (%p152) target = $region20
    $region19: #{graphsage_forward.7} parent=5 // pred_region
      // Predicated region
      $region21: #{graphsage_forward.7} parent=19 // pred_check
        %p155 = pneg %p43
      $region22: #{graphsage_forward.7} parent=19 // pred_check_branch
        %157 = sbr.rel (%p155) target = $region24
      $region23: #{graphsage_forward.7} parent=19 // pred_region
        %s158 = smul.u32 16, %s16
        %s159 = smul.u32 2, %s17
        %p160 = scmp.lt.s32.totalorder %s158, 31
        %s161 = scalar_select %p160, %s158, 31
        %p162 = scmp.lt.s32.totalorder %s159, 1
        %s163 = scalar_select %p162, %s159, 1
        %s164 = smul.addr %s161, 2
        %s165 = sadd.s32 %s163, %s164
        %s166 = smul.addr %s165, 4
        %s167 = scalar_lea.vmem %s0, %s166
        %s168 = smul.u32 16, %s16
        %s169 = smul.u32 2, %s17
      $region24: #{graphsage_forward.7} parent=19 // pred_fallthru
        _
      // Predicated region
      $region25: #{graphsage_forward.7} parent=19 // pred_check
        %p170 = pneg %p95
      $region26: #{graphsage_forward.7} parent=19 // pred_check_branch
        %172 = sbr.rel (%p170) target = $region28
      $region27: #{graphsage_forward.7} parent=19 // pred_region
        %s173 = smul.u32 16, %s16
        %p174 = scmp.lt.s32.totalorder %s173, 31
        %s175 = scalar_select %p174, %s173, 31
        %s176 = smul.addr %s175, 4
        %s177 = scalar_lea.vmem %s2, %s176
        %s178 = smul.u32 16, %s16
      $region28: #{graphsage_forward.7} parent=19 // pred_fallthru
        _
    $region20: #{graphsage_forward.7} parent=5 // pred_fallthru
      _
    %p179 = scmp.le.s32.totalorder 1, %s9
    %p180 = scmp.lt.s32.totalorder %s9, 3
    %p181 = pnand %p179, %p180
    %p182 = pneg %p181
    // Predicated region
    $region29: #{graphsage_forward.7} parent=5 // pred_check
      _
    $region30: #{graphsage_forward.7} parent=5 // pred_check_branch
      %184 = sbr.rel (%p181) target = $region32
    $region31: #{graphsage_forward.7} parent=5 // pred_region
      %s185 = ssub.s32 %s9, 1
      %s186 = smul.u32 16, %s18
      %s187 = smul.u32 2, %s19
      %p188 = scmp.lt.s32.totalorder %s186, 31
      %s189 = scalar_select %p188, %s186, 31
      %p190 = scmp.lt.s32.totalorder %s187, 1
      %s191 = scalar_select %p190, %s187, 1
      %s192 = smul.addr %s189, 2
      %s193 = sadd.s32 %s191, %s192
      %s194 = smul.addr %s193, 4
      %s195 = scalar_lea.vmem %s0, %s194
      %p196 = pneg %p49
      %p197 = pneg %p46
      %s198 = smul.u32 32, %s19
      %p199 = scmp.lt.s32.totalorder %s198, 31
      %s200 = scalar_select %p199, %s198, 31
      %s201 = smul.addr %s200, 4
      %s202 = scalar_lea.vmem %s1, %s201
      %p203 = pneg %p75
      %p204 = pneg %p72
      %s205 = smul.u32 16, %s18
      %p206 = scmp.lt.s32.totalorder %s205, 31
      %s207 = scalar_select %p206, %s205, 31
      %s208 = smul.addr %s207, 4
      %s209 = scalar_lea.vmem %s2, %s208
      %p210 = pneg %p101
      %p211 = pneg %p98
      %p212 = pneg %p127
      %p213 = pneg %p124
      %s214 = smul.u32 16, %s18
      %p215 = scmp.lt.s32.totalorder %s214, 31
      %s216 = scalar_select %p215, %s214, 31
      %s217 = smul.addr %s216, 8
      %s218 = scalar_lea.vmem %s3, %s217
      %s219 = smul.u32 16, %s18
      %s220 = smul.u32 2, %s19
      %p221 = scmp.lt.s32.totalorder %s219, 31
      %s222 = scalar_select %p221, %s219, 31
      %p223 = scmp.lt.s32.totalorder %s220, 1
      %s224 = scalar_select %p223, %s220, 1
      %s225 = smul.addr %s222, 2
      %s226 = sadd.s32 %s224, %s225
      %s227 = smul.addr %s226, 4
      %s228 = scalar_lea.vmem %s0, %s227
      %s229 = smul.u32 16, %s18
      %s230 = smul.u32 2, %s19
      %s231 = smul.u32 32, %s19
      %p232 = scmp.lt.s32.totalorder %s231, 31
      %s233 = scalar_select %p232, %s231, 31
      %s234 = smul.addr %s233, 4
      %s235 = scalar_lea.vmem %s1, %s234
      %s236 = smul.u32 32, %s19
      %s237 = smul.u32 16, %s18
      %p238 = scmp.lt.s32.totalorder %s237, 31
      %s239 = scalar_select %p238, %s237, 31
      %s240 = smul.addr %s239, 4
      %s241 = scalar_lea.vmem %s2, %s240
      %s242 = smul.u32 16, %s18
      %s243 = smul.u32 16, %s18
      %p244 = scmp.lt.s32.totalorder %s243, 31
      %s245 = scalar_select %p244, %s243, 31
      %s246 = smul.addr %s245, 8
      %s247 = scalar_lea.vmem %s3, %s246
      %s248 = smul.u32 16, %s18
      %p249 = scmp.eq.s32.totalorder %s19, 0
      // Predicated region
      $region33: #{graphsage_forward.7} parent=31 // pred_check
        %p250 = pneg %p249
      $region34: #{graphsage_forward.7} parent=31 // pred_check_branch
        %252 = sbr.rel (%p250) target = $region36
      $region35: #{graphsage_forward.7} parent=31 // pred_region
        %253 = vst [vmem:[%s247] sm:$0xff] 0.0
        %254 = vst [vmem:[%s247 + $0x8] sm:$0xff] 0.0
        %255 = vst [vmem:[%s247 + $0x10] sm:$0xff] 0.0
        %256 = vst [vmem:[%s247 + $0x18] sm:$0xff] 0.0
        %257 = vst [vmem:[%s247 + $0x20] sm:$0xff] 0.0
        %258 = vst [vmem:[%s247 + $0x28] sm:$0xff] 0.0
        %259 = vst [vmem:[%s247 + $0x30] sm:$0xff] 0.0
        %260 = vst [vmem:[%s247 + $0x38] sm:$0xff] 0.0
        %261 = vst [vmem:[%s247 + $0x40] sm:$0xff] 0.0
        %262 = vst [vmem:[%s247 + $0x48] sm:$0xff] 0.0
        %263 = vst [vmem:[%s247 + $0x50] sm:$0xff] 0.0
        %264 = vst [vmem:[%s247 + $0x58] sm:$0xff] 0.0
        %265 = vst [vmem:[%s247 + $0x60] sm:$0xff] 0.0
        %266 = vst [vmem:[%s247 + $0x68] sm:$0xff] 0.0
        %267 = vst [vmem:[%s247 + $0x70] sm:$0xff] 0.0
        %268 = vst [vmem:[%s247 + $0x78] sm:$0xff] 0.0
      $region36: #{graphsage_forward.7} parent=31 // pred_fallthru
        _
      %v269 = vld [vmem:[%s247] sm:$0xff]
      %v270 = vld [vmem:[%s247 + $0x8] sm:$0xff]
      %v271 = vld [vmem:[%s247 + $0x10] sm:$0xff]
      %v272 = vld [vmem:[%s247 + $0x18] sm:$0xff]
      %v273 = vld [vmem:[%s247 + $0x20] sm:$0xff]
      %v274 = vld [vmem:[%s247 + $0x28] sm:$0xff]
      %v275 = vld [vmem:[%s247 + $0x30] sm:$0xff]
      %v276 = vld [vmem:[%s247 + $0x38] sm:$0xff]
      %v277 = vld [vmem:[%s247 + $0x40] sm:$0xff]
      %v278 = vld [vmem:[%s247 + $0x48] sm:$0xff]
      %v279 = vld [vmem:[%s247 + $0x50] sm:$0xff]
      %v280 = vld [vmem:[%s247 + $0x58] sm:$0xff]
      %v281 = vld [vmem:[%s247 + $0x60] sm:$0xff]
      %v282 = vld [vmem:[%s247 + $0x68] sm:$0xff]
      %v283 = vld [vmem:[%s247 + $0x70] sm:$0xff]
      %v284 = vld [vmem:[%s247 + $0x78] sm:$0xff]
      %v285 = vld [vmem:[%s228] sm:$0xff]
      %v286 = vld [vmem:[%s228 + $0x8] sm:$0xff]
      %v287 = vld [vmem:[%s228 + $0x10] sm:$0xff]
      %v288 = vld [vmem:[%s228 + $0x18] sm:$0xff]
      %v289 = vld [vmem:[%s228 + $0x20] sm:$0xff]
      %v290 = vld [vmem:[%s228 + $0x28] sm:$0xff]
      %v291 = vld [vmem:[%s228 + $0x30] sm:$0xff]
      %v292 = vld [vmem:[%s228 + $0x38] sm:$0xff]
      %v293 = vld [vmem:[%s228 + $0x40] sm:$0xff]
      %v294 = vld [vmem:[%s228 + $0x48] sm:$0xff]
      %v295 = vld [vmem:[%s228 + $0x50] sm:$0xff]
      %v296 = vld [vmem:[%s228 + $0x58] sm:$0xff]
      %v297 = vld [vmem:[%s228 + $0x60] sm:$0xff]
      %v298 = vld [vmem:[%s228 + $0x68] sm:$0xff]
      %v299 = vld [vmem:[%s228 + $0x70] sm:$0xff]
      %v300 = vld [vmem:[%s228 + $0x78] sm:$0xff]
      %v301 = vld [vmem:[%s235] sm:$0xf]
      %v302 = vld [vmem:[%s235 + $0x4] sm:$0xf]
      %v303 = vld [vmem:[%s235 + $0x8] sm:$0xf]
      %v304 = vld [vmem:[%s235 + $0xc] sm:$0xf]
      %v305 = vld [vmem:[%s235 + $0x10] sm:$0xf]
      %v306 = vld [vmem:[%s235 + $0x14] sm:$0xf]
      %v307 = vld [vmem:[%s235 + $0x18] sm:$0xf]
      %v308 = vld [vmem:[%s235 + $0x1c] sm:$0xf]
      %v309 = vld [vmem:[%s235 + $0x20] sm:$0xf]
      %v310 = vld [vmem:[%s235 + $0x24] sm:$0xf]
      %v311 = vld [vmem:[%s235 + $0x28] sm:$0xf]
      %v312 = vld [vmem:[%s235 + $0x2c] sm:$0xf]
      %v313 = vld [vmem:[%s235 + $0x30] sm:$0xf]
      %v314 = vld [vmem:[%s235 + $0x34] sm:$0xf]
      %v315 = vld [vmem:[%s235 + $0x38] sm:$0xf]
      %v316 = vld [vmem:[%s235 + $0x3c] sm:$0xf]
      %v317 = vld [vmem:[%s235 + $0x40] sm:$0xf]
      %v318 = vld [vmem:[%s235 + $0x44] sm:$0xf]
      %v319 = vld [vmem:[%s235 + $0x48] sm:$0xf]
      %v320 = vld [vmem:[%s235 + $0x4c] sm:$0xf]
      %v321 = vld [vmem:[%s235 + $0x50] sm:$0xf]
      %v322 = vld [vmem:[%s235 + $0x54] sm:$0xf]
      %v323 = vld [vmem:[%s235 + $0x58] sm:$0xf]
      %v324 = vld [vmem:[%s235 + $0x5c] sm:$0xf]
      %v325 = vld [vmem:[%s235 + $0x60] sm:$0xf]
      %v326 = vld [vmem:[%s235 + $0x64] sm:$0xf]
      %v327 = vld [vmem:[%s235 + $0x68] sm:$0xf]
      %v328 = vld [vmem:[%s235 + $0x6c] sm:$0xf]
      %v329 = vld [vmem:[%s235 + $0x70] sm:$0xf]
      %v330 = vld [vmem:[%s235 + $0x74] sm:$0xf]
      %v331 = vld [vmem:[%s235 + $0x78] sm:$0xf]
      %v332 = vld [vmem:[%s235 + $0x7c] sm:$0xf]
      %v349 = vunpack.c.l.b16 %v285
      %v350 = vunpack.c.h.b16 %v285
      %v351 = vunpack.c.l.b16 %v286
      %v352 = vunpack.c.h.b16 %v286
      %v353 = vunpack.c.l.b16 %v287
      %v354 = vunpack.c.h.b16 %v287
      %v355 = vunpack.c.l.b16 %v288
      %v356 = vunpack.c.h.b16 %v288
      %v357 = vunpack.c.l.b16 %v289
      %v358 = vunpack.c.h.b16 %v289
      %v359 = vunpack.c.l.b16 %v290
      %v360 = vunpack.c.h.b16 %v290
      %v361 = vunpack.c.l.b16 %v291
      %v362 = vunpack.c.h.b16 %v291
      %v363 = vunpack.c.l.b16 %v292
      %v364 = vunpack.c.h.b16 %v292
      %v365 = vunpack.c.l.b16 %v293
      %v366 = vunpack.c.h.b16 %v293
      %v367 = vunpack.c.l.b16 %v294
      %v368 = vunpack.c.h.b16 %v294
      %v369 = vunpack.c.l.b16 %v295
      %v370 = vunpack.c.h.b16 %v295
      %v371 = vunpack.c.l.b16 %v296
      %v372 = vunpack.c.h.b16 %v296
      %v373 = vunpack.c.l.b16 %v297
      %v374 = vunpack.c.h.b16 %v297
      %v375 = vunpack.c.l.b16 %v298
      %v376 = vunpack.c.h.b16 %v298
      %v377 = vunpack.c.l.b16 %v299
      %v378 = vunpack.c.h.b16 %v299
      %v379 = vunpack.c.l.b16 %v300
      %v380 = vunpack.c.h.b16 %v300
      %v381 = vpack.c.b16 %v351, %v349
      %v382 = vpack.c.b16 %v352, %v350
      %v383 = vpack.c.b16 %v355, %v353
      %v384 = vpack.c.b16 %v356, %v354
      %v385 = vpack.c.b16 %v359, %v357
      %v386 = vpack.c.b16 %v360, %v358
      %v387 = vpack.c.b16 %v363, %v361
      %v388 = vpack.c.b16 %v364, %v362
      %v389 = vpack.c.b16 %v367, %v365
      %v390 = vpack.c.b16 %v368, %v366
      %v391 = vpack.c.b16 %v371, %v369
      %v392 = vpack.c.b16 %v372, %v370
      %v393 = vpack.c.b16 %v375, %v373
      %v394 = vpack.c.b16 %v376, %v374
      %v395 = vpack.c.b16 %v379, %v377
      %v396 = vpack.c.b16 %v380, %v378
      %v445 = vunpack.c.l.b16 %v301
      %v446 = vunpack.c.l.b16 %v302
      %v447 = vunpack.c.l.b16 %v303
      %v448 = vunpack.c.l.b16 %v304
      %v449 = vunpack.c.l.b16 %v305
      %v450 = vunpack.c.l.b16 %v306
      %v451 = vunpack.c.l.b16 %v307
      %v452 = vunpack.c.l.b16 %v308
      %v453 = vunpack.c.l.b16 %v309
      %v454 = vunpack.c.l.b16 %v310
      %v455 = vunpack.c.l.b16 %v311
      %v456 = vunpack.c.l.b16 %v312
      %v457 = vunpack.c.l.b16 %v313
      %v458 = vunpack.c.l.b16 %v314
      %v459 = vunpack.c.l.b16 %v315
      %v460 = vunpack.c.l.b16 %v316
      %v461 = vunpack.c.l.b16 %v317
      %v462 = vunpack.c.l.b16 %v318
      %v463 = vunpack.c.l.b16 %v319
      %v464 = vunpack.c.l.b16 %v320
      %v465 = vunpack.c.l.b16 %v321
      %v466 = vunpack.c.l.b16 %v322
      %v467 = vunpack.c.l.b16 %v323
      %v468 = vunpack.c.l.b16 %v324
      %v469 = vunpack.c.l.b16 %v325
      %v470 = vunpack.c.l.b16 %v326
      %v471 = vunpack.c.l.b16 %v327
      %v472 = vunpack.c.l.b16 %v328
      %v473 = vunpack.c.l.b16 %v329
      %v474 = vunpack.c.l.b16 %v330
      %v475 = vunpack.c.l.b16 %v331
      %v476 = vunpack.c.l.b16 %v332
      %v477 = vpack.c.b16 %v446, %v445
      %v478 = vpack.c.b16 %v448, %v447
      %v479 = vpack.c.b16 %v450, %v449
      %v480 = vpack.c.b16 %v452, %v451
      %v481 = vpack.c.b16 %v454, %v453
      %v482 = vpack.c.b16 %v456, %v455
      %v483 = vpack.c.b16 %v458, %v457
      %v484 = vpack.c.b16 %v460, %v459
      %v485 = vpack.c.b16 %v462, %v461
      %v486 = vpack.c.b16 %v464, %v463
      %v487 = vpack.c.b16 %v466, %v465
      %v488 = vpack.c.b16 %v468, %v467
      %v489 = vpack.c.b16 %v470, %v469
      %v490 = vpack.c.b16 %v472, %v471
      %v491 = vpack.c.b16 %v474, %v473
      %v492 = vpack.c.b16 %v476, %v475
      %509 = vmatpush.bf16.msra.mxu0 %v484
      %510 = vmatpush.bf16.msra.mxu0 %v483
      %511 = vmatpush.bf16.msra.mxu0 %v482
      %512 = vmatpush.bf16.msra.mxu0 %v481
      %513 = vmatpush.bf16.msra.mxu0 %v480
      %514 = vmatpush.bf16.msra.mxu0 %v479
      %515 = vmatpush.bf16.msra.mxu0 %v478
      %516 = vmatpush.bf16.msra.mxu0 %v477
      %517 = vmatmul.bf16.gmra.mxu0 %v381
      %v518 = vpop.f32.mrf.mxu0
      %v519 = vadd.f32 0.0, %v518
      %v520 = vpop.f32.mrf.mxu0
      %v521 = vadd.f32 0.0, %v520
      %522 = vmatmul.bf16.gmra.mxu0 %v383
      %v523 = vpop.f32.mrf.mxu0
      %v524 = vadd.f32 0.0, %v523
      %v525 = vpop.f32.mrf.mxu0
      %v526 = vadd.f32 0.0, %v525
      %527 = vmatmul.bf16.gmra.mxu0 %v385
      %v528 = vpop.f32.mrf.mxu0
      %v529 = vadd.f32 0.0, %v528
      %v530 = vpop.f32.mrf.mxu0
      %v531 = vadd.f32 0.0, %v530
      %532 = vmatmul.bf16.gmra.mxu0 %v387
      %v533 = vpop.f32.mrf.mxu0
      %v534 = vadd.f32 0.0, %v533
      %v535 = vpop.f32.mrf.mxu0
      %v536 = vadd.f32 0.0, %v535
      %537 = vmatmul.bf16.gmra.mxu0 %v389
      %v538 = vpop.f32.mrf.mxu0
      %v539 = vadd.f32 0.0, %v538
      %v540 = vpop.f32.mrf.mxu0
      %v541 = vadd.f32 0.0, %v540
      %542 = vmatmul.bf16.gmra.mxu0 %v391
      %v543 = vpop.f32.mrf.mxu0
      %v544 = vadd.f32 0.0, %v543
      %v545 = vpop.f32.mrf.mxu0
      %v546 = vadd.f32 0.0, %v545
      %547 = vmatmul.bf16.gmra.mxu0 %v393
      %v548 = vpop.f32.mrf.mxu0
      %v549 = vadd.f32 0.0, %v548
      %v550 = vpop.f32.mrf.mxu0
      %v551 = vadd.f32 0.0, %v550
      %552 = vmatmul.bf16.gmra.mxu0 %v395
      %v553 = vpop.f32.mrf.mxu0
      %v554 = vadd.f32 0.0, %v553
      %v555 = vpop.f32.mrf.mxu0
      %v556 = vadd.f32 0.0, %v555
      %557 = vdwg.mxu0
      %558 = vmatpush.bf16.msra.mxu0 %v492
      %559 = vmatpush.bf16.msra.mxu0 %v491
      %560 = vmatpush.bf16.msra.mxu0 %v490
      %561 = vmatpush.bf16.msra.mxu0 %v489
      %562 = vmatpush.bf16.msra.mxu0 %v488
      %563 = vmatpush.bf16.msra.mxu0 %v487
      %564 = vmatpush.bf16.msra.mxu0 %v486
      %565 = vmatpush.bf16.msra.mxu0 %v485
      %566 = vmatmul.bf16.gmra.mxu0 %v382
      %v567 = vpop.f32.mrf.mxu0
      %v568 = vadd.f32 %v519, %v567
      %v569 = vpop.f32.mrf.mxu0
      %v570 = vadd.f32 %v521, %v569
      %571 = vmatmul.bf16.gmra.mxu0 %v384
      %v572 = vpop.f32.mrf.mxu0
      %v573 = vadd.f32 %v524, %v572
      %v574 = vpop.f32.mrf.mxu0
      %v575 = vadd.f32 %v526, %v574
      %576 = vmatmul.bf16.gmra.mxu0 %v386
      %v577 = vpop.f32.mrf.mxu0
      %v578 = vadd.f32 %v529, %v577
      %v579 = vpop.f32.mrf.mxu0
      %v580 = vadd.f32 %v531, %v579
      %581 = vmatmul.bf16.gmra.mxu0 %v388
      %v582 = vpop.f32.mrf.mxu0
      %v583 = vadd.f32 %v534, %v582
      %v584 = vpop.f32.mrf.mxu0
      %v585 = vadd.f32 %v536, %v584
      %586 = vmatmul.bf16.gmra.mxu0 %v390
      %v587 = vpop.f32.mrf.mxu0
      %v588 = vadd.f32 %v539, %v587
      %v589 = vpop.f32.mrf.mxu0
      %v590 = vadd.f32 %v541, %v589
      %591 = vmatmul.bf16.gmra.mxu0 %v392
      %v592 = vpop.f32.mrf.mxu0
      %v593 = vadd.f32 %v544, %v592
      %v594 = vpop.f32.mrf.mxu0
      %v595 = vadd.f32 %v546, %v594
      %596 = vmatmul.bf16.gmra.mxu0 %v394
      %v597 = vpop.f32.mrf.mxu0
      %v598 = vadd.f32 %v549, %v597
      %v599 = vpop.f32.mrf.mxu0
      %v600 = vadd.f32 %v551, %v599
      %601 = vmatmul.bf16.gmra.mxu0 %v396
      %v602 = vpop.f32.mrf.mxu0
      %v603 = vadd.f32 %v554, %v602
      %v604 = vpop.f32.mrf.mxu0
      %v605 = vadd.f32 %v556, %v604
      %606 = vdwg.mxu0
      %v607 = vadd.f32 %v269, %v568
      %v608 = vadd.f32 %v270, %v570
      %v609 = vadd.f32 %v271, %v573
      %v610 = vadd.f32 %v272, %v575
      %v611 = vadd.f32 %v273, %v578
      %v612 = vadd.f32 %v274, %v580
      %v613 = vadd.f32 %v275, %v583
      %v614 = vadd.f32 %v276, %v585
      %v615 = vadd.f32 %v277, %v588
      %v616 = vadd.f32 %v278, %v590
      %v617 = vadd.f32 %v279, %v593
      %v618 = vadd.f32 %v280, %v595
      %v619 = vadd.f32 %v281, %v598
      %v620 = vadd.f32 %v282, %v600
      %v621 = vadd.f32 %v283, %v603
      %v622 = vadd.f32 %v284, %v605
      %623 = vst [vmem:[%s247] sm:$0xff] %v607
      %624 = vst [vmem:[%s247 + $0x8] sm:$0xff] %v608
      %625 = vst [vmem:[%s247 + $0x10] sm:$0xff] %v609
      %626 = vst [vmem:[%s247 + $0x18] sm:$0xff] %v610
      %627 = vst [vmem:[%s247 + $0x20] sm:$0xff] %v611
      %628 = vst [vmem:[%s247 + $0x28] sm:$0xff] %v612
      %629 = vst [vmem:[%s247 + $0x30] sm:$0xff] %v613
      %630 = vst [vmem:[%s247 + $0x38] sm:$0xff] %v614
      %631 = vst [vmem:[%s247 + $0x40] sm:$0xff] %v615
      %632 = vst [vmem:[%s247 + $0x48] sm:$0xff] %v616
      %633 = vst [vmem:[%s247 + $0x50] sm:$0xff] %v617
      %634 = vst [vmem:[%s247 + $0x58] sm:$0xff] %v618
      %635 = vst [vmem:[%s247 + $0x60] sm:$0xff] %v619
      %636 = vst [vmem:[%s247 + $0x68] sm:$0xff] %v620
      %637 = vst [vmem:[%s247 + $0x70] sm:$0xff] %v621
      %638 = vst [vmem:[%s247 + $0x78] sm:$0xff] %v622
      // Predicated region
      $region37: #{graphsage_forward.7} parent=31 // pred_check
        %p639 = pneg %p249
      $region38: #{graphsage_forward.7} parent=31 // pred_check_branch
        %641 = sbr.rel (%p639) target = $region40
      $region39: #{graphsage_forward.7} parent=31 // pred_region
        %v642 = vld [vmem:[%s247] sm:$0xff]
        %v643 = vld [vmem:[%s247 + $0x8] sm:$0xff]
        %v644 = vld [vmem:[%s247 + $0x10] sm:$0xff]
        %v645 = vld [vmem:[%s247 + $0x18] sm:$0xff]
        %v646 = vld [vmem:[%s247 + $0x20] sm:$0xff]
        %v647 = vld [vmem:[%s247 + $0x28] sm:$0xff]
        %v648 = vld [vmem:[%s247 + $0x30] sm:$0xff]
        %v649 = vld [vmem:[%s247 + $0x38] sm:$0xff]
        %v650 = vld [vmem:[%s247 + $0x40] sm:$0xff]
        %v651 = vld [vmem:[%s247 + $0x48] sm:$0xff]
        %v652 = vld [vmem:[%s247 + $0x50] sm:$0xff]
        %v653 = vld [vmem:[%s247 + $0x58] sm:$0xff]
        %v654 = vld [vmem:[%s247 + $0x60] sm:$0xff]
        %v655 = vld [vmem:[%s247 + $0x68] sm:$0xff]
        %v656 = vld [vmem:[%s247 + $0x70] sm:$0xff]
        %v657 = vld [vmem:[%s247 + $0x78] sm:$0xff]
        %vm658 = vcmp.gt.f32.partialorder %v642, 0.0
        %vm659 = vcmp.gt.f32.partialorder %v643, 0.0
        %vm660 = vcmp.gt.f32.partialorder %v644, 0.0
        %vm661 = vcmp.gt.f32.partialorder %v645, 0.0
        %vm662 = vcmp.gt.f32.partialorder %v646, 0.0
        %vm663 = vcmp.gt.f32.partialorder %v647, 0.0
        %vm664 = vcmp.gt.f32.partialorder %v648, 0.0
        %vm665 = vcmp.gt.f32.partialorder %v649, 0.0
        %vm666 = vcmp.gt.f32.partialorder %v650, 0.0
        %vm667 = vcmp.gt.f32.partialorder %v651, 0.0
        %vm668 = vcmp.gt.f32.partialorder %v652, 0.0
        %vm669 = vcmp.gt.f32.partialorder %v653, 0.0
        %vm670 = vcmp.gt.f32.partialorder %v654, 0.0
        %vm671 = vcmp.gt.f32.partialorder %v655, 0.0
        %vm672 = vcmp.gt.f32.partialorder %v656, 0.0
        %vm673 = vcmp.gt.f32.partialorder %v657, 0.0
        %v674 = vmax.f32 %v642, 1.0
        %v675 = vmax.f32 %v643, 1.0
        %v676 = vmax.f32 %v644, 1.0
        %v677 = vmax.f32 %v645, 1.0
        %v678 = vmax.f32 %v646, 1.0
        %v679 = vmax.f32 %v647, 1.0
        %v680 = vmax.f32 %v648, 1.0
        %v681 = vmax.f32 %v649, 1.0
        %v682 = vmax.f32 %v650, 1.0
        %v683 = vmax.f32 %v651, 1.0
        %v684 = vmax.f32 %v652, 1.0
        %v685 = vmax.f32 %v653, 1.0
        %v686 = vmax.f32 %v654, 1.0
        %v687 = vmax.f32 %v655, 1.0
        %v688 = vmax.f32 %v656, 1.0
        %v689 = vmax.f32 %v657, 1.0
        %v690 = vrcp.pop %v674
        %v691 = vmul.f32 %v674, %v690
        %v692 = vsub.f32 1.0, %v691
        %v693 = vmul.f32 %v690, %v692
        %v694 = vadd.f32 %v690, %v693
        %vm695 = vweird.f32 %v674
        %vm696 = vweird.f32 %v690
        %vm697 = vmor %vm695, %vm696
        %v698 = vsel %vm697, %v690, %v694
        %v699 = vand.u32 2147483647, %v674
        %vm700 = vcmp.eq.f32.partialorder %v699, 8.507059e+37
        %v701 = vand.u32 %v674, 2147483648
        %v702 = vor.u32 1.1754944e-38, %v701
        %v703 = vsel %vm700, %v702, %v698
        %v704 = vmul.f32 1.0, %v703
        %v705 = vrcp.pop %v675
        %v706 = vmul.f32 %v675, %v705
        %v707 = vsub.f32 1.0, %v706
        %v708 = vmul.f32 %v705, %v707
        %v709 = vadd.f32 %v705, %v708
        %vm710 = vweird.f32 %v675
        %vm711 = vweird.f32 %v705
        %vm712 = vmor %vm710, %vm711
        %v713 = vsel %vm712, %v705, %v709
        %v714 = vand.u32 2147483647, %v675
        %vm715 = vcmp.eq.f32.partialorder %v714, 8.507059e+37
        %v716 = vand.u32 %v675, 2147483648
        %v717 = vor.u32 1.1754944e-38, %v716
        %v718 = vsel %vm715, %v717, %v713
        %v719 = vmul.f32 1.0, %v718
        %v720 = vrcp.pop %v676
        %v721 = vmul.f32 %v676, %v720
        %v722 = vsub.f32 1.0, %v721
        %v723 = vmul.f32 %v720, %v722
        %v724 = vadd.f32 %v720, %v723
        %vm725 = vweird.f32 %v676
        %vm726 = vweird.f32 %v720
        %vm727 = vmor %vm725, %vm726
        %v728 = vsel %vm727, %v720, %v724
        %v729 = vand.u32 2147483647, %v676
        %vm730 = vcmp.eq.f32.partialorder %v729, 8.507059e+37
        %v731 = vand.u32 %v676, 2147483648
        %v732 = vor.u32 1.1754944e-38, %v731
        %v733 = vsel %vm730, %v732, %v728
        %v734 = vmul.f32 1.0, %v733
        %v735 = vrcp.pop %v677
        %v736 = vmul.f32 %v677, %v735
        %v737 = vsub.f32 1.0, %v736
        %v738 = vmul.f32 %v735, %v737
        %v739 = vadd.f32 %v735, %v738
        %vm740 = vweird.f32 %v677
        %vm741 = vweird.f32 %v735
        %vm742 = vmor %vm740, %vm741
        %v743 = vsel %vm742, %v735, %v739
        %v744 = vand.u32 2147483647, %v677
        %vm745 = vcmp.eq.f32.partialorder %v744, 8.507059e+37
        %v746 = vand.u32 %v677, 2147483648
        %v747 = vor.u32 1.1754944e-38, %v746
        %v748 = vsel %vm745, %v747, %v743
        %v749 = vmul.f32 1.0, %v748
        %v750 = vrcp.pop %v678
        %v751 = vmul.f32 %v678, %v750
        %v752 = vsub.f32 1.0, %v751
        %v753 = vmul.f32 %v750, %v752
        %v754 = vadd.f32 %v750, %v753
        %vm755 = vweird.f32 %v678
        %vm756 = vweird.f32 %v750
        %vm757 = vmor %vm755, %vm756
        %v758 = vsel %vm757, %v750, %v754
        %v759 = vand.u32 2147483647, %v678
        %vm760 = vcmp.eq.f32.partialorder %v759, 8.507059e+37
        %v761 = vand.u32 %v678, 2147483648
        %v762 = vor.u32 1.1754944e-38, %v761
        %v763 = vsel %vm760, %v762, %v758
        %v764 = vmul.f32 1.0, %v763
        %v765 = vrcp.pop %v679
        %v766 = vmul.f32 %v679, %v765
        %v767 = vsub.f32 1.0, %v766
        %v768 = vmul.f32 %v765, %v767
        %v769 = vadd.f32 %v765, %v768
        %vm770 = vweird.f32 %v679
        %vm771 = vweird.f32 %v765
        %vm772 = vmor %vm770, %vm771
        %v773 = vsel %vm772, %v765, %v769
        %v774 = vand.u32 2147483647, %v679
        %vm775 = vcmp.eq.f32.partialorder %v774, 8.507059e+37
        %v776 = vand.u32 %v679, 2147483648
        %v777 = vor.u32 1.1754944e-38, %v776
        %v778 = vsel %vm775, %v777, %v773
        %v779 = vmul.f32 1.0, %v778
        %v780 = vrcp.pop %v680
        %v781 = vmul.f32 %v680, %v780
        %v782 = vsub.f32 1.0, %v781
        %v783 = vmul.f32 %v780, %v782
        %v784 = vadd.f32 %v780, %v783
        %vm785 = vweird.f32 %v680
        %vm786 = vweird.f32 %v780
        %vm787 = vmor %vm785, %vm786
        %v788 = vsel %vm787, %v780, %v784
        %v789 = vand.u32 2147483647, %v680
        %vm790 = vcmp.eq.f32.partialorder %v789, 8.507059e+37
        %v791 = vand.u32 %v680, 2147483648
        %v792 = vor.u32 1.1754944e-38, %v791
        %v793 = vsel %vm790, %v792, %v788
        %v794 = vmul.f32 1.0, %v793
        %v795 = vrcp.pop %v681
        %v796 = vmul.f32 %v681, %v795
        %v797 = vsub.f32 1.0, %v796
        %v798 = vmul.f32 %v795, %v797
        %v799 = vadd.f32 %v795, %v798
        %vm800 = vweird.f32 %v681
        %vm801 = vweird.f32 %v795
        %vm802 = vmor %vm800, %vm801
        %v803 = vsel %vm802, %v795, %v799
        %v804 = vand.u32 2147483647, %v681
        %vm805 = vcmp.eq.f32.partialorder %v804, 8.507059e+37
        %v806 = vand.u32 %v681, 2147483648
        %v807 = vor.u32 1.1754944e-38, %v806
        %v808 = vsel %vm805, %v807, %v803
        %v809 = vmul.f32 1.0, %v808
        %v810 = vrcp.pop %v682
        %v811 = vmul.f32 %v682, %v810
        %v812 = vsub.f32 1.0, %v811
        %v813 = vmul.f32 %v810, %v812
        %v814 = vadd.f32 %v810, %v813
        %vm815 = vweird.f32 %v682
        %vm816 = vweird.f32 %v810
        %vm817 = vmor %vm815, %vm816
        %v818 = vsel %vm817, %v810, %v814
        %v819 = vand.u32 2147483647, %v682
        %vm820 = vcmp.eq.f32.partialorder %v819, 8.507059e+37
        %v821 = vand.u32 %v682, 2147483648
        %v822 = vor.u32 1.1754944e-38, %v821
        %v823 = vsel %vm820, %v822, %v818
        %v824 = vmul.f32 1.0, %v823
        %v825 = vrcp.pop %v683
        %v826 = vmul.f32 %v683, %v825
        %v827 = vsub.f32 1.0, %v826
        %v828 = vmul.f32 %v825, %v827
        %v829 = vadd.f32 %v825, %v828
        %vm830 = vweird.f32 %v683
        %vm831 = vweird.f32 %v825
        %vm832 = vmor %vm830, %vm831
        %v833 = vsel %vm832, %v825, %v829
        %v834 = vand.u32 2147483647, %v683
        %vm835 = vcmp.eq.f32.partialorder %v834, 8.507059e+37
        %v836 = vand.u32 %v683, 2147483648
        %v837 = vor.u32 1.1754944e-38, %v836
        %v838 = vsel %vm835, %v837, %v833
        %v839 = vmul.f32 1.0, %v838
        %v840 = vrcp.pop %v684
        %v841 = vmul.f32 %v684, %v840
        %v842 = vsub.f32 1.0, %v841
        %v843 = vmul.f32 %v840, %v842
        %v844 = vadd.f32 %v840, %v843
        %vm845 = vweird.f32 %v684
        %vm846 = vweird.f32 %v840
        %vm847 = vmor %vm845, %vm846
        %v848 = vsel %vm847, %v840, %v844
        %v849 = vand.u32 2147483647, %v684
        %vm850 = vcmp.eq.f32.partialorder %v849, 8.507059e+37
        %v851 = vand.u32 %v684, 2147483648
        %v852 = vor.u32 1.1754944e-38, %v851
        %v853 = vsel %vm850, %v852, %v848
        %v854 = vmul.f32 1.0, %v853
        %v855 = vrcp.pop %v685
        %v856 = vmul.f32 %v685, %v855
        %v857 = vsub.f32 1.0, %v856
        %v858 = vmul.f32 %v855, %v857
        %v859 = vadd.f32 %v855, %v858
        %vm860 = vweird.f32 %v685
        %vm861 = vweird.f32 %v855
        %vm862 = vmor %vm860, %vm861
        %v863 = vsel %vm862, %v855, %v859
        %v864 = vand.u32 2147483647, %v685
        %vm865 = vcmp.eq.f32.partialorder %v864, 8.507059e+37
        %v866 = vand.u32 %v685, 2147483648
        %v867 = vor.u32 1.1754944e-38, %v866
        %v868 = vsel %vm865, %v867, %v863
        %v869 = vmul.f32 1.0, %v868
        %v870 = vrcp.pop %v686
        %v871 = vmul.f32 %v686, %v870
        %v872 = vsub.f32 1.0, %v871
        %v873 = vmul.f32 %v870, %v872
        %v874 = vadd.f32 %v870, %v873
        %vm875 = vweird.f32 %v686
        %vm876 = vweird.f32 %v870
        %vm877 = vmor %vm875, %vm876
        %v878 = vsel %vm877, %v870, %v874
        %v879 = vand.u32 2147483647, %v686
        %vm880 = vcmp.eq.f32.partialorder %v879, 8.507059e+37
        %v881 = vand.u32 %v686, 2147483648
        %v882 = vor.u32 1.1754944e-38, %v881
        %v883 = vsel %vm880, %v882, %v878
        %v884 = vmul.f32 1.0, %v883
        %v885 = vrcp.pop %v687
        %v886 = vmul.f32 %v687, %v885
        %v887 = vsub.f32 1.0, %v886
        %v888 = vmul.f32 %v885, %v887
        %v889 = vadd.f32 %v885, %v888
        %vm890 = vweird.f32 %v687
        %vm891 = vweird.f32 %v885
        %vm892 = vmor %vm890, %vm891
        %v893 = vsel %vm892, %v885, %v889
        %v894 = vand.u32 2147483647, %v687
        %vm895 = vcmp.eq.f32.partialorder %v894, 8.507059e+37
        %v896 = vand.u32 %v687, 2147483648
        %v897 = vor.u32 1.1754944e-38, %v896
        %v898 = vsel %vm895, %v897, %v893
        %v899 = vmul.f32 1.0, %v898
        %v900 = vrcp.pop %v688
        %v901 = vmul.f32 %v688, %v900
        %v902 = vsub.f32 1.0, %v901
        %v903 = vmul.f32 %v900, %v902
        %v904 = vadd.f32 %v900, %v903
        %vm905 = vweird.f32 %v688
        %vm906 = vweird.f32 %v900
        %vm907 = vmor %vm905, %vm906
        %v908 = vsel %vm907, %v900, %v904
        %v909 = vand.u32 2147483647, %v688
        %vm910 = vcmp.eq.f32.partialorder %v909, 8.507059e+37
        %v911 = vand.u32 %v688, 2147483648
        %v912 = vor.u32 1.1754944e-38, %v911
        %v913 = vsel %vm910, %v912, %v908
        %v914 = vmul.f32 1.0, %v913
        %v915 = vrcp.pop %v689
        %v916 = vmul.f32 %v689, %v915
        %v917 = vsub.f32 1.0, %v916
        %v918 = vmul.f32 %v915, %v917
        %v919 = vadd.f32 %v915, %v918
        %vm920 = vweird.f32 %v689
        %vm921 = vweird.f32 %v915
        %vm922 = vmor %vm920, %vm921
        %v923 = vsel %vm922, %v915, %v919
        %v924 = vand.u32 2147483647, %v689
        %vm925 = vcmp.eq.f32.partialorder %v924, 8.507059e+37
        %v926 = vand.u32 %v689, 2147483648
        %v927 = vor.u32 1.1754944e-38, %v926
        %v928 = vsel %vm925, %v927, %v923
        %v929 = vmul.f32 1.0, %v928
        %v930 = vsel %vm658, %v704, 0.0
        %v931 = vsel %vm659, %v719, 0.0
        %v932 = vsel %vm660, %v734, 0.0
        %v933 = vsel %vm661, %v749, 0.0
        %v934 = vsel %vm662, %v764, 0.0
        %v935 = vsel %vm663, %v779, 0.0
        %v936 = vsel %vm664, %v794, 0.0
        %v937 = vsel %vm665, %v809, 0.0
        %v938 = vsel %vm666, %v824, 0.0
        %v939 = vsel %vm667, %v839, 0.0
        %v940 = vsel %vm668, %v854, 0.0
        %v941 = vsel %vm669, %v869, 0.0
        %v942 = vsel %vm670, %v884, 0.0
        %v943 = vsel %vm671, %v899, 0.0
        %v944 = vsel %vm672, %v914, 0.0
        %v945 = vsel %vm673, %v929, 0.0
        %947 = vset.pattern.permute.xlu0 32
        %948 = vperm.xlu0 %947, %v930
        %v949 = vpop.permute.xlu0 %948
        %952 = vset.pattern.permute.xlu0 32
        %953 = vperm.xlu0 %952, %v931
        %v954 = vpop.permute.xlu0 %953
        %957 = vset.pattern.permute.xlu0 32
        %958 = vperm.xlu0 %957, %v932
        %v959 = vpop.permute.xlu0 %958
        %962 = vset.pattern.permute.xlu0 32
        %963 = vperm.xlu0 %962, %v933
        %v964 = vpop.permute.xlu0 %963
        %967 = vset.pattern.permute.xlu0 32
        %968 = vperm.xlu0 %967, %v934
        %v969 = vpop.permute.xlu0 %968
        %972 = vset.pattern.permute.xlu0 32
        %973 = vperm.xlu0 %972, %v935
        %v974 = vpop.permute.xlu0 %973
        %977 = vset.pattern.permute.xlu0 32
        %978 = vperm.xlu0 %977, %v936
        %v979 = vpop.permute.xlu0 %978
        %982 = vset.pattern.permute.xlu0 32
        %983 = vperm.xlu0 %982, %v937
        %v984 = vpop.permute.xlu0 %983
        %987 = vset.pattern.permute.xlu0 32
        %988 = vperm.xlu0 %987, %v938
        %v989 = vpop.permute.xlu0 %988
        %992 = vset.pattern.permute.xlu0 32
        %993 = vperm.xlu0 %992, %v939
        %v994 = vpop.permute.xlu0 %993
        %997 = vset.pattern.permute.xlu0 32
        %998 = vperm.xlu0 %997, %v940
        %v999 = vpop.permute.xlu0 %998
        %1002 = vset.pattern.permute.xlu0 32
        %1003 = vperm.xlu0 %1002, %v941
        %v1004 = vpop.permute.xlu0 %1003
        %1007 = vset.pattern.permute.xlu0 32
        %1008 = vperm.xlu0 %1007, %v942
        %v1009 = vpop.permute.xlu0 %1008
        %1012 = vset.pattern.permute.xlu0 32
        %1013 = vperm.xlu0 %1012, %v943
        %v1014 = vpop.permute.xlu0 %1013
        %1017 = vset.pattern.permute.xlu0 32
        %1018 = vperm.xlu0 %1017, %v944
        %v1019 = vpop.permute.xlu0 %1018
        %1022 = vset.pattern.permute.xlu0 32
        %1023 = vperm.xlu0 %1022, %v945
        %v1024 = vpop.permute.xlu0 %1023
        %v1026 = vmul.f32 %v642, %v949
        %v1027 = vmul.f32 %v643, %v954
        %v1028 = vmul.f32 %v644, %v959
        %v1029 = vmul.f32 %v645, %v964
        %v1030 = vmul.f32 %v646, %v969
        %v1031 = vmul.f32 %v647, %v974
        %v1032 = vmul.f32 %v648, %v979
        %v1033 = vmul.f32 %v649, %v984
        %v1034 = vmul.f32 %v650, %v989
        %v1035 = vmul.f32 %v651, %v994
        %v1036 = vmul.f32 %v652, %v999
        %v1037 = vmul.f32 %v653, %v1004
        %v1038 = vmul.f32 %v654, %v1009
        %v1039 = vmul.f32 %v655, %v1014
        %v1040 = vmul.f32 %v656, %v1019
        %v1041 = vmul.f32 %v657, %v1024
        %v1042 = vld [vmem:[%s241] sm:$0xf]
        %v1043 = vld [vmem:[%s241 + $0x4] sm:$0xf]
        %v1044 = vld [vmem:[%s241 + $0x8] sm:$0xf]
        %v1045 = vld [vmem:[%s241 + $0xc] sm:$0xf]
        %v1046 = vld [vmem:[%s241 + $0x10] sm:$0xf]
        %v1047 = vld [vmem:[%s241 + $0x14] sm:$0xf]
        %v1048 = vld [vmem:[%s241 + $0x18] sm:$0xf]
        %v1049 = vld [vmem:[%s241 + $0x1c] sm:$0xf]
        %v1050 = vld [vmem:[%s241 + $0x20] sm:$0xf]
        %v1051 = vld [vmem:[%s241 + $0x24] sm:$0xf]
        %v1052 = vld [vmem:[%s241 + $0x28] sm:$0xf]
        %v1053 = vld [vmem:[%s241 + $0x2c] sm:$0xf]
        %v1054 = vld [vmem:[%s241 + $0x30] sm:$0xf]
        %v1055 = vld [vmem:[%s241 + $0x34] sm:$0xf]
        %v1056 = vld [vmem:[%s241 + $0x38] sm:$0xf]
        %v1057 = vld [vmem:[%s241 + $0x3c] sm:$0xf]
        %v1058 = vunpack.c.l.bf16 %v1042
        %v1059 = vunpack.c.l.bf16 %v1043
        %v1060 = vunpack.c.l.bf16 %v1044
        %v1061 = vunpack.c.l.bf16 %v1045
        %v1062 = vunpack.c.l.bf16 %v1046
        %v1063 = vunpack.c.l.bf16 %v1047
        %v1064 = vunpack.c.l.bf16 %v1048
        %v1065 = vunpack.c.l.bf16 %v1049
        %v1066 = vunpack.c.l.bf16 %v1050
        %v1067 = vunpack.c.l.bf16 %v1051
        %v1068 = vunpack.c.l.bf16 %v1052
        %v1069 = vunpack.c.l.bf16 %v1053
        %v1070 = vunpack.c.l.bf16 %v1054
        %v1071 = vunpack.c.l.bf16 %v1055
        %v1072 = vunpack.c.l.bf16 %v1056
        %v1073 = vunpack.c.l.bf16 %v1057
        %v1074 = vadd.f32 %v1026, %v1058
        %v1075 = vadd.f32 %v1027, %v1059
        %v1076 = vadd.f32 %v1028, %v1060
        %v1077 = vadd.f32 %v1029, %v1061
        %v1078 = vadd.f32 %v1030, %v1062
        %v1079 = vadd.f32 %v1031, %v1063
        %v1080 = vadd.f32 %v1032, %v1064
        %v1081 = vadd.f32 %v1033, %v1065
        %v1082 = vadd.f32 %v1034, %v1066
        %v1083 = vadd.f32 %v1035, %v1067
        %v1084 = vadd.f32 %v1036, %v1068
        %v1085 = vadd.f32 %v1037, %v1069
        %v1086 = vadd.f32 %v1038, %v1070
        %v1087 = vadd.f32 %v1039, %v1071
        %v1088 = vadd.f32 %v1040, %v1072
        %v1089 = vadd.f32 %v1041, %v1073
        %1090 = vst [vmem:[%s247] sm:$0xff] %v1074
        %1091 = vst [vmem:[%s247 + $0x8] sm:$0xff] %v1075
        %1092 = vst [vmem:[%s247 + $0x10] sm:$0xff] %v1076
        %1093 = vst [vmem:[%s247 + $0x18] sm:$0xff] %v1077
        %1094 = vst [vmem:[%s247 + $0x20] sm:$0xff] %v1078
        %1095 = vst [vmem:[%s247 + $0x28] sm:$0xff] %v1079
        %1096 = vst [vmem:[%s247 + $0x30] sm:$0xff] %v1080
        %1097 = vst [vmem:[%s247 + $0x38] sm:$0xff] %v1081
        %1098 = vst [vmem:[%s247 + $0x40] sm:$0xff] %v1082
        %1099 = vst [vmem:[%s247 + $0x48] sm:$0xff] %v1083
        %1100 = vst [vmem:[%s247 + $0x50] sm:$0xff] %v1084
        %1101 = vst [vmem:[%s247 + $0x58] sm:$0xff] %v1085
        %1102 = vst [vmem:[%s247 + $0x60] sm:$0xff] %v1086
        %1103 = vst [vmem:[%s247 + $0x68] sm:$0xff] %v1087
        %1104 = vst [vmem:[%s247 + $0x70] sm:$0xff] %v1088
        %1105 = vst [vmem:[%s247 + $0x78] sm:$0xff] %v1089
      $region40: #{graphsage_forward.7} parent=31 // pred_fallthru
        _
      %s1106 = smul.u32 16, %s18
      %p1107 = scmp.lt.s32.totalorder %s1106, 31
      %s1108 = scalar_select %p1107, %s1106, 31
      %s1109 = smul.addr %s1108, 8
      %s1110 = scalar_lea.vmem %s3, %s1109
      // Predicated region
      $region41: #{graphsage_forward.7} parent=31 // pred_check
        %p1111 = pneg %p124
      $region42: #{graphsage_forward.7} parent=31 // pred_check_branch
        %1113 = sbr.rel (%p1111) target = $region44
      $region43: #{graphsage_forward.7} parent=31 // pred_region
        %s1114 = smul.u32 16, %s18
      $region44: #{graphsage_forward.7} parent=31 // pred_fallthru
        _
    $region32: #{graphsage_forward.7} parent=5 // pred_fallthru
      _
    %p1115 = scmp.le.s32.totalorder 2, %s9
    // Predicated region
    $region45: #{graphsage_forward.7} parent=5 // pred_check
      %p1116 = pneg %p1115
    $region46: #{graphsage_forward.7} parent=5 // pred_check_branch
      %1118 = sbr.rel (%p1116) target = $region48
    $region47: #{graphsage_forward.7} parent=5 // pred_region
      %s1119 = ssub.s32 %s9, 2
      // Predicated region
      $region49: #{graphsage_forward.7} parent=47 // pred_check
        %p1120 = pneg %p130
      $region50: #{graphsage_forward.7} parent=47 // pred_check_branch
        %1122 = sbr.rel (%p1120) target = $region52
      $region51: #{graphsage_forward.7} parent=47 // pred_region
        %s1123 = smul.u32 16, %s20
        %p1124 = scmp.lt.s32.totalorder %s1123, 31
        %s1125 = scalar_select %p1124, %s1123, 31
        %s1126 = smul.addr %s1125, 8
        %s1127 = scalar_lea.vmem %s3, %s1126
      $region52: #{graphsage_forward.7} parent=47 // pred_fallthru
        _
    $region48: #{graphsage_forward.7} parent=5 // pred_fallthru
      _
  $region6: #{graphsage_forward.7} parent=0 // loop_footer
    %s13 = sadd.s32 1, %s9
  $region7: #{graphsage_forward.7} parent=0 // loop_footer_branch
    %8 = sbr.rel target = $region3
  $region8: #{graphsage_forward.7} parent=0 // loop_exit
    _

</llo_original>
